<compile_context>
chip_gen: v7x
topology: tpu7x:2x2x1
jax: 0.10.0
libtpu: 0.0.40
codegen_flags: <defaults>
</compile_context>

<pallas_src>
import functools

import jax
import jax.numpy as jnp
from jax import lax
from jax.experimental import pallas as pl
from jax.experimental.pallas import tpu as pltpu


# ----------------------------------------------------------------------------
# helpers
# ----------------------------------------------------------------------------
def _round_up(x, m):
    return (x + m - 1) // m * m


def _pad_to(a, axis, size):
    if a.shape[axis] == size:
        return a
    pad = [(0, 0)] * a.ndim
    pad[axis] = (0, size - a.shape[axis])
    return jnp.pad(a, pad)


def _pad_gate_axis(w, Hp, axis):
    # split the 4H gate axis into 4 blocks and pad each block to Hp lanes.
    parts = jnp.split(w, 4, axis=axis)
    return jnp.concatenate([_pad_to(p, axis, Hp) for p in parts], axis=axis)


# ----------------------------------------------------------------------------
# Kernel 1: fused (field, method) LSTM encoders + mean over time.
#   grid = (2, n_chunks): axis 0 = which encoder ("parallel"), axis 1 = time
#   chunk ("arbitrary", carries h/c in scratch).
#   x_ref   : [Tc, B, Hp]  bf16 time-major chunk of this encoder's input
#   wih_ref : [Hp, 4Hp]    bf16
#   whh_ref : [Hp, 4Hp]    bf16
#   b_ref   : [1, 4Hp]     f32  (bias_ih + bias_hh)
#   out_ref : [B, Hp]      f32  mean_t h_t (accumulated across chunks)
# Gate order follows PyTorch: i, f, g, o.
# ----------------------------------------------------------------------------
def fused_encoder_kernel(x_ref, wih_ref, whh_ref, b_ref, out_ref,
                         h_sc, c_sc, xg_sc, *, t_chunk, lengths):
    e = pl.program_id(0)
    chunk = pl.program_id(1)
    n_chunks = pl.num_programs(1)
    B, Hp = h_sc.shape

    @pl.when(chunk == 0)
    def _():
        h_sc[...] = jnp.zeros_like(h_sc)
        c_sc[...] = jnp.zeros_like(c_sc)
        out_ref[...] = jnp.zeros_like(out_ref)

    # Hoisted input-to-gate matmul for the whole chunk (one large-M MXU matmul
    # + single bias broadcast), stored to VMEM scratch for per-step reads.
    x2d = x_ref[...].reshape(t_chunk * B, Hp)                       # bf16
    xg = jnp.dot(x2d, wih_ref[...],
                 preferred_element_type=jnp.float32) + b_ref[...]   # [Tc*B, 4Hp] f32
    xg_sc[...] = xg.reshape(t_chunk, B, 4 * Hp)

    whh = whh_ref[...]                                              # bf16
    length = jnp.where(e == 0, lengths[0], lengths[1])
    t_base = chunk * t_chunk

    def step(t, carry):
        h, c, s = carry
        gates = xg_sc[t] + jnp.dot(h.astype(jnp.bfloat16), whh,
                                   preferred_element_type=jnp.float32)
        i_g = jax.nn.sigmoid(gates[:, 0 * Hp:1 * Hp])
        f_g = jax.nn.sigmoid(gates[:, 1 * Hp:2 * Hp])
        g_g = jnp.tanh(gates[:, 2 * Hp:3 * Hp])
        o_g = jax.nn.sigmoid(gates[:, 3 * Hp:4 * Hp])
        c_new = f_g * c + i_g * g_g
        h_new = o_g * jnp.tanh(c_new)
        valid = (t_base + t) < length          # mask chunk-padding timesteps
        return h_new, c_new, s + jnp.where(valid, h_new, 0.0)

    zeros = jnp.zeros((B, Hp), jnp.float32)
    h, c, s = lax.fori_loop(0, t_chunk, step,
                            (h_sc[...], c_sc[...], zeros), unroll=True)
    h_sc[...] = h
    c_sc[...] = c
    out_ref[...] = out_ref[...] + s

    @pl.when(chunk == n_chunks - 1)
    def _():
        inv_len = jnp.where(e == 0,
                            jnp.float32(1.0 / lengths[0]),
                            jnp.float32(1.0 / lengths[1]))
        out_ref[...] = out_ref[...] * inv_len


def fused_encoder(x_stacked, wih_stacked, whh_stacked, b_stacked,
                  *, t_chunk, lengths):
    _, T_pad, B, Hp = x_stacked.shape
    n_chunks = T_pad // t_chunk
    kernel = functools.partial(fused_encoder_kernel,
                               t_chunk=t_chunk, lengths=lengths)
    return pl.pallas_call(
        kernel,
        out_shape=jax.ShapeDtypeStruct((2, B, Hp), jnp.float32),
        grid_spec=pltpu.PrefetchScalarGridSpec(
            num_scalar_prefetch=0,
            grid=(2, n_chunks),
            in_specs=[
                pl.BlockSpec((None, t_chunk, B, Hp), lambda e, t: (e, t, 0, 0)),
                pl.BlockSpec((None, Hp, 4 * Hp), lambda e, t: (e, 0, 0)),
                pl.BlockSpec((None, Hp, 4 * Hp), lambda e, t: (e, 0, 0)),
                pl.BlockSpec((None, 1, 4 * Hp), lambda e, t: (e, 0, 0)),
            ],
            out_specs=pl.BlockSpec((None, B, Hp), lambda e, t: (e, 0, 0)),
            scratch_shapes=[
                pltpu.VMEM((B, Hp), jnp.float32),              # h
                pltpu.VMEM((B, Hp), jnp.float32),              # c
                pltpu.VMEM((t_chunk, B, 4 * Hp), jnp.float32),  # hoisted x-gates
            ],
        ),
        compiler_params=pltpu.CompilerParams(
            dimension_semantics=("parallel", "arbitrary")),
    )(x_stacked, wih_stacked, whh_stacked, b_stacked)


# ----------------------------------------------------------------------------
# Kernel 2: LSTM decoder (constant input every step) + fused output projection.
#   grid = (n_chunks,) over time ("arbitrary"), (h, c) carried in scratch.
#   comb_ref : [B, 2Hp]  bf16  pooled encodings (constant over time)
#   wih_ref  : [2Hp, 4Hp] bf16
#   whh_ref  : [Hp, 4Hp]  bf16
#   b_ref    : [1, 4Hp]   f32
#   wout_ref : [Hp, Vp]   bf16
#   bout_ref : [1, Vp]    f32
#   out_ref  : [Tc, B, Vp] f32 logits (time-major, lane-dense Vp)
# ----------------------------------------------------------------------------
def decoder_kernel(comb_ref, wih_ref, whh_ref, b_ref, wout_ref, bout_ref,
                   out_ref, h_sc, c_sc, hbuf_sc, *, t_chunk):
    chunk = pl.program_id(0)
    B, Hp = h_sc.shape
    Vp = wout_ref.shape[1]

    @pl.when(chunk == 0)
    def _():
        h_sc[...] = jnp.zeros_like(h_sc)
        c_sc[...] = jnp.zeros_like(c_sc)

    # Input is identical at every timestep -> hoist input-to-gate matmul + bias.
    xg = jnp.dot(comb_ref[...], wih_ref[...],
                 preferred_element_type=jnp.float32) + b_ref[...]   # [B, 4Hp] f32

    whh = whh_ref[...]                                              # bf16

    def step(t, carry):
        h, c = carry
        gates = xg + jnp.dot(h.astype(jnp.bfloat16), whh,
                             preferred_element_type=jnp.float32)
        i_g = jax.nn.sigmoid(gates[:, 0 * Hp:1 * Hp])
        f_g = jax.nn.sigmoid(gates[:, 1 * Hp:2 * Hp])
        g_g = jnp.tanh(gates[:, 2 * Hp:3 * Hp])
        o_g = jax.nn.sigmoid(gates[:, 3 * Hp:4 * Hp])
        c_new = f_g * c + i_g * g_g
        h_new = o_g * jnp.tanh(c_new)
        hbuf_sc[t] = h_new.astype(jnp.bfloat16)
        return h_new, c_new

    h, c = lax.fori_loop(0, t_chunk, step, (h_sc[...], c_sc[...]), unroll=True)
    h_sc[...] = h
    c_sc[...] = c

    # Hoisted output projection: one big MXU matmul + one lane-dense store.
    hflat = hbuf_sc[...].reshape(t_chunk * B, Hp)                   # bf16
    logits = jnp.dot(hflat, wout_ref[...],
                     preferred_element_type=jnp.float32) + bout_ref[...]
    out_ref[...] = logits.reshape(t_chunk, B, Vp)


def decode_and_project(combined, wih, whh, b, wout, bout, T_out, *, t_chunk):
    B = combined.shape[0]
    Hp = whh.shape[0]
    Vp = wout.shape[1]
    T_pad = _round_up(T_out, t_chunk)
    n_chunks = T_pad // t_chunk
    kernel = functools.partial(decoder_kernel, t_chunk=t_chunk)
    return pl.pallas_call(
        kernel,
        out_shape=jax.ShapeDtypeStruct((T_pad, B, Vp), jnp.float32),
        grid_spec=pltpu.PrefetchScalarGridSpec(
            num_scalar_prefetch=0,
            grid=(n_chunks,),
            in_specs=[
                pl.BlockSpec((B, 2 * Hp), lambda t: (0, 0)),
                pl.BlockSpec((2 * Hp, 4 * Hp), lambda t: (0, 0)),
                pl.BlockSpec((Hp, 4 * Hp), lambda t: (0, 0)),
                pl.BlockSpec((1, 4 * Hp), lambda t: (0, 0)),
                pl.BlockSpec((Hp, Vp), lambda t: (0, 0)),
                pl.BlockSpec((1, Vp), lambda t: (0, 0)),
            ],
            out_specs=pl.BlockSpec((t_chunk, B, Vp), lambda t: (t, 0, 0)),
            scratch_shapes=[
                pltpu.VMEM((B, Hp), jnp.float32),                  # h
                pltpu.VMEM((B, Hp), jnp.float32),                  # c
                pltpu.VMEM((t_chunk, B, Hp), jnp.bfloat16),        # per-chunk h's
            ],
        ),
        compiler_params=pltpu.CompilerParams(
            dimension_semantics=("arbitrary",)),
    )(combined, wih, whh, b, wout, bout)


# ----------------------------------------------------------------------------
# Parameters: PyTorch-layout init + one-time packing into padded kernel layout.
# ----------------------------------------------------------------------------
def init_params(key, vocab_size, hidden_dim):
    H = hidden_dim
    keys = jax.random.split(key, 32)
    k = iter(keys)

    def rnd(shape, scale=0.1):
        return (scale * jax.random.normal(next(k), shape)).astype(jnp.float32)

    def lstm(in_dim):
        # PyTorch layout: weight_ih [4H, in], weight_hh [4H, H], biases [4H].
        return dict(weight_ih=rnd((4 * H, in_dim)),
                    weight_hh=rnd((4 * H, H)),
                    bias_ih=rnd((4 * H,)),
                    bias_hh=rnd((4 * H,)))

    return dict(
        embedding=rnd((vocab_size, H)),
        field_encoder=lstm(H),
        method_encoder=lstm(H),
        class_decoder=lstm(2 * H),   # forward requires input_size = 2H (see note)
        out_w=rnd((vocab_size, H)),  # PyTorch Linear weight [out, in]
        out_b=rnd((vocab_size,)),
    )


def _pack_lstm(p, Hp, in_segments):
    # Transpose to [in, 4H] / [H, 4H]; pad each gate block to Hp lanes; pad the
    # input rows per segment so they line up with Hp-padded activations.
    wih = _pad_gate_axis(p["weight_ih"].T, Hp, axis=1)     # [in, 4Hp]
    whh = _pad_gate_axis(p["weight_hh"].T, Hp, axis=1)     # [H, 4Hp]
    rows, off = [], 0
    for seg in in_segments:
        rows.append(_pad_to(wih[off:off + seg], 0, Hp))
        off += seg
    wih = jnp.concatenate(rows, axis=0)                    # [len(seg)*Hp, 4Hp]
    whh = _pad_to(whh, 0, Hp)                              # [Hp, 4Hp]
    b = _pad_gate_axis((p["bias_ih"] + p["bias_hh"])[None, :], Hp, axis=1)
    return dict(wih=wih.astype(jnp.bfloat16),
                whh=whh.astype(jnp.bfloat16),
                b=b.astype(jnp.float32))


def pack_params(params, vocab_size, hidden_dim):
    H = hidden_dim
    Hp = _round_up(H, 128)
    Vp = _round_up(vocab_size, 128)
    emb = _pad_to(params["embedding"], 1, Hp).astype(jnp.bfloat16)     # [V, Hp]
    fe = _pack_lstm(params["field_encoder"], Hp, [H])
    me = _pack_lstm(params["method_encoder"], Hp, [H])
    cd = _pack_lstm(params["class_decoder"], Hp, [H, H])
    wout = _pad_to(_pad_to(params["out_w"].T, 0, Hp), 1, Vp)           # [Hp, Vp]
    bout = _pad_to(params["out_b"][None, :], 1, Vp)                    # [1, Vp]
    return dict(
        embedding=emb,
        enc_wih=jnp.stack([fe["wih"], me["wih"]]),    # [2, Hp, 4Hp] bf16
        enc_whh=jnp.stack([fe["whh"], me["whh"]]),    # [2, Hp, 4Hp] bf16
        enc_b=jnp.stack([fe["b"], me["b"]]),          # [2, 1, 4Hp]  f32
        dec_wih=cd["wih"], dec_whh=cd["whh"], dec_b=cd["b"],
        out_w=wout.astype(jnp.bfloat16),
        out_b=bout.astype(jnp.float32),
    )


# ----------------------------------------------------------------------------
# HSAM forward
# ----------------------------------------------------------------------------
def hsam_forward(packed, field_ids, method_ids, *, vocab_size, t_chunk=16):
    B, Tf = field_ids.shape
    _, Tm = method_ids.shape

    # Embedding gather directly in time-major layout (no [B,T,H] round trip).
    field_tbh = jnp.take(packed["embedding"], field_ids.T, axis=0)    # [Tf, B, Hp] bf16
    method_tbh = jnp.take(packed["embedding"], method_ids.T, axis=0)  # [Tm, B, Hp] bf16

    T_max = max(Tf, Tm)
    tc_enc = min(t_chunk, T_max)
    T_pad = _round_up(T_max, tc_enc)
    x_stacked = jnp.stack([_pad_to(field_tbh, 0, T_pad),
                           _pad_to(method_tbh, 0, T_pad)], axis=0)    # [2, T_pad, B, Hp]

    pools = fused_encoder(x_stacked, packed["enc_wih"], packed["enc_whh"],
                          packed["enc_b"], t_chunk=tc_enc, lengths=(Tf, Tm))
    combined = jnp.concatenate([pools[0], pools[1]], axis=1)          # [B, 2Hp] f32
    combined = combined.astype(jnp.bfloat16)

    tc_dec = min(t_chunk, Tf)
    logits = decode_and_project(combined, packed["dec_wih"], packed["dec_whh"],
                                packed["dec_b"], packed["out_w"], packed["out_b"],
                                Tf, t_chunk=tc_dec)                   # [T_pad, B, Vp]
    logits = logits[:Tf, :, :vocab_size]
    return jnp.transpose(logits, (1, 0, 2))                           # [B, Tf, V]


if __name__ == "__main__":
    vocab_size = 32
    hidden_dim = 32
    B = 2
    T_field = 8
    T_method = 6

    root = jax.random.PRNGKey(0)
    k_params, k_f, k_m = jax.random.split(root, 3)

    params = init_params(k_params, vocab_size, hidden_dim)
    packed = pack_params(params, vocab_size, hidden_dim)

    field_ids = jax.random.randint(k_f, (B, T_field), 0, vocab_size, dtype=jnp.int32)
    method_ids = jax.random.randint(k_m, (B, T_method), 0, vocab_size, dtype=jnp.int32)

    fwd = jax.jit(functools.partial(hsam_forward, vocab_size=vocab_size))
    out = fwd(packed, field_ids, method_ids)
    out = jax.block_until_ready(out)

    assert out.shape == (B, T_field, vocab_size), out.shape
    assert bool(jnp.all(jnp.isfinite(out)))
    print("KERNEL_OK")
</pallas_src>

<mosaic_0001>
module attributes {stable_mosaic.version = 11 : i64} {
  func.func @fused_encoder_kernel(%arg0: i32, %arg1: i32, %arg2: memref<1x8x2x128xbf16, #tpu.memory_space<vmem>>, %arg3: memref<1x128x512xbf16, #tpu.memory_space<vmem>>, %arg4: memref<1x128x512xbf16, #tpu.memory_space<vmem>>, %arg5: memref<1x1x512xf32, #tpu.memory_space<vmem>>, %arg6: memref<1x2x128xf32, #tpu.memory_space<vmem>>, %arg7: memref<2x128xf32, #tpu.memory_space<vmem>>, %arg8: memref<2x128xf32, #tpu.memory_space<vmem>>, %arg9: memref<8x2x512xf32, #tpu.memory_space<vmem>>) attributes {dimension_semantics = [#tpu.dimension_semantics<parallel>, #tpu.dimension_semantics<arbitrary>], iteration_bounds = array<i64: 2, 1>, scalar_prefetch = 0 : i64, scratch_operands = 3 : i64, tpu.core_type = #tpu.core_type<tc>, window_params = [{transform_indices = @transform_0, window_bounds = array<i64: 1, 8, 2, 128>}, {transform_indices = @transform_1, window_bounds = array<i64: 1, 128, 512>}, {transform_indices = @transform_2, window_bounds = array<i64: 1, 128, 512>}, {transform_indices = @transform_3, window_bounds = array<i64: 1, 1, 512>}, {transform_indices = @transform_4, window_bounds = array<i64: 1, 2, 128>}]} {
    %c0_i32 = arith.constant 0 : i32
    %0 = arith.cmpi eq, %arg1, %c0_i32 : i32
    %1 = arith.extui %0 : i1 to i32
    %c0_i32_0 = arith.constant 0 : i32
    %2 = arith.cmpi ne, %1, %c0_i32_0 : i32
    scf.if %2 {
      %cst_94 = arith.constant 0.000000e+00 : f32
      %322 = vector.broadcast %cst_94 : f32 to vector<2x128xf32>
      %c0_95 = arith.constant 0 : index
      %c0_96 = arith.constant 0 : index
      %323 = vector.load %arg7[%c0_95, %c0_96] : memref<2x128xf32, #tpu.memory_space<vmem>>, vector<2x128xf32>
      tpu.vector_store %arg7[%c0_95, %c0_96], %322 {strides = array<i32>} : memref<2x128xf32, #tpu.memory_space<vmem>>, vector<2x128xf32>,
      %cst_97 = arith.constant 0.000000e+00 : f32
      %324 = vector.broadcast %cst_97 : f32 to vector<2x128xf32>
      %c0_98 = arith.constant 0 : index
      %c0_99 = arith.constant 0 : index
      %325 = vector.load %arg8[%c0_98, %c0_99] : memref<2x128xf32, #tpu.memory_space<vmem>>, vector<2x128xf32>
      tpu.vector_store %arg8[%c0_98, %c0_99], %324 {strides = array<i32>} : memref<2x128xf32, #tpu.memory_space<vmem>>, vector<2x128xf32>,
      %cst_100 = arith.constant 0.000000e+00 : f32
      %326 = vector.broadcast %cst_100 : f32 to vector<2x128xf32>
      %c0_101 = arith.constant 0 : index
      %c0_102 = arith.constant 0 : index
      %c0_103 = arith.constant 0 : index
      %327 = vector.load %arg6[%c0_101, %c0_102, %c0_103] : memref<1x2x128xf32, #tpu.memory_space<vmem>>, vector<1x2x128xf32>
      %328 = vector.shape_cast %327 : vector<1x2x128xf32> to vector<2x128xf32>
      %329 = vector.shape_cast %326 : vector<2x128xf32> to vector<1x2x128xf32>
      tpu.vector_store %arg6[%c0_101, %c0_102, %c0_103], %329 {strides = array<i32>} : memref<1x2x128xf32, #tpu.memory_space<vmem>>, vector<1x2x128xf32>,
    } else {
    }
    %c0 = arith.constant 0 : index
    %c0_1 = arith.constant 0 : index
    %c0_2 = arith.constant 0 : index
    %c0_3 = arith.constant 0 : index
    %3 = vector.load %arg2[%c0, %c0_1, %c0_2, %c0_3] : memref<1x8x2x128xbf16, #tpu.memory_space<vmem>>, vector<1x8x2x128xbf16>
    %4 = vector.shape_cast %3 : vector<1x8x2x128xbf16> to vector<8x2x128xbf16>
    %5 = vector.shape_cast %4 : vector<8x2x128xbf16> to vector<16x128xbf16>
    %c0_4 = arith.constant 0 : index
    %c0_5 = arith.constant 0 : index
    %c0_6 = arith.constant 0 : index
    %6 = vector.load %arg3[%c0_4, %c0_5, %c0_6] : memref<1x128x512xbf16, #tpu.memory_space<vmem>>, vector<1x128x512xbf16>
    %7 = vector.shape_cast %6 : vector<1x128x512xbf16> to vector<128x512xbf16>
    %cst = arith.constant dense<0.000000e+00> : vector<16x512xf32>
    %8 = tpu.matmul %5, %7, %cst {dimension_numbers = #tpu.dot_dimension_numbers<[1], [0], [0], [1], [0, 0, 1, 1], [], []>} : vector<16x128xbf16>, vector<128x512xbf16>, vector<16x512xf32> -> vector<16x512xf32>
    %c0_7 = arith.constant 0 : index
    %c0_8 = arith.constant 0 : index
    %c0_9 = arith.constant 0 : index
    %9 = vector.load %arg5[%c0_7, %c0_8, %c0_9] : memref<1x1x512xf32, #tpu.memory_space<vmem>>, vector<1x1x512xf32>
    %10 = vector.shape_cast %9 : vector<1x1x512xf32> to vector<1x512xf32>
    %11 = vector.broadcast %10 : vector<1x512xf32> to vector<16x512xf32>
    %12 = arith.addf %8, %11 : vector<16x512xf32>
    %13 = vector.shape_cast %12 : vector<16x512xf32> to vector<8x2x512xf32>
    %c0_10 = arith.constant 0 : index
    %c0_11 = arith.constant 0 : index
    %c0_12 = arith.constant 0 : index
    %14 = vector.load %arg9[%c0_10, %c0_11, %c0_12] : memref<8x2x512xf32, #tpu.memory_space<vmem>>, vector<8x2x512xf32>
    tpu.vector_store %arg9[%c0_10, %c0_11, %c0_12], %13 {strides = array<i32>} : memref<8x2x512xf32, #tpu.memory_space<vmem>>, vector<8x2x512xf32>,
    %c0_13 = arith.constant 0 : index
    %c0_14 = arith.constant 0 : index
    %c0_15 = arith.constant 0 : index
    %15 = vector.load %arg4[%c0_13, %c0_14, %c0_15] : memref<1x128x512xbf16, #tpu.memory_space<vmem>>, vector<1x128x512xbf16>
    %16 = vector.shape_cast %15 : vector<1x128x512xbf16> to vector<128x512xbf16>
    %c0_i32_16 = arith.constant 0 : i32
    %17 = arith.cmpi eq, %arg0, %c0_i32_16 : i32
    %c8_i32 = arith.constant 8 : i32
    %c6_i32 = arith.constant 6 : i32
    %18 = arith.select %17, %c8_i32, %c6_i32 : i32
    %c8_i32_17 = arith.constant 8 : i32
    %19 = arith.muli %arg1, %c8_i32_17 : i32
    %cst_18 = arith.constant 0.000000e+00 : f32
    %20 = vector.broadcast %cst_18 : f32 to vector<2x128xf32>
    %c0_19 = arith.constant 0 : index
    %c0_20 = arith.constant 0 : index
    %21 = vector.load %arg7[%c0_19, %c0_20] : memref<2x128xf32, #tpu.memory_space<vmem>>, vector<2x128xf32>
    %c0_21 = arith.constant 0 : index
    %c0_22 = arith.constant 0 : index
    %22 = vector.load %arg8[%c0_21, %c0_22] : memref<2x128xf32, #tpu.memory_space<vmem>>, vector<2x128xf32>
    %c0_i32_23 = arith.constant 0 : i32
    %23 = arith.index_cast %c0_i32_23 : i32 to index
    %c0_24 = arith.constant 0 : index
    %c0_25 = arith.constant 0 : index
    %24 = vector.load %arg9[%23, %c0_24, %c0_25] : memref<8x2x512xf32, #tpu.memory_space<vmem>>, vector<1x2x512xf32>
    %25 = vector.shape_cast %24 : vector<1x2x512xf32> to vector<2x512xf32>
    %26 = arith.truncf %21 : vector<2x128xf32> to vector<2x128xbf16>
    %cst_26 = arith.constant dense<0.000000e+00> : vector<2x512xf32>
    %27 = tpu.matmul %26, %16, %cst_26 {dimension_numbers = #tpu.dot_dimension_numbers<[1], [0], [0], [1], [0, 0, 1, 1], [], []>} : vector<2x128xbf16>, vector<128x512xbf16>, vector<2x512xf32> -> vector<2x512xf32>
    %28 = arith.addf %25, %27 : vector<2x512xf32>
    %29 = vector.extract_strided_slice %28 {offsets = [0, 0], sizes = [2, 128], strides = [1, 1]} : vector<2x512xf32> to vector<2x128xf32>
    %30 = arith.negf %29 : vector<2x128xf32>
    %31 = math.exp %30 : vector<2x128xf32>
    %cst_27 = arith.constant 1.000000e+00 : f32
    %32 = vector.broadcast %cst_27 : f32 to vector<2x128xf32>
    %33 = arith.addf %32, %31 : vector<2x128xf32>
    %34 = arith.divf %32, %33 : vector<2x128xf32>
    %35 = vector.extract_strided_slice %28 {offsets = [0, 128], sizes = [2, 128], strides = [1, 1]} : vector<2x512xf32> to vector<2x128xf32>
    %36 = arith.negf %35 : vector<2x128xf32>
    %37 = math.exp %36 : vector<2x128xf32>
    %cst_28 = arith.constant 1.000000e+00 : f32
    %38 = vector.broadcast %cst_28 : f32 to vector<2x128xf32>
    %39 = arith.addf %38, %37 : vector<2x128xf32>
    %40 = arith.divf %38, %39 : vector<2x128xf32>
    %41 = vector.extract_strided_slice %28 {offsets = [0, 256], sizes = [2, 128], strides = [1, 1]} : vector<2x512xf32> to vector<2x128xf32>
    %42 = math.tanh %41 : vector<2x128xf32>
    %43 = vector.extract_strided_slice %28 {offsets = [0, 384], sizes = [2, 128], strides = [1, 1]} : vector<2x512xf32> to vector<2x128xf32>
    %44 = arith.negf %43 : vector<2x128xf32>
    %45 = math.exp %44 : vector<2x128xf32>
    %cst_29 = arith.constant 1.000000e+00 : f32
    %46 = vector.broadcast %cst_29 : f32 to vector<2x128xf32>
    %47 = arith.addf %46, %45 : vector<2x128xf32>
    %48 = arith.divf %46, %47 : vector<2x128xf32>
    %49 = arith.mulf %40, %22 : vector<2x128xf32>
    %50 = arith.mulf %34, %42 : vector<2x128xf32>
    %51 = arith.addf %49, %50 : vector<2x128xf32>
    %52 = math.tanh %51 : vector<2x128xf32>
    %53 = arith.mulf %48, %52 : vector<2x128xf32>
    %54 = arith.addi %19, %c0_i32_23 : i32
    %55 = arith.cmpi slt, %54, %18 : i32
    %cst_30 = arith.constant 0.000000e+00 : f32
    %56 = vector.broadcast %cst_30 : f32 to vector<2x128xf32>
    %57 = arith.select %55, %53, %56 : vector<2x128xf32>
    %58 = arith.addf %20, %57 : vector<2x128xf32>
    %c1_i32 = arith.constant 1 : i32
    %59 = arith.index_cast %c1_i32 : i32 to index
    %c0_31 = arith.constant 0 : index
    %c0_32 = arith.constant 0 : index
    %60 = vector.load %arg9[%59, %c0_31, %c0_32] : memref<8x2x512xf32, #tpu.memory_space<vmem>>, vector<1x2x512xf32>
    %61 = vector.shape_cast %60 : vector<1x2x512xf32> to vector<2x512xf32>
    %62 = arith.truncf %53 : vector<2x128xf32> to vector<2x128xbf16>
    %cst_33 = arith.constant dense<0.000000e+00> : vector<2x512xf32>
    %63 = tpu.matmul %62, %16, %cst_33 {dimension_numbers = #tpu.dot_dimension_numbers<[1], [0], [0], [1], [0, 0, 1, 1], [], []>} : vector<2x128xbf16>, vector<128x512xbf16>, vector<2x512xf32> -> vector<2x512xf32>
    %64 = arith.addf %61, %63 : vector<2x512xf32>
    %65 = vector.extract_strided_slice %64 {offsets = [0, 0], sizes = [2, 128], strides = [1, 1]} : vector<2x512xf32> to vector<2x128xf32>
    %66 = arith.negf %65 : vector<2x128xf32>
    %67 = math.exp %66 : vector<2x128xf32>
    %cst_34 = arith.constant 1.000000e+00 : f32
    %68 = vector.broadcast %cst_34 : f32 to vector<2x128xf32>
    %69 = arith.addf %68, %67 : vector<2x128xf32>
    %70 = arith.divf %68, %69 : vector<2x128xf32>
    %71 = vector.extract_strided_slice %64 {offsets = [0, 128], sizes = [2, 128], strides = [1, 1]} : vector<2x512xf32> to vector<2x128xf32>
    %72 = arith.negf %71 : vector<2x128xf32>
    %73 = math.exp %72 : vector<2x128xf32>
    %cst_35 = arith.constant 1.000000e+00 : f32
    %74 = vector.broadcast %cst_35 : f32 to vector<2x128xf32>
    %75 = arith.addf %74, %73 : vector<2x128xf32>
    %76 = arith.divf %74, %75 : vector<2x128xf32>
    %77 = vector.extract_strided_slice %64 {offsets = [0, 256], sizes = [2, 128], strides = [1, 1]} : vector<2x512xf32> to vector<2x128xf32>
    %78 = math.tanh %77 : vector<2x128xf32>
    %79 = vector.extract_strided_slice %64 {offsets = [0, 384], sizes = [2, 128], strides = [1, 1]} : vector<2x512xf32> to vector<2x128xf32>
    %80 = arith.negf %79 : vector<2x128xf32>
    %81 = math.exp %80 : vector<2x128xf32>
    %cst_36 = arith.constant 1.000000e+00 : f32
    %82 = vector.broadcast %cst_36 : f32 to vector<2x128xf32>
    %83 = arith.addf %82, %81 : vector<2x128xf32>
    %84 = arith.divf %82, %83 : vector<2x128xf32>
    %85 = arith.mulf %76, %51 : vector<2x128xf32>
    %86 = arith.mulf %70, %78 : vector<2x128xf32>
    %87 = arith.addf %85, %86 : vector<2x128xf32>
    %88 = math.tanh %87 : vector<2x128xf32>
    %89 = arith.mulf %84, %88 : vector<2x128xf32>
    %90 = arith.addi %19, %c1_i32 : i32
    %91 = arith.cmpi slt, %90, %18 : i32
    %cst_37 = arith.constant 0.000000e+00 : f32
    %92 = vector.broadcast %cst_37 : f32 to vector<2x128xf32>
    %93 = arith.select %91, %89, %92 : vector<2x128xf32>
    %94 = arith.addf %58, %93 : vector<2x128xf32>
    %c2_i32 = arith.constant 2 : i32
    %95 = arith.index_cast %c2_i32 : i32 to index
    %c0_38 = arith.constant 0 : index
    %c0_39 = arith.constant 0 : index
    %96 = vector.load %arg9[%95, %c0_38, %c0_39] : memref<8x2x512xf32, #tpu.memory_space<vmem>>, vector<1x2x512xf32>
    %97 = vector.shape_cast %96 : vector<1x2x512xf32> to vector<2x512xf32>
    %98 = arith.truncf %89 : vector<2x128xf32> to vector<2x128xbf16>
    %cst_40 = arith.constant dense<0.000000e+00> : vector<2x512xf32>
    %99 = tpu.matmul %98, %16, %cst_40 {dimension_numbers = #tpu.dot_dimension_numbers<[1], [0], [0], [1], [0, 0, 1, 1], [], []>} : vector<2x128xbf16>, vector<128x512xbf16>, vector<2x512xf32> -> vector<2x512xf32>
    %100 = arith.addf %97, %99 : vector<2x512xf32>
    %101 = vector.extract_strided_slice %100 {offsets = [0, 0], sizes = [2, 128], strides = [1, 1]} : vector<2x512xf32> to vector<2x128xf32>
    %102 = arith.negf %101 : vector<2x128xf32>
    %103 = math.exp %102 : vector<2x128xf32>
    %cst_41 = arith.constant 1.000000e+00 : f32
    %104 = vector.broadcast %cst_41 : f32 to vector<2x128xf32>
    %105 = arith.addf %104, %103 : vector<2x128xf32>
    %106 = arith.divf %104, %105 : vector<2x128xf32>
    %107 = vector.extract_strided_slice %100 {offsets = [0, 128], sizes = [2, 128], strides = [1, 1]} : vector<2x512xf32> to vector<2x128xf32>
    %108 = arith.negf %107 : vector<2x128xf32>
    %109 = math.exp %108 : vector<2x128xf32>
    %cst_42 = arith.constant 1.000000e+00 : f32
    %110 = vector.broadcast %cst_42 : f32 to vector<2x128xf32>
    %111 = arith.addf %110, %109 : vector<2x128xf32>
    %112 = arith.divf %110, %111 : vector<2x128xf32>
    %113 = vector.extract_strided_slice %100 {offsets = [0, 256], sizes = [2, 128], strides = [1, 1]} : vector<2x512xf32> to vector<2x128xf32>
    %114 = math.tanh %113 : vector<2x128xf32>
    %115 = vector.extract_strided_slice %100 {offsets = [0, 384], sizes = [2, 128], strides = [1, 1]} : vector<2x512xf32> to vector<2x128xf32>
    %116 = arith.negf %115 : vector<2x128xf32>
    %117 = math.exp %116 : vector<2x128xf32>
    %cst_43 = arith.constant 1.000000e+00 : f32
    %118 = vector.broadcast %cst_43 : f32 to vector<2x128xf32>
    %119 = arith.addf %118, %117 : vector<2x128xf32>
    %120 = arith.divf %118, %119 : vector<2x128xf32>
    %121 = arith.mulf %112, %87 : vector<2x128xf32>
    %122 = arith.mulf %106, %114 : vector<2x128xf32>
    %123 = arith.addf %121, %122 : vector<2x128xf32>
    %124 = math.tanh %123 : vector<2x128xf32>
    %125 = arith.mulf %120, %124 : vector<2x128xf32>
    %126 = arith.addi %19, %c2_i32 : i32
    %127 = arith.cmpi slt, %126, %18 : i32
    %cst_44 = arith.constant 0.000000e+00 : f32
    %128 = vector.broadcast %cst_44 : f32 to vector<2x128xf32>
    %129 = arith.select %127, %125, %128 : vector<2x128xf32>
    %130 = arith.addf %94, %129 : vector<2x128xf32>
    %c3_i32 = arith.constant 3 : i32
    %131 = arith.index_cast %c3_i32 : i32 to index
    %c0_45 = arith.constant 0 : index
    %c0_46 = arith.constant 0 : index
    %132 = vector.load %arg9[%131, %c0_45, %c0_46] : memref<8x2x512xf32, #tpu.memory_space<vmem>>, vector<1x2x512xf32>
    %133 = vector.shape_cast %132 : vector<1x2x512xf32> to vector<2x512xf32>
    %134 = arith.truncf %125 : vector<2x128xf32> to vector<2x128xbf16>
    %cst_47 = arith.constant dense<0.000000e+00> : vector<2x512xf32>
    %135 = tpu.matmul %134, %16, %cst_47 {dimension_numbers = #tpu.dot_dimension_numbers<[1], [0], [0], [1], [0, 0, 1, 1], [], []>} : vector<2x128xbf16>, vector<128x512xbf16>, vector<2x512xf32> -> vector<2x512xf32>
    %136 = arith.addf %133, %135 : vector<2x512xf32>
    %137 = vector.extract_strided_slice %136 {offsets = [0, 0], sizes = [2, 128], strides = [1, 1]} : vector<2x512xf32> to vector<2x128xf32>
    %138 = arith.negf %137 : vector<2x128xf32>
    %139 = math.exp %138 : vector<2x128xf32>
    %cst_48 = arith.constant 1.000000e+00 : f32
    %140 = vector.broadcast %cst_48 : f32 to vector<2x128xf32>
    %141 = arith.addf %140, %139 : vector<2x128xf32>
    %142 = arith.divf %140, %141 : vector<2x128xf32>
    %143 = vector.extract_strided_slice %136 {offsets = [0, 128], sizes = [2, 128], strides = [1, 1]} : vector<2x512xf32> to vector<2x128xf32>
    %144 = arith.negf %143 : vector<2x128xf32>
    %145 = math.exp %144 : vector<2x128xf32>
    %cst_49 = arith.constant 1.000000e+00 : f32
    %146 = vector.broadcast %cst_49 : f32 to vector<2x128xf32>
    %147 = arith.addf %146, %145 : vector<2x128xf32>
    %148 = arith.divf %146, %147 : vector<2x128xf32>
    %149 = vector.extract_strided_slice %136 {offsets = [0, 256], sizes = [2, 128], strides = [1, 1]} : vector<2x512xf32> to vector<2x128xf32>
    %150 = math.tanh %149 : vector<2x128xf32>
    %151 = vector.extract_strided_slice %136 {offsets = [0, 384], sizes = [2, 128], strides = [1, 1]} : vector<2x512xf32> to vector<2x128xf32>
    %152 = arith.negf %151 : vector<2x128xf32>
    %153 = math.exp %152 : vector<2x128xf32>
    %cst_50 = arith.constant 1.000000e+00 : f32
    %154 = vector.broadcast %cst_50 : f32 to vector<2x128xf32>
    %155 = arith.addf %154, %153 : vector<2x128xf32>
    %156 = arith.divf %154, %155 : vector<2x128xf32>
    %157 = arith.mulf %148, %123 : vector<2x128xf32>
    %158 = arith.mulf %142, %150 : vector<2x128xf32>
    %159 = arith.addf %157, %158 : vector<2x128xf32>
    %160 = math.tanh %159 : vector<2x128xf32>
    %161 = arith.mulf %156, %160 : vector<2x128xf32>
    %162 = arith.addi %19, %c3_i32 : i32
    %163 = arith.cmpi slt, %162, %18 : i32
    %cst_51 = arith.constant 0.000000e+00 : f32
    %164 = vector.broadcast %cst_51 : f32 to vector<2x128xf32>
    %165 = arith.select %163, %161, %164 : vector<2x128xf32>
    %166 = arith.addf %130, %165 : vector<2x128xf32>
    %c4_i32 = arith.constant 4 : i32
    %167 = arith.index_cast %c4_i32 : i32 to index
    %c0_52 = arith.constant 0 : index
    %c0_53 = arith.constant 0 : index
    %168 = vector.load %arg9[%167, %c0_52, %c0_53] : memref<8x2x512xf32, #tpu.memory_space<vmem>>, vector<1x2x512xf32>
    %169 = vector.shape_cast %168 : vector<1x2x512xf32> to vector<2x512xf32>
    %170 = arith.truncf %161 : vector<2x128xf32> to vector<2x128xbf16>
    %cst_54 = arith.constant dense<0.000000e+00> : vector<2x512xf32>
    %171 = tpu.matmul %170, %16, %cst_54 {dimension_numbers = #tpu.dot_dimension_numbers<[1], [0], [0], [1], [0, 0, 1, 1], [], []>} : vector<2x128xbf16>, vector<128x512xbf16>, vector<2x512xf32> -> vector<2x512xf32>
    %172 = arith.addf %169, %171 : vector<2x512xf32>
    %173 = vector.extract_strided_slice %172 {offsets = [0, 0], sizes = [2, 128], strides = [1, 1]} : vector<2x512xf32> to vector<2x128xf32>
    %174 = arith.negf %173 : vector<2x128xf32>
    %175 = math.exp %174 : vector<2x128xf32>
    %cst_55 = arith.constant 1.000000e+00 : f32
    %176 = vector.broadcast %cst_55 : f32 to vector<2x128xf32>
    %177 = arith.addf %176, %175 : vector<2x128xf32>
    %178 = arith.divf %176, %177 : vector<2x128xf32>
    %179 = vector.extract_strided_slice %172 {offsets = [0, 128], sizes = [2, 128], strides = [1, 1]} : vector<2x512xf32> to vector<2x128xf32>
    %180 = arith.negf %179 : vector<2x128xf32>
    %181 = math.exp %180 : vector<2x128xf32>
    %cst_56 = arith.constant 1.000000e+00 : f32
    %182 = vector.broadcast %cst_56 : f32 to vector<2x128xf32>
    %183 = arith.addf %182, %181 : vector<2x128xf32>
    %184 = arith.divf %182, %183 : vector<2x128xf32>
    %185 = vector.extract_strided_slice %172 {offsets = [0, 256], sizes = [2, 128], strides = [1, 1]} : vector<2x512xf32> to vector<2x128xf32>
    %186 = math.tanh %185 : vector<2x128xf32>
    %187 = vector.extract_strided_slice %172 {offsets = [0, 384], sizes = [2, 128], strides = [1, 1]} : vector<2x512xf32> to vector<2x128xf32>
    %188 = arith.negf %187 : vector<2x128xf32>
    %189 = math.exp %188 : vector<2x128xf32>
    %cst_57 = arith.constant 1.000000e+00 : f32
    %190 = vector.broadcast %cst_57 : f32 to vector<2x128xf32>
    %191 = arith.addf %190, %189 : vector<2x128xf32>
    %192 = arith.divf %190, %191 : vector<2x128xf32>
    %193 = arith.mulf %184, %159 : vector<2x128xf32>
    %194 = arith.mulf %178, %186 : vector<2x128xf32>
    %195 = arith.addf %193, %194 : vector<2x128xf32>
    %196 = math.tanh %195 : vector<2x128xf32>
    %197 = arith.mulf %192, %196 : vector<2x128xf32>
    %198 = arith.addi %19, %c4_i32 : i32
    %199 = arith.cmpi slt, %198, %18 : i32
    %cst_58 = arith.constant 0.000000e+00 : f32
    %200 = vector.broadcast %cst_58 : f32 to vector<2x128xf32>
    %201 = arith.select %199, %197, %200 : vector<2x128xf32>
    %202 = arith.addf %166, %201 : vector<2x128xf32>
    %c5_i32 = arith.constant 5 : i32
    %203 = arith.index_cast %c5_i32 : i32 to index
    %c0_59 = arith.constant 0 : index
    %c0_60 = arith.constant 0 : index
    %204 = vector.load %arg9[%203, %c0_59, %c0_60] : memref<8x2x512xf32, #tpu.memory_space<vmem>>, vector<1x2x512xf32>
    %205 = vector.shape_cast %204 : vector<1x2x512xf32> to vector<2x512xf32>
    %206 = arith.truncf %197 : vector<2x128xf32> to vector<2x128xbf16>
    %cst_61 = arith.constant dense<0.000000e+00> : vector<2x512xf32>
    %207 = tpu.matmul %206, %16, %cst_61 {dimension_numbers = #tpu.dot_dimension_numbers<[1], [0], [0], [1], [0, 0, 1, 1], [], []>} : vector<2x128xbf16>, vector<128x512xbf16>, vector<2x512xf32> -> vector<2x512xf32>
    %208 = arith.addf %205, %207 : vector<2x512xf32>
    %209 = vector.extract_strided_slice %208 {offsets = [0, 0], sizes = [2, 128], strides = [1, 1]} : vector<2x512xf32> to vector<2x128xf32>
    %210 = arith.negf %209 : vector<2x128xf32>
    %211 = math.exp %210 : vector<2x128xf32>
    %cst_62 = arith.constant 1.000000e+00 : f32
    %212 = vector.broadcast %cst_62 : f32 to vector<2x128xf32>
    %213 = arith.addf %212, %211 : vector<2x128xf32>
    %214 = arith.divf %212, %213 : vector<2x128xf32>
    %215 = vector.extract_strided_slice %208 {offsets = [0, 128], sizes = [2, 128], strides = [1, 1]} : vector<2x512xf32> to vector<2x128xf32>
    %216 = arith.negf %215 : vector<2x128xf32>
    %217 = math.exp %216 : vector<2x128xf32>
    %cst_63 = arith.constant 1.000000e+00 : f32
    %218 = vector.broadcast %cst_63 : f32 to vector<2x128xf32>
    %219 = arith.addf %218, %217 : vector<2x128xf32>
    %220 = arith.divf %218, %219 : vector<2x128xf32>
    %221 = vector.extract_strided_slice %208 {offsets = [0, 256], sizes = [2, 128], strides = [1, 1]} : vector<2x512xf32> to vector<2x128xf32>
    %222 = math.tanh %221 : vector<2x128xf32>
    %223 = vector.extract_strided_slice %208 {offsets = [0, 384], sizes = [2, 128], strides = [1, 1]} : vector<2x512xf32> to vector<2x128xf32>
    %224 = arith.negf %223 : vector<2x128xf32>
    %225 = math.exp %224 : vector<2x128xf32>
    %cst_64 = arith.constant 1.000000e+00 : f32
    %226 = vector.broadcast %cst_64 : f32 to vector<2x128xf32>
    %227 = arith.addf %226, %225 : vector<2x128xf32>
    %228 = arith.divf %226, %227 : vector<2x128xf32>
    %229 = arith.mulf %220, %195 : vector<2x128xf32>
    %230 = arith.mulf %214, %222 : vector<2x128xf32>
    %231 = arith.addf %229, %230 : vector<2x128xf32>
    %232 = math.tanh %231 : vector<2x128xf32>
    %233 = arith.mulf %228, %232 : vector<2x128xf32>
    %234 = arith.addi %19, %c5_i32 : i32
    %235 = arith.cmpi slt, %234, %18 : i32
    %cst_65 = arith.constant 0.000000e+00 : f32
    %236 = vector.broadcast %cst_65 : f32 to vector<2x128xf32>
    %237 = arith.select %235, %233, %236 : vector<2x128xf32>
    %238 = arith.addf %202, %237 : vector<2x128xf32>
    %c6_i32_66 = arith.constant 6 : i32
    %239 = arith.index_cast %c6_i32_66 : i32 to index
    %c0_67 = arith.constant 0 : index
    %c0_68 = arith.constant 0 : index
    %240 = vector.load %arg9[%239, %c0_67, %c0_68] : memref<8x2x512xf32, #tpu.memory_space<vmem>>, vector<1x2x512xf32>
    %241 = vector.shape_cast %240 : vector<1x2x512xf32> to vector<2x512xf32>
    %242 = arith.truncf %233 : vector<2x128xf32> to vector<2x128xbf16>
    %cst_69 = arith.constant dense<0.000000e+00> : vector<2x512xf32>
    %243 = tpu.matmul %242, %16, %cst_69 {dimension_numbers = #tpu.dot_dimension_numbers<[1], [0], [0], [1], [0, 0, 1, 1], [], []>} : vector<2x128xbf16>, vector<128x512xbf16>, vector<2x512xf32> -> vector<2x512xf32>
    %244 = arith.addf %241, %243 : vector<2x512xf32>
    %245 = vector.extract_strided_slice %244 {offsets = [0, 0], sizes = [2, 128], strides = [1, 1]} : vector<2x512xf32> to vector<2x128xf32>
    %246 = arith.negf %245 : vector<2x128xf32>
    %247 = math.exp %246 : vector<2x128xf32>
    %cst_70 = arith.constant 1.000000e+00 : f32
    %248 = vector.broadcast %cst_70 : f32 to vector<2x128xf32>
    %249 = arith.addf %248, %247 : vector<2x128xf32>
    %250 = arith.divf %248, %249 : vector<2x128xf32>
    %251 = vector.extract_strided_slice %244 {offsets = [0, 128], sizes = [2, 128], strides = [1, 1]} : vector<2x512xf32> to vector<2x128xf32>
    %252 = arith.negf %251 : vector<2x128xf32>
    %253 = math.exp %252 : vector<2x128xf32>
    %cst_71 = arith.constant 1.000000e+00 : f32
    %254 = vector.broadcast %cst_71 : f32 to vector<2x128xf32>
    %255 = arith.addf %254, %253 : vector<2x128xf32>
    %256 = arith.divf %254, %255 : vector<2x128xf32>
    %257 = vector.extract_strided_slice %244 {offsets = [0, 256], sizes = [2, 128], strides = [1, 1]} : vector<2x512xf32> to vector<2x128xf32>
    %258 = math.tanh %257 : vector<2x128xf32>
    %259 = vector.extract_strided_slice %244 {offsets = [0, 384], sizes = [2, 128], strides = [1, 1]} : vector<2x512xf32> to vector<2x128xf32>
    %260 = arith.negf %259 : vector<2x128xf32>
    %261 = math.exp %260 : vector<2x128xf32>
    %cst_72 = arith.constant 1.000000e+00 : f32
    %262 = vector.broadcast %cst_72 : f32 to vector<2x128xf32>
    %263 = arith.addf %262, %261 : vector<2x128xf32>
    %264 = arith.divf %262, %263 : vector<2x128xf32>
    %265 = arith.mulf %256, %231 : vector<2x128xf32>
    %266 = arith.mulf %250, %258 : vector<2x128xf32>
    %267 = arith.addf %265, %266 : vector<2x128xf32>
    %268 = math.tanh %267 : vector<2x128xf32>
    %269 = arith.mulf %264, %268 : vector<2x128xf32>
    %270 = arith.addi %19, %c6_i32_66 : i32
    %271 = arith.cmpi slt, %270, %18 : i32
    %cst_73 = arith.constant 0.000000e+00 : f32
    %272 = vector.broadcast %cst_73 : f32 to vector<2x128xf32>
    %273 = arith.select %271, %269, %272 : vector<2x128xf32>
    %274 = arith.addf %238, %273 : vector<2x128xf32>
    %c7_i32 = arith.constant 7 : i32
    %275 = arith.index_cast %c7_i32 : i32 to index
    %c0_74 = arith.constant 0 : index
    %c0_75 = arith.constant 0 : index
    %276 = vector.load %arg9[%275, %c0_74, %c0_75] : memref<8x2x512xf32, #tpu.memory_space<vmem>>, vector<1x2x512xf32>
    %277 = vector.shape_cast %276 : vector<1x2x512xf32> to vector<2x512xf32>
    %278 = arith.truncf %269 : vector<2x128xf32> to vector<2x128xbf16>
    %cst_76 = arith.constant dense<0.000000e+00> : vector<2x512xf32>
    %279 = tpu.matmul %278, %16, %cst_76 {dimension_numbers = #tpu.dot_dimension_numbers<[1], [0], [0], [1], [0, 0, 1, 1], [], []>} : vector<2x128xbf16>, vector<128x512xbf16>, vector<2x512xf32> -> vector<2x512xf32>
    %280 = arith.addf %277, %279 : vector<2x512xf32>
    %281 = vector.extract_strided_slice %280 {offsets = [0, 0], sizes = [2, 128], strides = [1, 1]} : vector<2x512xf32> to vector<2x128xf32>
    %282 = arith.negf %281 : vector<2x128xf32>
    %283 = math.exp %282 : vector<2x128xf32>
    %cst_77 = arith.constant 1.000000e+00 : f32
    %284 = vector.broadcast %cst_77 : f32 to vector<2x128xf32>
    %285 = arith.addf %284, %283 : vector<2x128xf32>
    %286 = arith.divf %284, %285 : vector<2x128xf32>
    %287 = vector.extract_strided_slice %280 {offsets = [0, 128], sizes = [2, 128], strides = [1, 1]} : vector<2x512xf32> to vector<2x128xf32>
    %288 = arith.negf %287 : vector<2x128xf32>
    %289 = math.exp %288 : vector<2x128xf32>
    %cst_78 = arith.constant 1.000000e+00 : f32
    %290 = vector.broadcast %cst_78 : f32 to vector<2x128xf32>
    %291 = arith.addf %290, %289 : vector<2x128xf32>
    %292 = arith.divf %290, %291 : vector<2x128xf32>
    %293 = vector.extract_strided_slice %280 {offsets = [0, 256], sizes = [2, 128], strides = [1, 1]} : vector<2x512xf32> to vector<2x128xf32>
    %294 = math.tanh %293 : vector<2x128xf32>
    %295 = vector.extract_strided_slice %280 {offsets = [0, 384], sizes = [2, 128], strides = [1, 1]} : vector<2x512xf32> to vector<2x128xf32>
    %296 = arith.negf %295 : vector<2x128xf32>
    %297 = math.exp %296 : vector<2x128xf32>
    %cst_79 = arith.constant 1.000000e+00 : f32
    %298 = vector.broadcast %cst_79 : f32 to vector<2x128xf32>
    %299 = arith.addf %298, %297 : vector<2x128xf32>
    %300 = arith.divf %298, %299 : vector<2x128xf32>
    %301 = arith.mulf %292, %267 : vector<2x128xf32>
    %302 = arith.mulf %286, %294 : vector<2x128xf32>
    %303 = arith.addf %301, %302 : vector<2x128xf32>
    %304 = math.tanh %303 : vector<2x128xf32>
    %305 = arith.mulf %300, %304 : vector<2x128xf32>
    %306 = arith.addi %19, %c7_i32 : i32
    %307 = arith.cmpi slt, %306, %18 : i32
    %cst_80 = arith.constant 0.000000e+00 : f32
    %308 = vector.broadcast %cst_80 : f32 to vector<2x128xf32>
    %309 = arith.select %307, %305, %308 : vector<2x128xf32>
    %310 = arith.addf %274, %309 : vector<2x128xf32>
    %c8_i32_81 = arith.constant 8 : i32
    %c0_82 = arith.constant 0 : index
    %c0_83 = arith.constant 0 : index
    %311 = vector.load %arg7[%c0_82, %c0_83] : memref<2x128xf32, #tpu.memory_space<vmem>>, vector<2x128xf32>
    tpu.vector_store %arg7[%c0_82, %c0_83], %305 {strides = array<i32>} : memref<2x128xf32, #tpu.memory_space<vmem>>, vector<2x128xf32>,
    %c0_84 = arith.constant 0 : index
    %c0_85 = arith.constant 0 : index
    %312 = vector.load %arg8[%c0_84, %c0_85] : memref<2x128xf32, #tpu.memory_space<vmem>>, vector<2x128xf32>
    tpu.vector_store %arg8[%c0_84, %c0_85], %303 {strides = array<i32>} : memref<2x128xf32, #tpu.memory_space<vmem>>, vector<2x128xf32>,
    %c0_86 = arith.constant 0 : index
    %c0_87 = arith.constant 0 : index
    %c0_88 = arith.constant 0 : index
    %313 = vector.load %arg6[%c0_86, %c0_87, %c0_88] : memref<1x2x128xf32, #tpu.memory_space<vmem>>, vector<1x2x128xf32>
    %314 = vector.shape_cast %313 : vector<1x2x128xf32> to vector<2x128xf32>
    %315 = arith.addf %314, %310 : vector<2x128xf32>
    %c0_89 = arith.constant 0 : index
    %c0_90 = arith.constant 0 : index
    %c0_91 = arith.constant 0 : index
    %316 = vector.load %arg6[%c0_89, %c0_90, %c0_91] : memref<1x2x128xf32, #tpu.memory_space<vmem>>, vector<1x2x128xf32>
    %317 = vector.shape_cast %316 : vector<1x2x128xf32> to vector<2x128xf32>
    %318 = vector.shape_cast %315 : vector<2x128xf32> to vector<1x2x128xf32>
    tpu.vector_store %arg6[%c0_89, %c0_90, %c0_91], %318 {strides = array<i32>} : memref<1x2x128xf32, #tpu.memory_space<vmem>>, vector<1x2x128xf32>,
    %c0_i32_92 = arith.constant 0 : i32
    %319 = arith.cmpi eq, %arg1, %c0_i32_92 : i32
    %320 = arith.extui %319 : i1 to i32
    %c0_i32_93 = arith.constant 0 : i32
    %321 = arith.cmpi ne, %320, %c0_i32_93 : i32
    scf.if %321 {
      %c0_i32_94 = arith.constant 0 : i32
      %322 = arith.cmpi eq, %arg0, %c0_i32_94 : i32
      %cst_95 = arith.constant 1.250000e-01 : f32
      %cst_96 = arith.constant 0.166666672 : f32
      %323 = arith.select %322, %cst_95, %cst_96 : f32
      %c0_97 = arith.constant 0 : index
      %c0_98 = arith.constant 0 : index
      %c0_99 = arith.constant 0 : index
      %324 = vector.load %arg6[%c0_97, %c0_98, %c0_99] : memref<1x2x128xf32, #tpu.memory_space<vmem>>, vector<1x2x128xf32>
      %325 = vector.shape_cast %324 : vector<1x2x128xf32> to vector<2x128xf32>
      %326 = vector.broadcast %323 : f32 to vector<2x128xf32>
      %327 = arith.mulf %325, %326 : vector<2x128xf32>
      %c0_100 = arith.constant 0 : index
      %c0_101 = arith.constant 0 : index
      %c0_102 = arith.constant 0 : index
      %328 = vector.load %arg6[%c0_100, %c0_101, %c0_102] : memref<1x2x128xf32, #tpu.memory_space<vmem>>, vector<1x2x128xf32>
      %329 = vector.shape_cast %328 : vector<1x2x128xf32> to vector<2x128xf32>
      %330 = vector.shape_cast %327 : vector<2x128xf32> to vector<1x2x128xf32>
      tpu.vector_store %arg6[%c0_100, %c0_101, %c0_102], %330 {strides = array<i32>} : memref<1x2x128xf32, #tpu.memory_space<vmem>>, vector<1x2x128xf32>,
    } else {
    }
    return
  }
  func.func @transform_0(%arg0: i32, %arg1: i32) -> (i32, i32, i32, i32) {
    %c0_i32 = arith.constant 0 : i32
    %c0_i32_0 = arith.constant 0 : i32
    %c0_i32_1 = arith.constant 0 : i32
    return %arg0, %arg1, %c0_i32, %c0_i32_0 : i32, i32, i32, i32
  }
  func.func @transform_1(%arg0: i32, %arg1: i32) -> (i32, i32, i32) {
    %c0_i32 = arith.constant 0 : i32
    %c0_i32_0 = arith.constant 0 : i32
    %c0_i32_1 = arith.constant 0 : i32
    return %arg0, %c0_i32, %c0_i32_0 : i32, i32, i32
  }
  func.func @transform_2(%arg0: i32, %arg1: i32) -> (i32, i32, i32) {
    %c0_i32 = arith.constant 0 : i32
    %c0_i32_0 = arith.constant 0 : i32
    %c0_i32_1 = arith.constant 0 : i32
    return %arg0, %c0_i32, %c0_i32_0 : i32, i32, i32
  }
  func.func @transform_3(%arg0: i32, %arg1: i32) -> (i32, i32, i32) {
    %c0_i32 = arith.constant 0 : i32
    %c0_i32_0 = arith.constant 0 : i32
    %c0_i32_1 = arith.constant 0 : i32
    return %arg0, %c0_i32, %c0_i32_0 : i32, i32, i32
  }
  func.func @transform_4(%arg0: i32, %arg1: i32) -> (i32, i32, i32) {
    %c0_i32 = arith.constant 0 : i32
    %c0_i32_0 = arith.constant 0 : i32
    %c0_i32_1 = arith.constant 0 : i32
    return %arg0, %c0_i32, %c0_i32_0 : i32, i32, i32
  }
}

module attributes {stable_mosaic.version = 11 : i64} {
  func.func @decoder_kernel(%arg0: i32, %arg1: memref<2x256xbf16, #tpu.memory_space<vmem>>, %arg2: memref<256x512xbf16, #tpu.memory_space<vmem>>, %arg3: memref<128x512xbf16, #tpu.memory_space<vmem>>, %arg4: memref<1x512xf32, #tpu.memory_space<vmem>>, %arg5: memref<128x128xbf16, #tpu.memory_space<vmem>>, %arg6: memref<1x128xf32, #tpu.memory_space<vmem>>, %arg7: memref<8x2x128xf32, #tpu.memory_space<vmem>>, %arg8: memref<2x128xf32, #tpu.memory_space<vmem>>, %arg9: memref<2x128xf32, #tpu.memory_space<vmem>>, %arg10: memref<8x2x128xbf16, #tpu.memory_space<vmem>>) attributes {dimension_semantics = [#tpu.dimension_semantics<arbitrary>], iteration_bounds = array<i64: 1>, scalar_prefetch = 0 : i64, scratch_operands = 3 : i64, tpu.core_type = #tpu.core_type<tc>, window_params = [{pipeline_mode = #tpu.pipeline_mode<synchronous>, transform_indices = @transform_0, window_bounds = array<i64: 2, 256>}, {pipeline_mode = #tpu.pipeline_mode<synchronous>, transform_indices = @transform_1, window_bounds = array<i64: 256, 512>}, {pipeline_mode = #tpu.pipeline_mode<synchronous>, transform_indices = @transform_2, window_bounds = array<i64: 128, 512>}, {pipeline_mode = #tpu.pipeline_mode<synchronous>, transform_indices = @transform_3, window_bounds = array<i64: 1, 512>}, {pipeline_mode = #tpu.pipeline_mode<synchronous>, transform_indices = @transform_4, window_bounds = array<i64: 128, 128>}, {pipeline_mode = #tpu.pipeline_mode<synchronous>, transform_indices = @transform_5, window_bounds = array<i64: 1, 128>}, {transform_indices = @transform_6, window_bounds = array<i64: 8, 2, 128>}]} {
    %c0_i32 = arith.constant 0 : i32
    %0 = arith.cmpi eq, %arg0, %c0_i32 : i32
    %1 = arith.extui %0 : i1 to i32
    %c0_i32_0 = arith.constant 0 : i32
    %2 = arith.cmpi ne, %1, %c0_i32_0 : i32
    scf.if %2 {
      %cst_76 = arith.constant 0.000000e+00 : f32
      %287 = vector.broadcast %cst_76 : f32 to vector<2x128xf32>
      %c0_77 = arith.constant 0 : index
      %c0_78 = arith.constant 0 : index
      %288 = vector.load %arg8[%c0_77, %c0_78] : memref<2x128xf32, #tpu.memory_space<vmem>>, vector<2x128xf32>
      tpu.vector_store %arg8[%c0_77, %c0_78], %287 {strides = array<i32>} : memref<2x128xf32, #tpu.memory_space<vmem>>, vector<2x128xf32>,
      %cst_79 = arith.constant 0.000000e+00 : f32
      %289 = vector.broadcast %cst_79 : f32 to vector<2x128xf32>
      %c0_80 = arith.constant 0 : index
      %c0_81 = arith.constant 0 : index
      %290 = vector.load %arg9[%c0_80, %c0_81] : memref<2x128xf32, #tpu.memory_space<vmem>>, vector<2x128xf32>
      tpu.vector_store %arg9[%c0_80, %c0_81], %289 {strides = array<i32>} : memref<2x128xf32, #tpu.memory_space<vmem>>, vector<2x128xf32>,
    } else {
    }
    %c0 = arith.constant 0 : index
    %c0_1 = arith.constant 0 : index
    %3 = vector.load %arg1[%c0, %c0_1] : memref<2x256xbf16, #tpu.memory_space<vmem>>, vector<2x256xbf16>
    %c0_2 = arith.constant 0 : index
    %c0_3 = arith.constant 0 : index
    %4 = vector.load %arg2[%c0_2, %c0_3] : memref<256x512xbf16, #tpu.memory_space<vmem>>, vector<256x512xbf16>
    %cst = arith.constant dense<0.000000e+00> : vector<2x512xf32>
    %5 = tpu.matmul %3, %4, %cst {dimension_numbers = #tpu.dot_dimension_numbers<[1], [0], [0], [1], [0, 0, 1, 1], [], []>} : vector<2x256xbf16>, vector<256x512xbf16>, vector<2x512xf32> -> vector<2x512xf32>
    %c0_4 = arith.constant 0 : index
    %c0_5 = arith.constant 0 : index
    %6 = vector.load %arg4[%c0_4, %c0_5] : memref<1x512xf32, #tpu.memory_space<vmem>>, vector<1x512xf32>
    %7 = vector.broadcast %6 : vector<1x512xf32> to vector<2x512xf32>
    %8 = arith.addf %5, %7 : vector<2x512xf32>
    %c0_6 = arith.constant 0 : index
    %c0_7 = arith.constant 0 : index
    %9 = vector.load %arg3[%c0_6, %c0_7] : memref<128x512xbf16, #tpu.memory_space<vmem>>, vector<128x512xbf16>
    %c0_8 = arith.constant 0 : index
    %c0_9 = arith.constant 0 : index
    %10 = vector.load %arg8[%c0_8, %c0_9] : memref<2x128xf32, #tpu.memory_space<vmem>>, vector<2x128xf32>
    %c0_10 = arith.constant 0 : index
    %c0_11 = arith.constant 0 : index
    %11 = vector.load %arg9[%c0_10, %c0_11] : memref<2x128xf32, #tpu.memory_space<vmem>>, vector<2x128xf32>
    %c0_i32_12 = arith.constant 0 : i32
    %12 = arith.truncf %10 : vector<2x128xf32> to vector<2x128xbf16>
    %cst_13 = arith.constant dense<0.000000e+00> : vector<2x512xf32>
    %13 = tpu.matmul %12, %9, %cst_13 {dimension_numbers = #tpu.dot_dimension_numbers<[1], [0], [0], [1], [0, 0, 1, 1], [], []>} : vector<2x128xbf16>, vector<128x512xbf16>, vector<2x512xf32> -> vector<2x512xf32>
    %14 = arith.addf %8, %13 : vector<2x512xf32>
    %15 = vector.extract_strided_slice %14 {offsets = [0, 0], sizes = [2, 128], strides = [1, 1]} : vector<2x512xf32> to vector<2x128xf32>
    %16 = arith.negf %15 : vector<2x128xf32>
    %17 = math.exp %16 : vector<2x128xf32>
    %cst_14 = arith.constant 1.000000e+00 : f32
    %18 = vector.broadcast %cst_14 : f32 to vector<2x128xf32>
    %19 = arith.addf %18, %17 : vector<2x128xf32>
    %20 = arith.divf %18, %19 : vector<2x128xf32>
    %21 = vector.extract_strided_slice %14 {offsets = [0, 128], sizes = [2, 128], strides = [1, 1]} : vector<2x512xf32> to vector<2x128xf32>
    %22 = arith.negf %21 : vector<2x128xf32>
    %23 = math.exp %22 : vector<2x128xf32>
    %cst_15 = arith.constant 1.000000e+00 : f32
    %24 = vector.broadcast %cst_15 : f32 to vector<2x128xf32>
    %25 = arith.addf %24, %23 : vector<2x128xf32>
    %26 = arith.divf %24, %25 : vector<2x128xf32>
    %27 = vector.extract_strided_slice %14 {offsets = [0, 256], sizes = [2, 128], strides = [1, 1]} : vector<2x512xf32> to vector<2x128xf32>
    %28 = math.tanh %27 : vector<2x128xf32>
    %29 = vector.extract_strided_slice %14 {offsets = [0, 384], sizes = [2, 128], strides = [1, 1]} : vector<2x512xf32> to vector<2x128xf32>
    %30 = arith.negf %29 : vector<2x128xf32>
    %31 = math.exp %30 : vector<2x128xf32>
    %cst_16 = arith.constant 1.000000e+00 : f32
    %32 = vector.broadcast %cst_16 : f32 to vector<2x128xf32>
    %33 = arith.addf %32, %31 : vector<2x128xf32>
    %34 = arith.divf %32, %33 : vector<2x128xf32>
    %35 = arith.mulf %26, %11 : vector<2x128xf32>
    %36 = arith.mulf %20, %28 : vector<2x128xf32>
    %37 = arith.addf %35, %36 : vector<2x128xf32>
    %38 = math.tanh %37 : vector<2x128xf32>
    %39 = arith.mulf %34, %38 : vector<2x128xf32>
    %40 = arith.truncf %39 : vector<2x128xf32> to vector<2x128xbf16>
    %41 = arith.index_cast %c0_i32_12 : i32 to index
    %c0_17 = arith.constant 0 : index
    %c0_18 = arith.constant 0 : index
    %42 = vector.load %arg10[%41, %c0_17, %c0_18] : memref<8x2x128xbf16, #tpu.memory_space<vmem>>, vector<1x2x128xbf16>
    %43 = vector.shape_cast %42 : vector<1x2x128xbf16> to vector<2x128xbf16>
    %44 = vector.shape_cast %40 : vector<2x128xbf16> to vector<1x2x128xbf16>
    tpu.vector_store %arg10[%41, %c0_17, %c0_18], %44 {strides = array<i32>} : memref<8x2x128xbf16, #tpu.memory_space<vmem>>, vector<1x2x128xbf16>,
    %c1_i32 = arith.constant 1 : i32
    %45 = arith.truncf %39 : vector<2x128xf32> to vector<2x128xbf16>
    %cst_19 = arith.constant dense<0.000000e+00> : vector<2x512xf32>
    %46 = tpu.matmul %45, %9, %cst_19 {dimension_numbers = #tpu.dot_dimension_numbers<[1], [0], [0], [1], [0, 0, 1, 1], [], []>} : vector<2x128xbf16>, vector<128x512xbf16>, vector<2x512xf32> -> vector<2x512xf32>
    %47 = arith.addf %8, %46 : vector<2x512xf32>
    %48 = vector.extract_strided_slice %47 {offsets = [0, 0], sizes = [2, 128], strides = [1, 1]} : vector<2x512xf32> to vector<2x128xf32>
    %49 = arith.negf %48 : vector<2x128xf32>
    %50 = math.exp %49 : vector<2x128xf32>
    %cst_20 = arith.constant 1.000000e+00 : f32
    %51 = vector.broadcast %cst_20 : f32 to vector<2x128xf32>
    %52 = arith.addf %51, %50 : vector<2x128xf32>
    %53 = arith.divf %51, %52 : vector<2x128xf32>
    %54 = vector.extract_strided_slice %47 {offsets = [0, 128], sizes = [2, 128], strides = [1, 1]} : vector<2x512xf32> to vector<2x128xf32>
    %55 = arith.negf %54 : vector<2x128xf32>
    %56 = math.exp %55 : vector<2x128xf32>
    %cst_21 = arith.constant 1.000000e+00 : f32
    %57 = vector.broadcast %cst_21 : f32 to vector<2x128xf32>
    %58 = arith.addf %57, %56 : vector<2x128xf32>
    %59 = arith.divf %57, %58 : vector<2x128xf32>
    %60 = vector.extract_strided_slice %47 {offsets = [0, 256], sizes = [2, 128], strides = [1, 1]} : vector<2x512xf32> to vector<2x128xf32>
    %61 = math.tanh %60 : vector<2x128xf32>
    %62 = vector.extract_strided_slice %47 {offsets = [0, 384], sizes = [2, 128], strides = [1, 1]} : vector<2x512xf32> to vector<2x128xf32>
    %63 = arith.negf %62 : vector<2x128xf32>
    %64 = math.exp %63 : vector<2x128xf32>
    %cst_22 = arith.constant 1.000000e+00 : f32
    %65 = vector.broadcast %cst_22 : f32 to vector<2x128xf32>
    %66 = arith.addf %65, %64 : vector<2x128xf32>
    %67 = arith.divf %65, %66 : vector<2x128xf32>
    %68 = arith.mulf %59, %37 : vector<2x128xf32>
    %69 = arith.mulf %53, %61 : vector<2x128xf32>
    %70 = arith.addf %68, %69 : vector<2x128xf32>
    %71 = math.tanh %70 : vector<2x128xf32>
    %72 = arith.mulf %67, %71 : vector<2x128xf32>
    %73 = arith.truncf %72 : vector<2x128xf32> to vector<2x128xbf16>
    %74 = arith.index_cast %c1_i32 : i32 to index
    %c0_23 = arith.constant 0 : index
    %c0_24 = arith.constant 0 : index
    %75 = vector.load %arg10[%74, %c0_23, %c0_24] : memref<8x2x128xbf16, #tpu.memory_space<vmem>>, vector<1x2x128xbf16>
    %76 = vector.shape_cast %75 : vector<1x2x128xbf16> to vector<2x128xbf16>
    %77 = vector.shape_cast %73 : vector<2x128xbf16> to vector<1x2x128xbf16>
    tpu.vector_store %arg10[%74, %c0_23, %c0_24], %77 {strides = array<i32>} : memref<8x2x128xbf16, #tpu.memory_space<vmem>>, vector<1x2x128xbf16>,
    %c2_i32 = arith.constant 2 : i32
    %78 = arith.truncf %72 : vector<2x128xf32> to vector<2x128xbf16>
    %cst_25 = arith.constant dense<0.000000e+00> : vector<2x512xf32>
    %79 = tpu.matmul %78, %9, %cst_25 {dimension_numbers = #tpu.dot_dimension_numbers<[1], [0], [0], [1], [0, 0, 1, 1], [], []>} : vector<2x128xbf16>, vector<128x512xbf16>, vector<2x512xf32> -> vector<2x512xf32>
    %80 = arith.addf %8, %79 : vector<2x512xf32>
    %81 = vector.extract_strided_slice %80 {offsets = [0, 0], sizes = [2, 128], strides = [1, 1]} : vector<2x512xf32> to vector<2x128xf32>
    %82 = arith.negf %81 : vector<2x128xf32>
    %83 = math.exp %82 : vector<2x128xf32>
    %cst_26 = arith.constant 1.000000e+00 : f32
    %84 = vector.broadcast %cst_26 : f32 to vector<2x128xf32>
    %85 = arith.addf %84, %83 : vector<2x128xf32>
    %86 = arith.divf %84, %85 : vector<2x128xf32>
    %87 = vector.extract_strided_slice %80 {offsets = [0, 128], sizes = [2, 128], strides = [1, 1]} : vector<2x512xf32> to vector<2x128xf32>
    %88 = arith.negf %87 : vector<2x128xf32>
    %89 = math.exp %88 : vector<2x128xf32>
    %cst_27 = arith.constant 1.000000e+00 : f32
    %90 = vector.broadcast %cst_27 : f32 to vector<2x128xf32>
    %91 = arith.addf %90, %89 : vector<2x128xf32>
    %92 = arith.divf %90, %91 : vector<2x128xf32>
    %93 = vector.extract_strided_slice %80 {offsets = [0, 256], sizes = [2, 128], strides = [1, 1]} : vector<2x512xf32> to vector<2x128xf32>
    %94 = math.tanh %93 : vector<2x128xf32>
    %95 = vector.extract_strided_slice %80 {offsets = [0, 384], sizes = [2, 128], strides = [1, 1]} : vector<2x512xf32> to vector<2x128xf32>
    %96 = arith.negf %95 : vector<2x128xf32>
    %97 = math.exp %96 : vector<2x128xf32>
    %cst_28 = arith.constant 1.000000e+00 : f32
    %98 = vector.broadcast %cst_28 : f32 to vector<2x128xf32>
    %99 = arith.addf %98, %97 : vector<2x128xf32>
    %100 = arith.divf %98, %99 : vector<2x128xf32>
    %101 = arith.mulf %92, %70 : vector<2x128xf32>
    %102 = arith.mulf %86, %94 : vector<2x128xf32>
    %103 = arith.addf %101, %102 : vector<2x128xf32>
    %104 = math.tanh %103 : vector<2x128xf32>
    %105 = arith.mulf %100, %104 : vector<2x128xf32>
    %106 = arith.truncf %105 : vector<2x128xf32> to vector<2x128xbf16>
    %107 = arith.index_cast %c2_i32 : i32 to index
    %c0_29 = arith.constant 0 : index
    %c0_30 = arith.constant 0 : index
    %108 = vector.load %arg10[%107, %c0_29, %c0_30] : memref<8x2x128xbf16, #tpu.memory_space<vmem>>, vector<1x2x128xbf16>
    %109 = vector.shape_cast %108 : vector<1x2x128xbf16> to vector<2x128xbf16>
    %110 = vector.shape_cast %106 : vector<2x128xbf16> to vector<1x2x128xbf16>
    tpu.vector_store %arg10[%107, %c0_29, %c0_30], %110 {strides = array<i32>} : memref<8x2x128xbf16, #tpu.memory_space<vmem>>, vector<1x2x128xbf16>,
    %c3_i32 = arith.constant 3 : i32
    %111 = arith.truncf %105 : vector<2x128xf32> to vector<2x128xbf16>
    %cst_31 = arith.constant dense<0.000000e+00> : vector<2x512xf32>
    %112 = tpu.matmul %111, %9, %cst_31 {dimension_numbers = #tpu.dot_dimension_numbers<[1], [0], [0], [1], [0, 0, 1, 1], [], []>} : vector<2x128xbf16>, vector<128x512xbf16>, vector<2x512xf32> -> vector<2x512xf32>
    %113 = arith.addf %8, %112 : vector<2x512xf32>
    %114 = vector.extract_strided_slice %113 {offsets = [0, 0], sizes = [2, 128], strides = [1, 1]} : vector<2x512xf32> to vector<2x128xf32>
    %115 = arith.negf %114 : vector<2x128xf32>
    %116 = math.exp %115 : vector<2x128xf32>
    %cst_32 = arith.constant 1.000000e+00 : f32
    %117 = vector.broadcast %cst_32 : f32 to vector<2x128xf32>
    %118 = arith.addf %117, %116 : vector<2x128xf32>
    %119 = arith.divf %117, %118 : vector<2x128xf32>
    %120 = vector.extract_strided_slice %113 {offsets = [0, 128], sizes = [2, 128], strides = [1, 1]} : vector<2x512xf32> to vector<2x128xf32>
    %121 = arith.negf %120 : vector<2x128xf32>
    %122 = math.exp %121 : vector<2x128xf32>
    %cst_33 = arith.constant 1.000000e+00 : f32
    %123 = vector.broadcast %cst_33 : f32 to vector<2x128xf32>
    %124 = arith.addf %123, %122 : vector<2x128xf32>
    %125 = arith.divf %123, %124 : vector<2x128xf32>
    %126 = vector.extract_strided_slice %113 {offsets = [0, 256], sizes = [2, 128], strides = [1, 1]} : vector<2x512xf32> to vector<2x128xf32>
    %127 = math.tanh %126 : vector<2x128xf32>
    %128 = vector.extract_strided_slice %113 {offsets = [0, 384], sizes = [2, 128], strides = [1, 1]} : vector<2x512xf32> to vector<2x128xf32>
    %129 = arith.negf %128 : vector<2x128xf32>
    %130 = math.exp %129 : vector<2x128xf32>
    %cst_34 = arith.constant 1.000000e+00 : f32
    %131 = vector.broadcast %cst_34 : f32 to vector<2x128xf32>
    %132 = arith.addf %131, %130 : vector<2x128xf32>
    %133 = arith.divf %131, %132 : vector<2x128xf32>
    %134 = arith.mulf %125, %103 : vector<2x128xf32>
    %135 = arith.mulf %119, %127 : vector<2x128xf32>
    %136 = arith.addf %134, %135 : vector<2x128xf32>
    %137 = math.tanh %136 : vector<2x128xf32>
    %138 = arith.mulf %133, %137 : vector<2x128xf32>
    %139 = arith.truncf %138 : vector<2x128xf32> to vector<2x128xbf16>
    %140 = arith.index_cast %c3_i32 : i32 to index
    %c0_35 = arith.constant 0 : index
    %c0_36 = arith.constant 0 : index
    %141 = vector.load %arg10[%140, %c0_35, %c0_36] : memref<8x2x128xbf16, #tpu.memory_space<vmem>>, vector<1x2x128xbf16>
    %142 = vector.shape_cast %141 : vector<1x2x128xbf16> to vector<2x128xbf16>
    %143 = vector.shape_cast %139 : vector<2x128xbf16> to vector<1x2x128xbf16>
    tpu.vector_store %arg10[%140, %c0_35, %c0_36], %143 {strides = array<i32>} : memref<8x2x128xbf16, #tpu.memory_space<vmem>>, vector<1x2x128xbf16>,
    %c4_i32 = arith.constant 4 : i32
    %144 = arith.truncf %138 : vector<2x128xf32> to vector<2x128xbf16>
    %cst_37 = arith.constant dense<0.000000e+00> : vector<2x512xf32>
    %145 = tpu.matmul %144, %9, %cst_37 {dimension_numbers = #tpu.dot_dimension_numbers<[1], [0], [0], [1], [0, 0, 1, 1], [], []>} : vector<2x128xbf16>, vector<128x512xbf16>, vector<2x512xf32> -> vector<2x512xf32>
    %146 = arith.addf %8, %145 : vector<2x512xf32>
    %147 = vector.extract_strided_slice %146 {offsets = [0, 0], sizes = [2, 128], strides = [1, 1]} : vector<2x512xf32> to vector<2x128xf32>
    %148 = arith.negf %147 : vector<2x128xf32>
    %149 = math.exp %148 : vector<2x128xf32>
    %cst_38 = arith.constant 1.000000e+00 : f32
    %150 = vector.broadcast %cst_38 : f32 to vector<2x128xf32>
    %151 = arith.addf %150, %149 : vector<2x128xf32>
    %152 = arith.divf %150, %151 : vector<2x128xf32>
    %153 = vector.extract_strided_slice %146 {offsets = [0, 128], sizes = [2, 128], strides = [1, 1]} : vector<2x512xf32> to vector<2x128xf32>
    %154 = arith.negf %153 : vector<2x128xf32>
    %155 = math.exp %154 : vector<2x128xf32>
    %cst_39 = arith.constant 1.000000e+00 : f32
    %156 = vector.broadcast %cst_39 : f32 to vector<2x128xf32>
    %157 = arith.addf %156, %155 : vector<2x128xf32>
    %158 = arith.divf %156, %157 : vector<2x128xf32>
    %159 = vector.extract_strided_slice %146 {offsets = [0, 256], sizes = [2, 128], strides = [1, 1]} : vector<2x512xf32> to vector<2x128xf32>
    %160 = math.tanh %159 : vector<2x128xf32>
    %161 = vector.extract_strided_slice %146 {offsets = [0, 384], sizes = [2, 128], strides = [1, 1]} : vector<2x512xf32> to vector<2x128xf32>
    %162 = arith.negf %161 : vector<2x128xf32>
    %163 = math.exp %162 : vector<2x128xf32>
    %cst_40 = arith.constant 1.000000e+00 : f32
    %164 = vector.broadcast %cst_40 : f32 to vector<2x128xf32>
    %165 = arith.addf %164, %163 : vector<2x128xf32>
    %166 = arith.divf %164, %165 : vector<2x128xf32>
    %167 = arith.mulf %158, %136 : vector<2x128xf32>
    %168 = arith.mulf %152, %160 : vector<2x128xf32>
    %169 = arith.addf %167, %168 : vector<2x128xf32>
    %170 = math.tanh %169 : vector<2x128xf32>
    %171 = arith.mulf %166, %170 : vector<2x128xf32>
    %172 = arith.truncf %171 : vector<2x128xf32> to vector<2x128xbf16>
    %173 = arith.index_cast %c4_i32 : i32 to index
    %c0_41 = arith.constant 0 : index
    %c0_42 = arith.constant 0 : index
    %174 = vector.load %arg10[%173, %c0_41, %c0_42] : memref<8x2x128xbf16, #tpu.memory_space<vmem>>, vector<1x2x128xbf16>
    %175 = vector.shape_cast %174 : vector<1x2x128xbf16> to vector<2x128xbf16>
    %176 = vector.shape_cast %172 : vector<2x128xbf16> to vector<1x2x128xbf16>
    tpu.vector_store %arg10[%173, %c0_41, %c0_42], %176 {strides = array<i32>} : memref<8x2x128xbf16, #tpu.memory_space<vmem>>, vector<1x2x128xbf16>,
    %c5_i32 = arith.constant 5 : i32
    %177 = arith.truncf %171 : vector<2x128xf32> to vector<2x128xbf16>
    %cst_43 = arith.constant dense<0.000000e+00> : vector<2x512xf32>
    %178 = tpu.matmul %177, %9, %cst_43 {dimension_numbers = #tpu.dot_dimension_numbers<[1], [0], [0], [1], [0, 0, 1, 1], [], []>} : vector<2x128xbf16>, vector<128x512xbf16>, vector<2x512xf32> -> vector<2x512xf32>
    %179 = arith.addf %8, %178 : vector<2x512xf32>
    %180 = vector.extract_strided_slice %179 {offsets = [0, 0], sizes = [2, 128], strides = [1, 1]} : vector<2x512xf32> to vector<2x128xf32>
    %181 = arith.negf %180 : vector<2x128xf32>
    %182 = math.exp %181 : vector<2x128xf32>
    %cst_44 = arith.constant 1.000000e+00 : f32
    %183 = vector.broadcast %cst_44 : f32 to vector<2x128xf32>
    %184 = arith.addf %183, %182 : vector<2x128xf32>
    %185 = arith.divf %183, %184 : vector<2x128xf32>
    %186 = vector.extract_strided_slice %179 {offsets = [0, 128], sizes = [2, 128], strides = [1, 1]} : vector<2x512xf32> to vector<2x128xf32>
    %187 = arith.negf %186 : vector<2x128xf32>
    %188 = math.exp %187 : vector<2x128xf32>
    %cst_45 = arith.constant 1.000000e+00 : f32
    %189 = vector.broadcast %cst_45 : f32 to vector<2x128xf32>
    %190 = arith.addf %189, %188 : vector<2x128xf32>
    %191 = arith.divf %189, %190 : vector<2x128xf32>
    %192 = vector.extract_strided_slice %179 {offsets = [0, 256], sizes = [2, 128], strides = [1, 1]} : vector<2x512xf32> to vector<2x128xf32>
    %193 = math.tanh %192 : vector<2x128xf32>
    %194 = vector.extract_strided_slice %179 {offsets = [0, 384], sizes = [2, 128], strides = [1, 1]} : vector<2x512xf32> to vector<2x128xf32>
    %195 = arith.negf %194 : vector<2x128xf32>
    %196 = math.exp %195 : vector<2x128xf32>
    %cst_46 = arith.constant 1.000000e+00 : f32
    %197 = vector.broadcast %cst_46 : f32 to vector<2x128xf32>
    %198 = arith.addf %197, %196 : vector<2x128xf32>
    %199 = arith.divf %197, %198 : vector<2x128xf32>
    %200 = arith.mulf %191, %169 : vector<2x128xf32>
    %201 = arith.mulf %185, %193 : vector<2x128xf32>
    %202 = arith.addf %200, %201 : vector<2x128xf32>
    %203 = math.tanh %202 : vector<2x128xf32>
    %204 = arith.mulf %199, %203 : vector<2x128xf32>
    %205 = arith.truncf %204 : vector<2x128xf32> to vector<2x128xbf16>
    %206 = arith.index_cast %c5_i32 : i32 to index
    %c0_47 = arith.constant 0 : index
    %c0_48 = arith.constant 0 : index
    %207 = vector.load %arg10[%206, %c0_47, %c0_48] : memref<8x2x128xbf16, #tpu.memory_space<vmem>>, vector<1x2x128xbf16>
    %208 = vector.shape_cast %207 : vector<1x2x128xbf16> to vector<2x128xbf16>
    %209 = vector.shape_cast %205 : vector<2x128xbf16> to vector<1x2x128xbf16>
    tpu.vector_store %arg10[%206, %c0_47, %c0_48], %209 {strides = array<i32>} : memref<8x2x128xbf16, #tpu.memory_space<vmem>>, vector<1x2x128xbf16>,
    %c6_i32 = arith.constant 6 : i32
    %210 = arith.truncf %204 : vector<2x128xf32> to vector<2x128xbf16>
    %cst_49 = arith.constant dense<0.000000e+00> : vector<2x512xf32>
    %211 = tpu.matmul %210, %9, %cst_49 {dimension_numbers = #tpu.dot_dimension_numbers<[1], [0], [0], [1], [0, 0, 1, 1], [], []>} : vector<2x128xbf16>, vector<128x512xbf16>, vector<2x512xf32> -> vector<2x512xf32>
    %212 = arith.addf %8, %211 : vector<2x512xf32>
    %213 = vector.extract_strided_slice %212 {offsets = [0, 0], sizes = [2, 128], strides = [1, 1]} : vector<2x512xf32> to vector<2x128xf32>
    %214 = arith.negf %213 : vector<2x128xf32>
    %215 = math.exp %214 : vector<2x128xf32>
    %cst_50 = arith.constant 1.000000e+00 : f32
    %216 = vector.broadcast %cst_50 : f32 to vector<2x128xf32>
    %217 = arith.addf %216, %215 : vector<2x128xf32>
    %218 = arith.divf %216, %217 : vector<2x128xf32>
    %219 = vector.extract_strided_slice %212 {offsets = [0, 128], sizes = [2, 128], strides = [1, 1]} : vector<2x512xf32> to vector<2x128xf32>
    %220 = arith.negf %219 : vector<2x128xf32>
    %221 = math.exp %220 : vector<2x128xf32>
    %cst_51 = arith.constant 1.000000e+00 : f32
    %222 = vector.broadcast %cst_51 : f32 to vector<2x128xf32>
    %223 = arith.addf %222, %221 : vector<2x128xf32>
    %224 = arith.divf %222, %223 : vector<2x128xf32>
    %225 = vector.extract_strided_slice %212 {offsets = [0, 256], sizes = [2, 128], strides = [1, 1]} : vector<2x512xf32> to vector<2x128xf32>
    %226 = math.tanh %225 : vector<2x128xf32>
    %227 = vector.extract_strided_slice %212 {offsets = [0, 384], sizes = [2, 128], strides = [1, 1]} : vector<2x512xf32> to vector<2x128xf32>
    %228 = arith.negf %227 : vector<2x128xf32>
    %229 = math.exp %228 : vector<2x128xf32>
    %cst_52 = arith.constant 1.000000e+00 : f32
    %230 = vector.broadcast %cst_52 : f32 to vector<2x128xf32>
    %231 = arith.addf %230, %229 : vector<2x128xf32>
    %232 = arith.divf %230, %231 : vector<2x128xf32>
    %233 = arith.mulf %224, %202 : vector<2x128xf32>
    %234 = arith.mulf %218, %226 : vector<2x128xf32>
    %235 = arith.addf %233, %234 : vector<2x128xf32>
    %236 = math.tanh %235 : vector<2x128xf32>
    %237 = arith.mulf %232, %236 : vector<2x128xf32>
    %238 = arith.truncf %237 : vector<2x128xf32> to vector<2x128xbf16>
    %239 = arith.index_cast %c6_i32 : i32 to index
    %c0_53 = arith.constant 0 : index
    %c0_54 = arith.constant 0 : index
    %240 = vector.load %arg10[%239, %c0_53, %c0_54] : memref<8x2x128xbf16, #tpu.memory_space<vmem>>, vector<1x2x128xbf16>
    %241 = vector.shape_cast %240 : vector<1x2x128xbf16> to vector<2x128xbf16>
    %242 = vector.shape_cast %238 : vector<2x128xbf16> to vector<1x2x128xbf16>
    tpu.vector_store %arg10[%239, %c0_53, %c0_54], %242 {strides = array<i32>} : memref<8x2x128xbf16, #tpu.memory_space<vmem>>, vector<1x2x128xbf16>,
    %c7_i32 = arith.constant 7 : i32
    %243 = arith.truncf %237 : vector<2x128xf32> to vector<2x128xbf16>
    %cst_55 = arith.constant dense<0.000000e+00> : vector<2x512xf32>
    %244 = tpu.matmul %243, %9, %cst_55 {dimension_numbers = #tpu.dot_dimension_numbers<[1], [0], [0], [1], [0, 0, 1, 1], [], []>} : vector<2x128xbf16>, vector<128x512xbf16>, vector<2x512xf32> -> vector<2x512xf32>
    %245 = arith.addf %8, %244 : vector<2x512xf32>
    %246 = vector.extract_strided_slice %245 {offsets = [0, 0], sizes = [2, 128], strides = [1, 1]} : vector<2x512xf32> to vector<2x128xf32>
    %247 = arith.negf %246 : vector<2x128xf32>
    %248 = math.exp %247 : vector<2x128xf32>
    %cst_56 = arith.constant 1.000000e+00 : f32
    %249 = vector.broadcast %cst_56 : f32 to vector<2x128xf32>
    %250 = arith.addf %249, %248 : vector<2x128xf32>
    %251 = arith.divf %249, %250 : vector<2x128xf32>
    %252 = vector.extract_strided_slice %245 {offsets = [0, 128], sizes = [2, 128], strides = [1, 1]} : vector<2x512xf32> to vector<2x128xf32>
    %253 = arith.negf %252 : vector<2x128xf32>
    %254 = math.exp %253 : vector<2x128xf32>
    %cst_57 = arith.constant 1.000000e+00 : f32
    %255 = vector.broadcast %cst_57 : f32 to vector<2x128xf32>
    %256 = arith.addf %255, %254 : vector<2x128xf32>
    %257 = arith.divf %255, %256 : vector<2x128xf32>
    %258 = vector.extract_strided_slice %245 {offsets = [0, 256], sizes = [2, 128], strides = [1, 1]} : vector<2x512xf32> to vector<2x128xf32>
    %259 = math.tanh %258 : vector<2x128xf32>
    %260 = vector.extract_strided_slice %245 {offsets = [0, 384], sizes = [2, 128], strides = [1, 1]} : vector<2x512xf32> to vector<2x128xf32>
    %261 = arith.negf %260 : vector<2x128xf32>
    %262 = math.exp %261 : vector<2x128xf32>
    %cst_58 = arith.constant 1.000000e+00 : f32
    %263 = vector.broadcast %cst_58 : f32 to vector<2x128xf32>
    %264 = arith.addf %263, %262 : vector<2x128xf32>
    %265 = arith.divf %263, %264 : vector<2x128xf32>
    %266 = arith.mulf %257, %235 : vector<2x128xf32>
    %267 = arith.mulf %251, %259 : vector<2x128xf32>
    %268 = arith.addf %266, %267 : vector<2x128xf32>
    %269 = math.tanh %268 : vector<2x128xf32>
    %270 = arith.mulf %265, %269 : vector<2x128xf32>
    %271 = arith.truncf %270 : vector<2x128xf32> to vector<2x128xbf16>
    %272 = arith.index_cast %c7_i32 : i32 to index
    %c0_59 = arith.constant 0 : index
    %c0_60 = arith.constant 0 : index
    %273 = vector.load %arg10[%272, %c0_59, %c0_60] : memref<8x2x128xbf16, #tpu.memory_space<vmem>>, vector<1x2x128xbf16>
    %274 = vector.shape_cast %273 : vector<1x2x128xbf16> to vector<2x128xbf16>
    %275 = vector.shape_cast %271 : vector<2x128xbf16> to vector<1x2x128xbf16>
    tpu.vector_store %arg10[%272, %c0_59, %c0_60], %275 {strides = array<i32>} : memref<8x2x128xbf16, #tpu.memory_space<vmem>>, vector<1x2x128xbf16>,
    %c8_i32 = arith.constant 8 : i32
    %c0_61 = arith.constant 0 : index
    %c0_62 = arith.constant 0 : index
    %276 = vector.load %arg8[%c0_61, %c0_62] : memref<2x128xf32, #tpu.memory_space<vmem>>, vector<2x128xf32>
    tpu.vector_store %arg8[%c0_61, %c0_62], %270 {strides = array<i32>} : memref<2x128xf32, #tpu.memory_space<vmem>>, vector<2x128xf32>,
    %c0_63 = arith.constant 0 : index
    %c0_64 = arith.constant 0 : index
    %277 = vector.load %arg9[%c0_63, %c0_64] : memref<2x128xf32, #tpu.memory_space<vmem>>, vector<2x128xf32>
    tpu.vector_store %arg9[%c0_63, %c0_64], %268 {strides = array<i32>} : memref<2x128xf32, #tpu.memory_space<vmem>>, vector<2x128xf32>,
    %c0_65 = arith.constant 0 : index
    %c0_66 = arith.constant 0 : index
    %c0_67 = arith.constant 0 : index
    %278 = vector.load %arg10[%c0_65, %c0_66, %c0_67] : memref<8x2x128xbf16, #tpu.memory_space<vmem>>, vector<8x2x128xbf16>
    %279 = vector.shape_cast %278 : vector<8x2x128xbf16> to vector<16x128xbf16>
    %c0_68 = arith.constant 0 : index
    %c0_69 = arith.constant 0 : index
    %280 = vector.load %arg5[%c0_68, %c0_69] : memref<128x128xbf16, #tpu.memory_space<vmem>>, vector<128x128xbf16>
    %cst_70 = arith.constant dense<0.000000e+00> : vector<16x128xf32>
    %281 = tpu.matmul %279, %280, %cst_70 {dimension_numbers = #tpu.dot_dimension_numbers<[1], [0], [0], [1], [0, 0, 1, 1], [], []>} : vector<16x128xbf16>, vector<128x128xbf16>, vector<16x128xf32> -> vector<16x128xf32>
    %c0_71 = arith.constant 0 : index
    %c0_72 = arith.constant 0 : index
    %282 = vector.load %arg6[%c0_71, %c0_72] : memref<1x128xf32, #tpu.memory_space<vmem>>, vector<1x128xf32>
    %283 = vector.broadcast %282 : vector<1x128xf32> to vector<16x128xf32>
    %284 = arith.addf %281, %283 : vector<16x128xf32>
    %285 = vector.shape_cast %284 : vector<16x128xf32> to vector<8x2x128xf32>
    %c0_73 = arith.constant 0 : index
    %c0_74 = arith.constant 0 : index
    %c0_75 = arith.constant 0 : index
    %286 = vector.load %arg7[%c0_73, %c0_74, %c0_75] : memref<8x2x128xf32, #tpu.memory_space<vmem>>, vector<8x2x128xf32>
    tpu.vector_store %arg7[%c0_73, %c0_74, %c0_75], %285 {strides = array<i32>} : memref<8x2x128xf32, #tpu.memory_space<vmem>>, vector<8x2x128xf32>,
    return
  }
  func.func @transform_0(%arg0: i32) -> (i32, i32) {
    %c0_i32 = arith.constant 0 : i32
    %c0_i32_0 = arith.constant 0 : i32
    %c0_i32_1 = arith.constant 0 : i32
    return %c0_i32, %c0_i32_0 : i32, i32
  }
  func.func @transform_1(%arg0: i32) -> (i32, i32) {
    %c0_i32 = arith.constant 0 : i32
    %c0_i32_0 = arith.constant 0 : i32
    %c0_i32_1 = arith.constant 0 : i32
    return %c0_i32, %c0_i32_0 : i32, i32
  }
  func.func @transform_2(%arg0: i32) -> (i32, i32) {
    %c0_i32 = arith.constant 0 : i32
    %c0_i32_0 = arith.constant 0 : i32
    %c0_i32_1 = arith.constant 0 : i32
    return %c0_i32, %c0_i32_0 : i32, i32
  }
  func.func @transform_3(%arg0: i32) -> (i32, i32) {
    %c0_i32 = arith.constant 0 : i32
    %c0_i32_0 = arith.constant 0 : i32
    %c0_i32_1 = arith.constant 0 : i32
    return %c0_i32, %c0_i32_0 : i32, i32
  }
  func.func @transform_4(%arg0: i32) -> (i32, i32) {
    %c0_i32 = arith.constant 0 : i32
    %c0_i32_0 = arith.constant 0 : i32
    %c0_i32_1 = arith.constant 0 : i32
    return %c0_i32, %c0_i32_0 : i32, i32
  }
  func.func @transform_5(%arg0: i32) -> (i32, i32) {
    %c0_i32 = arith.constant 0 : i32
    %c0_i32_0 = arith.constant 0 : i32
    %c0_i32_1 = arith.constant 0 : i32
    return %c0_i32, %c0_i32_0 : i32, i32
  }
  func.func @transform_6(%arg0: i32) -> (i32, i32, i32) {
    %c0_i32 = arith.constant 0 : i32
    %c0_i32_0 = arith.constant 0 : i32
    %c0_i32_1 = arith.constant 0 : i32
    return %arg0, %c0_i32, %c0_i32_0 : i32, i32, i32
  }
}

</mosaic_0001>

<llo_original>
// kernel: hsam_forward.2
$region0: #{hsam_forward.2}
  #allocation0 [shape = 'u32[]', space=smem, size = 0x4, offset = 0x4, fixed_abs, tag = 'smem constant byte address 0x4 - core index']
  #allocation1 [shape = 'u32[144,128]{1,0:T(1,128)}', space=vmem, size = 0x12000, scoped, tag = 'internal scratch']
  #allocation2 [shape = 'f32[2,128]{1,0:T(2,128)}', space=vmem, size = 0x400, scoped, tag = 'scratch operand']
  #allocation3 [shape = 'f32[2,128]{1,0:T(2,128)}', space=vmem, size = 0x400, scoped, tag = 'scratch operand']
  #allocation4 [shape = 'f32[8,2,512]{2,1,0:T(2,128)}', space=vmem, size = 0x8000, scoped, tag = 'scratch operand']
  %s0 = inlined_call_operand.vmem [shape: bf16[2,8,2,128], index: 0, kind: input, shape index: {}]
  %s1 = inlined_call_operand.hbm [shape: bf16[2,128,512], index: 1, kind: input, shape index: {}]
  %s2 = inlined_call_operand.hbm [shape: bf16[2,128,512], index: 2, kind: input, shape index: {}]
  %s3 = inlined_call_operand.vmem [shape: f32[2,1,512], index: 3, kind: input, shape index: {}]
  %s4 = inlined_call_operand.vmem [shape: f32[2,2,128], index: 4, kind: output, shape index: {}]
  %s5 = sld [smem:[#allocation0]]
  $region65: #{hsam_forward.2} parent=0
    _
  %s7 = ssub.s32 1, %s5
  %s8 = scalar_select 0, %s7, %s5
  $region1: #{hsam_forward.2} parent=0
    #allocation5 [shape = 'u8[262144]{0}', space=vmem, size = 0x40000, scoped, tag = 'input window, operand 1']
    #allocation6 [shape = 's32[2]{0}', space=sflag, size = 0x8, scoped, tag = 'scoped memory for hsam_forward.2']
    #allocation7 [shape = 'u8[262144]{0}', space=vmem, size = 0x40000, scoped, tag = 'input window, operand 2']
    #allocation8 [shape = 's32[2]{0}', space=sflag, size = 0x8, scoped, tag = 'scoped memory for hsam_forward.2']
    %9 = vsyncpa [#allocation6], 0
    %s10 = scalar_lea.sflag [#allocation6], 1
    %11 = vsyncpa %s10, 0
    %12 = vsyncpa [#allocation8], 0
    %s13 = scalar_lea.sflag [#allocation8], 1
    %14 = vsyncpa %s13, 0
    loop: start=0, step=1, limit=4
    $region2: #{hsam_forward.2} parent=1 // loop_pre_header
      _
    $region3: #{hsam_forward.2} parent=1 // loop_header
      %s16 = sphi 0, %s20
      %p17 = scmp.ge.s32.totalorder %s16, 4
      %s23 = sphi 0, %s35
      %s24 = sphi 0, %s31
      %s25 = sphi 0, %s23
      %s26 = sphi 0, %s24
      %s27 = sphi 0, %s25
      %s28 = sphi 0, %s26
      %s40 = sphi 0, %s42
      %s43 = sphi 0, %s40
      %s44 = sphi 0, %s43
      %s60 = sphi 0, %s44
      %s66 = sphi 0, %s68
      %s69 = sphi 0, %s66
      %s70 = sphi 0, %s69
      %s86 = sphi 0, %s70
      %s92 = sphi 0, %s94
      %s95 = sphi 0, %s92
      %s96 = sphi 0, %s95
      %s112 = sphi 0, %s96
      %s118 = sphi 0, %s120
      %s121 = sphi 0, %s118
      %s122 = sphi 0, %s121
      %s138 = sphi 0, %s122
      %s144 = sphi 0, %s146
      %s147 = sphi 0, %s144
      %s148 = sphi 0, %s147
      %s164 = sphi 0, %s148
    $region4: #{hsam_forward.2} parent=1 // loop_header_branch
      %19 = sbr.rel (%p17) target = $region8
    $region5: #{hsam_forward.2} parent=1 // loop_body
      %s21 = ssub.s32 %s16, 1
      %s22 = ssub.s32 %s16, 2
      %s29 = sadd.s32 1, %s24
      %p30 = scmp.ge.s32.totalorder %s29, 1
      %s31 = scalar_select %p30, 0, %s29
      %s32 = sadd.s32 1, %s23
      %s33 = scalar_select %p30, %s32, %s23
      %p34 = scmp.ge.s32.totalorder %s33, 2
      %s35 = scalar_select %p34, 0, %s33
      %s36 = ssub.s32 %s23, %s35
      %s37 = ssub.s32 %s24, %s31
      %s38 = sor.u32 %s36, %s37
      %p39 = scmp.eq.s32.totalorder %s38, 0
      %s41 = sadd.s32 %s40, 1
      %s42 = scalar_select %p39, %s40, %s41
      %p45 = pneg %p39
      %p46 = scmp.eq.s32.totalorder %s16, 1
      %p47 = por %p45, %p46
      %p48 = scmp.ne.s32.totalorder %s40, %s43
      %p49 = scmp.eq.s32.totalorder %s16, 0
      %p50 = por %p48, %p49
      %p51 = scmp.ne.s32.totalorder %s40, %s43
      %p52 = scmp.eq.s32.totalorder %s21, 1
      %p53 = por %p51, %p52
      %p54 = scmp.ne.s32.totalorder %s43, %s44
      %p55 = scmp.eq.s32.totalorder %s21, 0
      %p56 = por %p54, %p55
      %p57 = scmp.ne.s32.totalorder %s43, %s44
      %p58 = scmp.eq.s32.totalorder %s22, 1
      %p59 = por %p57, %p58
      %p61 = scmp.ne.s32.totalorder %s44, %s60
      %p62 = scmp.eq.s32.totalorder %s22, 0
      %p63 = por %p61, %p62
      %s64 = ssub.s32 %s23, %s35
      %p65 = scmp.eq.s32.totalorder %s64, 0
      %s67 = sadd.s32 %s66, 1
      %s68 = scalar_select %p65, %s66, %s67
      %p71 = pneg %p65
      %p72 = scmp.eq.s32.totalorder %s16, 1
      %p73 = por %p71, %p72
      %p74 = scmp.ne.s32.totalorder %s66, %s69
      %p75 = scmp.eq.s32.totalorder %s16, 0
      %p76 = por %p74, %p75
      %p77 = scmp.ne.s32.totalorder %s66, %s69
      %p78 = scmp.eq.s32.totalorder %s21, 1
      %p79 = por %p77, %p78
      %p80 = scmp.ne.s32.totalorder %s69, %s70
      %p81 = scmp.eq.s32.totalorder %s21, 0
      %p82 = por %p80, %p81
      %p83 = scmp.ne.s32.totalorder %s69, %s70
      %p84 = scmp.eq.s32.totalorder %s22, 1
      %p85 = por %p83, %p84
      %p87 = scmp.ne.s32.totalorder %s70, %s86
      %p88 = scmp.eq.s32.totalorder %s22, 0
      %p89 = por %p87, %p88
      %s90 = ssub.s32 %s23, %s35
      %p91 = scmp.eq.s32.totalorder %s90, 0
      %s93 = sadd.s32 %s92, 1
      %s94 = scalar_select %p91, %s92, %s93
      %p97 = pneg %p91
      %p98 = scmp.eq.s32.totalorder %s16, 1
      %p99 = por %p97, %p98
      %p100 = scmp.ne.s32.totalorder %s92, %s95
      %p101 = scmp.eq.s32.totalorder %s16, 0
      %p102 = por %p100, %p101
      %p103 = scmp.ne.s32.totalorder %s92, %s95
      %p104 = scmp.eq.s32.totalorder %s21, 1
      %p105 = por %p103, %p104
      %p106 = scmp.ne.s32.totalorder %s95, %s96
      %p107 = scmp.eq.s32.totalorder %s21, 0
      %p108 = por %p106, %p107
      %p109 = scmp.ne.s32.totalorder %s95, %s96
      %p110 = scmp.eq.s32.totalorder %s22, 1
      %p111 = por %p109, %p110
      %p113 = scmp.ne.s32.totalorder %s96, %s112
      %p114 = scmp.eq.s32.totalorder %s22, 0
      %p115 = por %p113, %p114
      %s116 = ssub.s32 %s23, %s35
      %p117 = scmp.eq.s32.totalorder %s116, 0
      %s119 = sadd.s32 %s118, 1
      %s120 = scalar_select %p117, %s118, %s119
      %p123 = pneg %p117
      %p124 = scmp.eq.s32.totalorder %s16, 1
      %p125 = por %p123, %p124
      %p126 = scmp.ne.s32.totalorder %s118, %s121
      %p127 = scmp.eq.s32.totalorder %s16, 0
      %p128 = por %p126, %p127
      %p129 = scmp.ne.s32.totalorder %s118, %s121
      %p130 = scmp.eq.s32.totalorder %s21, 1
      %p131 = por %p129, %p130
      %p132 = scmp.ne.s32.totalorder %s121, %s122
      %p133 = scmp.eq.s32.totalorder %s21, 0
      %p134 = por %p132, %p133
      %p135 = scmp.ne.s32.totalorder %s121, %s122
      %p136 = scmp.eq.s32.totalorder %s22, 1
      %p137 = por %p135, %p136
      %p139 = scmp.ne.s32.totalorder %s122, %s138
      %p140 = scmp.eq.s32.totalorder %s22, 0
      %p141 = por %p139, %p140
      %s142 = ssub.s32 %s23, %s35
      %p143 = scmp.eq.s32.totalorder %s142, 0
      %s145 = sadd.s32 %s144, 1
      %s146 = scalar_select %p143, %s144, %s145
      %p149 = pneg %p143
      %p150 = scmp.eq.s32.totalorder %s16, 1
      %p151 = por %p149, %p150
      %p152 = scmp.ne.s32.totalorder %s144, %s147
      %p153 = scmp.eq.s32.totalorder %s16, 0
      %p154 = por %p152, %p153
      %p155 = scmp.ne.s32.totalorder %s144, %s147
      %p156 = scmp.eq.s32.totalorder %s21, 1
      %p157 = por %p155, %p156
      %p158 = scmp.ne.s32.totalorder %s147, %s148
      %p159 = scmp.eq.s32.totalorder %s21, 0
      %p160 = por %p158, %p159
      %p161 = scmp.ne.s32.totalorder %s147, %s148
      %p162 = scmp.eq.s32.totalorder %s22, 1
      %p163 = por %p161, %p162
      %p165 = scmp.ne.s32.totalorder %s148, %s164
      %p166 = scmp.eq.s32.totalorder %s22, 0
      %p167 = por %p165, %p166
      %p168 = scmp.le.s32.totalorder 1, %s16
      %p169 = scmp.lt.s32.totalorder %s16, 3
      %p170 = pnand %p168, %p169
      %p171 = pneg %p170
      // Predicated region
      $region9: #{hsam_forward.2} parent=5 // pred_check
        _
      $region10: #{hsam_forward.2} parent=5 // pred_check_branch
        %173 = sbr.rel (%p170) target = $region12
      $region11: #{hsam_forward.2} parent=5 // pred_region
        %s174 = ssub.s32 %s16, 1
      $region12: #{hsam_forward.2} parent=5 // pred_fallthru
        _
      %p175 = scmp.lt.s32.totalorder %s16, 2
      // Predicated region
      $region13: #{hsam_forward.2} parent=5 // pred_check
        %p176 = pneg %p175
      $region14: #{hsam_forward.2} parent=5 // pred_check_branch
        %178 = sbr.rel (%p176) target = $region16
      $region15: #{hsam_forward.2} parent=5 // pred_region
        // Predicated region
        $region17: #{hsam_forward.2} parent=15 // pred_check
          %p179 = pneg %p50
        $region18: #{hsam_forward.2} parent=15 // pred_check_branch
          %181 = sbr.rel (%p179) target = $region20
        $region19: #{hsam_forward.2} parent=15 // pred_region
          %s182 = smul.u32 8, %s24
          %p183 = scmp.lt.s32.totalorder %s23, 1
          %s184 = scalar_select %p183, %s23, 1
          %p185 = scmp.lt.s32.totalorder %s182, 7
          %s186 = scalar_select %p185, %s182, 7
          %s187 = smul.addr %s184, 8
          %s188 = sadd.s32 %s186, %s187
          %s189 = scalar_lea.vmem %s0, %s188
          %s190 = smul.u32 8, %s24
        $region20: #{hsam_forward.2} parent=15 // pred_fallthru
          _
        // Predicated region
        $region21: #{hsam_forward.2} parent=15 // pred_check
          %p191 = pneg %p76
        $region22: #{hsam_forward.2} parent=15 // pred_check_branch
          %193 = sbr.rel (%p191) target = $region24
        $region23: #{hsam_forward.2} parent=15 // pred_region
          %s194 = sand.u32 %s66, 1
          %s195 = scalar_lea.sflag [#allocation6], %s194
          %s196 = sand.u32 %s66, 1
          %s197 = smul.addr %s196, 256
          %s198 = scalar_lea.vmem [#allocation5], %s197
          %s200 = ssub.s32 4096, 4096
          %201 = vsyncadd %s195, %s200
          %s202 = smul.addr %s23, 64
          %s203 = smul.addr %s202, 64
          %s204 = scalar_lea.hbm %s1, %s203
          %s205 = sshll.u32 %s198, 4
          %s206 = int_to_ptr.vmem [resolvable:$true] %s205
          %211 = dma.hbm_to_vmem [thread:$0]  %s204, 4096, %s206, %s195, 256, 256, 16
        $region24: #{hsam_forward.2} parent=15 // pred_fallthru
          _
        // Predicated region
        $region25: #{hsam_forward.2} parent=15 // pred_check
          %p212 = pneg %p102
        $region26: #{hsam_forward.2} parent=15 // pred_check_branch
          %214 = sbr.rel (%p212) target = $region28
        $region27: #{hsam_forward.2} parent=15 // pred_region
          %s215 = sand.u32 %s92, 1
          %s216 = scalar_lea.sflag [#allocation8], %s215
          %s217 = sand.u32 %s92, 1
          %s218 = smul.addr %s217, 256
          %s219 = scalar_lea.vmem [#allocation7], %s218
          %s221 = ssub.s32 4096, 4096
          %222 = vsyncadd %s216, %s221
          %s223 = smul.addr %s23, 64
          %s224 = smul.addr %s223, 64
          %s225 = scalar_lea.hbm %s2, %s224
          %s226 = sshll.u32 %s219, 4
          %s227 = int_to_ptr.vmem [resolvable:$true] %s226
          %232 = dma.hbm_to_vmem [thread:$0]  %s225, 4096, %s227, %s216, 256, 256, 16
        $region28: #{hsam_forward.2} parent=15 // pred_fallthru
          _
        // Predicated region
        $region29: #{hsam_forward.2} parent=15 // pred_check
          %p233 = pneg %p128
        $region30: #{hsam_forward.2} parent=15 // pred_check_branch
          %235 = sbr.rel (%p233) target = $region32
        $region31: #{hsam_forward.2} parent=15 // pred_region
          %p236 = scmp.lt.s32.totalorder %s23, 1
          %s237 = scalar_select %p236, %s23, 1
          %s238 = smul.addr %s237, 4
          %s239 = scalar_lea.vmem %s3, %s238
        $region32: #{hsam_forward.2} parent=15 // pred_fallthru
          _
      $region16: #{hsam_forward.2} parent=5 // pred_fallthru
        _
      %p240 = scmp.le.s32.totalorder 1, %s16
      %p241 = scmp.lt.s32.totalorder %s16, 3
      %p242 = pnand %p240, %p241
      %p243 = pneg %p242
      // Predicated region
      $region33: #{hsam_forward.2} parent=5 // pred_check
        _
      $region34: #{hsam_forward.2} parent=5 // pred_check_branch
        %245 = sbr.rel (%p242) target = $region36
      $region35: #{hsam_forward.2} parent=5 // pred_region
        %s246 = ssub.s32 %s16, 1
        %s247 = sand.u32 %s69, 1
        %s248 = scalar_lea.sflag [#allocation6], %s247
        %s249 = sand.u32 %s69, 1
        %s250 = smul.addr %s249, 256
        %s251 = scalar_lea.vmem [#allocation5], %s250
        // Predicated region
        $region37: #{hsam_forward.2} parent=35 // pred_check
          %p252 = pneg %p82
        $region38: #{hsam_forward.2} parent=35 // pred_check_branch
          %254 = sbr.rel (%p252) target = $region40
        $region39: #{hsam_forward.2} parent=35 // pred_region
          %255 = dma.done %s248, 4096
        $region40: #{hsam_forward.2} parent=35 // pred_fallthru
          _
        %s256 = sand.u32 %s95, 1
        %s257 = scalar_lea.sflag [#allocation8], %s256
        %s258 = sand.u32 %s95, 1
        %s259 = smul.addr %s258, 256
        %s260 = scalar_lea.vmem [#allocation7], %s259
        // Predicated region
        $region41: #{hsam_forward.2} parent=35 // pred_check
          %p261 = pneg %p108
        $region42: #{hsam_forward.2} parent=35 // pred_check_branch
          %263 = sbr.rel (%p261) target = $region44
        $region43: #{hsam_forward.2} parent=35 // pred_region
          %264 = dma.done %s257, 4096
        $region44: #{hsam_forward.2} parent=35 // pred_fallthru
          _
        %s265 = smul.u32 8, %s26
        %p266 = scmp.lt.s32.totalorder %s25, 1
        %s267 = scalar_select %p266, %s25, 1
        %p268 = scmp.lt.s32.totalorder %s265, 7
        %s269 = scalar_select %p268, %s265, 7
        %s270 = smul.addr %s267, 8
        %s271 = sadd.s32 %s269, %s270
        %s272 = scalar_lea.vmem %s0, %s271
        %p273 = pneg %p56
        %p274 = pneg %p53
        %s275 = sand.u32 %s69, 1
        %s276 = scalar_lea.sflag [#allocation6], %s275
        %s277 = sand.u32 %s69, 1
        %s278 = smul.addr %s277, 256
        %s279 = scalar_lea.vmem [#allocation5], %s278
        %p280 = pneg %p82
        %p281 = pneg %p79
        %s282 = sand.u32 %s95, 1
        %s283 = scalar_lea.sflag [#allocation8], %s282
        %s284 = sand.u32 %s95, 1
        %s285 = smul.addr %s284, 256
        %s286 = scalar_lea.vmem [#allocation7], %s285
        %p287 = pneg %p108
        %p288 = pneg %p105
        %p289 = scmp.lt.s32.totalorder %s25, 1
        %s290 = scalar_select %p289, %s25, 1
        %s291 = smul.addr %s290, 4
        %s292 = scalar_lea.vmem %s3, %s291
        %p293 = pneg %p134
        %p294 = pneg %p131
        %p295 = pneg %p160
        %p296 = pneg %p157
        %p297 = scmp.lt.s32.totalorder %s25, 1
        %s298 = scalar_select %p297, %s25, 1
        %s299 = smul.addr %s298, 2
        %s300 = scalar_lea.vmem %s4, %s299
        %s301 = smul.u32 8, %s26
        %p302 = scmp.lt.s32.totalorder %s25, 1
        %s303 = scalar_select %p302, %s25, 1
        %p304 = scmp.lt.s32.totalorder %s301, 7
        %s305 = scalar_select %p304, %s301, 7
        %s306 = smul.addr %s303, 8
        %s307 = sadd.s32 %s305, %s306
        %s308 = scalar_lea.vmem %s0, %s307
        %s309 = smul.u32 8, %s26
        %p310 = scmp.lt.s32.totalorder %s25, 1
        %s311 = scalar_select %p310, %s25, 1
        %s312 = smul.addr %s311, 4
        %s313 = scalar_lea.vmem %s3, %s312
        %p314 = scmp.lt.s32.totalorder %s25, 1
        %s315 = scalar_select %p314, %s25, 1
        %s316 = smul.addr %s315, 2
        %s317 = scalar_lea.vmem %s4, %s316
        %p319 = scmp.eq.s32.totalorder %s26, 0
        // Predicated region
        $region45: #{hsam_forward.2} parent=35 // pred_check
          %p320 = pneg %p319
        $region46: #{hsam_forward.2} parent=35 // pred_check_branch
          %322 = sbr.rel (%p320) target = $region48
        $region47: #{hsam_forward.2} parent=35 // pred_region
          %323 = vst [vmem:[#allocation2] sm:$0x3] 0.0
          %324 = vst [vmem:[#allocation3] sm:$0x3] 0.0
          %325 = vst [vmem:[%s317] sm:$0x3] 0.0
        $region48: #{hsam_forward.2} parent=35 // pred_fallthru
          _
        %v326 = vld [vmem:[%s308] sm:$0x1]
        %v327 = vld [vmem:[%s308 + $0x1] sm:$0x1]
        %v328 = vld [vmem:[%s308 + $0x2] sm:$0x1]
        %v329 = vld [vmem:[%s308 + $0x3] sm:$0x1]
        %v330 = vld [vmem:[%s308 + $0x4] sm:$0x1]
        %v331 = vld [vmem:[%s308 + $0x5] sm:$0x1]
        %v332 = vld [vmem:[%s308 + $0x6] sm:$0x1]
        %v333 = vld [vmem:[%s308 + $0x7] sm:$0x1]
        %v334 = vld [vmem:[%s251] sm:$0xff]
        %v335 = vld [vmem:[%s251 + $0x8] sm:$0xff]
        %v336 = vld [vmem:[%s251 + $0x10] sm:$0xff]
        %v337 = vld [vmem:[%s251 + $0x18] sm:$0xff]
        %v338 = vld [vmem:[%s251 + $0x20] sm:$0xff]
        %v339 = vld [vmem:[%s251 + $0x28] sm:$0xff]
        %v340 = vld [vmem:[%s251 + $0x30] sm:$0xff]
        %v341 = vld [vmem:[%s251 + $0x38] sm:$0xff]
        %v342 = vld [vmem:[%s251 + $0x40] sm:$0xff]
        %v343 = vld [vmem:[%s251 + $0x48] sm:$0xff]
        %v344 = vld [vmem:[%s251 + $0x50] sm:$0xff]
        %v345 = vld [vmem:[%s251 + $0x58] sm:$0xff]
        %v346 = vld [vmem:[%s251 + $0x60] sm:$0xff]
        %v347 = vld [vmem:[%s251 + $0x68] sm:$0xff]
        %v348 = vld [vmem:[%s251 + $0x70] sm:$0xff]
        %v349 = vld [vmem:[%s251 + $0x78] sm:$0xff]
        %v350 = vld [vmem:[%s251 + $0x80] sm:$0xff]
        %v351 = vld [vmem:[%s251 + $0x88] sm:$0xff]
        %v352 = vld [vmem:[%s251 + $0x90] sm:$0xff]
        %v353 = vld [vmem:[%s251 + $0x98] sm:$0xff]
        %v354 = vld [vmem:[%s251 + $0xa0] sm:$0xff]
        %v355 = vld [vmem:[%s251 + $0xa8] sm:$0xff]
        %v356 = vld [vmem:[%s251 + $0xb0] sm:$0xff]
        %v357 = vld [vmem:[%s251 + $0xb8] sm:$0xff]
        %v358 = vld [vmem:[%s251 + $0xc0] sm:$0xff]
        %v359 = vld [vmem:[%s251 + $0xc8] sm:$0xff]
        %v360 = vld [vmem:[%s251 + $0xd0] sm:$0xff]
        %v361 = vld [vmem:[%s251 + $0xd8] sm:$0xff]
        %v362 = vld [vmem:[%s251 + $0xe0] sm:$0xff]
        %v363 = vld [vmem:[%s251 + $0xe8] sm:$0xff]
        %v364 = vld [vmem:[%s251 + $0xf0] sm:$0xff]
        %v365 = vld [vmem:[%s251 + $0xf8] sm:$0xff]
        %v366 = vld [vmem:[%s313] sm:$0xf]
        %v368 = vlaneseq
        %v369 = vshrl.u32 %v368, 7
        %v370 = vsub.s32 0, %v369
        %v371 = vrot.slane %v366, %v370
        %v372 = vlaneseq
        %v373 = vshrl.u32 %v372, 7
        %v374 = vsub.s32 1, %v373
        %v375 = vrot.slane %v366, %v374
        %v376 = vlaneseq
        %v377 = vshrl.u32 %v376, 7
        %v378 = vsub.s32 2, %v377
        %v379 = vrot.slane %v366, %v378
        %v380 = vlaneseq
        %v381 = vshrl.u32 %v380, 7
        %v382 = vsub.s32 3, %v381
        %v383 = vrot.slane %v366, %v382
        %v396 = vcombine.low %v326, %v327
        %v397 = vcombine.low %v328, %v329
        %v398 = vcombine.low %v330, %v331
        %v399 = vcombine.low %v332, %v333
        %v401 = vunpack.c.l.s4 1966171168
        %v402 = vunpack.c.0.s8 %v401
        %v403 = vlaneseq
        %v404 = vshrl.u32 %v403, 7
        %v405 = vsub.s32 %v402, %v404
        %v406 = vrot.slane %v396, %v405
        %v408 = vunpack.c.l.s4 1966171168
        %v409 = vunpack.c.0.s8 %v408
        %v410 = vlaneseq
        %v411 = vshrl.u32 %v410, 7
        %v412 = vsub.s32 %v409, %v411
        %v413 = vrot.slane %v397, %v412
        %v415 = vunpack.c.l.s4 1966171168
        %v416 = vunpack.c.0.s8 %v415
        %v417 = vlaneseq
        %v418 = vshrl.u32 %v417, 7
        %v419 = vsub.s32 %v416, %v418
        %v420 = vrot.slane %v398, %v419
        %v422 = vunpack.c.l.s4 1966171168
        %v423 = vunpack.c.0.s8 %v422
        %v424 = vlaneseq
        %v425 = vshrl.u32 %v424, 7
        %v426 = vsub.s32 %v423, %v425
        %v427 = vrot.slane %v399, %v426
        %v428 = vcombine.low %v406, %v413
        %v429 = vcombine.low %v420, %v427
        %v431 = vunpack.c.l.s4 1966171168
        %v432 = vunpack.c.0.s8 %v431
        %v433 = vlaneseq
        %v434 = vshrl.u32 %v433, 7
        %v435 = vsub.s32 %v432, %v434
        %v436 = vrot.slane %v428, %v435
        %v438 = vunpack.c.l.s4 1966171168
        %v439 = vunpack.c.0.s8 %v438
        %v440 = vlaneseq
        %v441 = vshrl.u32 %v440, 7
        %v442 = vsub.s32 %v439, %v441
        %v443 = vrot.slane %v429, %v442
        %v444 = vcombine.low %v436, %v443
        %v478 = vunpack.c.l.b16 %v334
        %v479 = vunpack.c.h.b16 %v334
        %v480 = vunpack.c.l.b16 %v335
        %v481 = vunpack.c.h.b16 %v335
        %v482 = vunpack.c.l.b16 %v336
        %v483 = vunpack.c.h.b16 %v336
        %v484 = vunpack.c.l.b16 %v337
        %v485 = vunpack.c.h.b16 %v337
        %v486 = vunpack.c.l.b16 %v338
        %v487 = vunpack.c.h.b16 %v338
        %v488 = vunpack.c.l.b16 %v339
        %v489 = vunpack.c.h.b16 %v339
        %v490 = vunpack.c.l.b16 %v340
        %v491 = vunpack.c.h.b16 %v340
        %v492 = vunpack.c.l.b16 %v341
        %v493 = vunpack.c.h.b16 %v341
        %v494 = vunpack.c.l.b16 %v342
        %v495 = vunpack.c.h.b16 %v342
        %v496 = vunpack.c.l.b16 %v343
        %v497 = vunpack.c.h.b16 %v343
        %v498 = vunpack.c.l.b16 %v344
        %v499 = vunpack.c.h.b16 %v344
        %v500 = vunpack.c.l.b16 %v345
        %v501 = vunpack.c.h.b16 %v345
        %v502 = vunpack.c.l.b16 %v346
        %v503 = vunpack.c.h.b16 %v346
        %v504 = vunpack.c.l.b16 %v347
        %v505 = vunpack.c.h.b16 %v347
        %v506 = vunpack.c.l.b16 %v348
        %v507 = vunpack.c.h.b16 %v348
        %v508 = vunpack.c.l.b16 %v349
        %v509 = vunpack.c.h.b16 %v349
        %v510 = vunpack.c.l.b16 %v350
        %v511 = vunpack.c.h.b16 %v350
        %v512 = vunpack.c.l.b16 %v351
        %v513 = vunpack.c.h.b16 %v351
        %v514 = vunpack.c.l.b16 %v352
        %v515 = vunpack.c.h.b16 %v352
        %v516 = vunpack.c.l.b16 %v353
        %v517 = vunpack.c.h.b16 %v353
        %v518 = vunpack.c.l.b16 %v354
        %v519 = vunpack.c.h.b16 %v354
        %v520 = vunpack.c.l.b16 %v355
        %v521 = vunpack.c.h.b16 %v355
        %v522 = vunpack.c.l.b16 %v356
        %v523 = vunpack.c.h.b16 %v356
        %v524 = vunpack.c.l.b16 %v357
        %v525 = vunpack.c.h.b16 %v357
        %v526 = vunpack.c.l.b16 %v358
        %v527 = vunpack.c.h.b16 %v358
        %v528 = vunpack.c.l.b16 %v359
        %v529 = vunpack.c.h.b16 %v359
        %v530 = vunpack.c.l.b16 %v360
        %v531 = vunpack.c.h.b16 %v360
        %v532 = vunpack.c.l.b16 %v361
        %v533 = vunpack.c.h.b16 %v361
        %v534 = vunpack.c.l.b16 %v362
        %v535 = vunpack.c.h.b16 %v362
        %v536 = vunpack.c.l.b16 %v363
        %v537 = vunpack.c.h.b16 %v363
        %v538 = vunpack.c.l.b16 %v364
        %v539 = vunpack.c.h.b16 %v364
        %v540 = vunpack.c.l.b16 %v365
        %v541 = vunpack.c.h.b16 %v365
        %v542 = vpack.c.b16 %v482, %v478
        %v543 = vpack.c.b16 %v483, %v479
        %v544 = vpack.c.b16 %v484, %v480
        %v545 = vpack.c.b16 %v485, %v481
        %v546 = vpack.c.b16 %v490, %v486
        %v547 = vpack.c.b16 %v491, %v487
        %v548 = vpack.c.b16 %v492, %v488
        %v549 = vpack.c.b16 %v493, %v489
        %v550 = vpack.c.b16 %v498, %v494
        %v551 = vpack.c.b16 %v499, %v495
        %v552 = vpack.c.b16 %v500, %v496
        %v553 = vpack.c.b16 %v501, %v497
        %v554 = vpack.c.b16 %v506, %v502
        %v555 = vpack.c.b16 %v507, %v503
        %v556 = vpack.c.b16 %v508, %v504
        %v557 = vpack.c.b16 %v509, %v505
        %v558 = vpack.c.b16 %v514, %v510
        %v559 = vpack.c.b16 %v515, %v511
        %v560 = vpack.c.b16 %v516, %v512
        %v561 = vpack.c.b16 %v517, %v513
        %v562 = vpack.c.b16 %v522, %v518
        %v563 = vpack.c.b16 %v523, %v519
        %v564 = vpack.c.b16 %v524, %v520
        %v565 = vpack.c.b16 %v525, %v521
        %v566 = vpack.c.b16 %v530, %v526
        %v567 = vpack.c.b16 %v531, %v527
        %v568 = vpack.c.b16 %v532, %v528
        %v569 = vpack.c.b16 %v533, %v529
        %v570 = vpack.c.b16 %v538, %v534
        %v571 = vpack.c.b16 %v539, %v535
        %v572 = vpack.c.b16 %v540, %v536
        %v573 = vpack.c.b16 %v541, %v537
        %606 = vmatprep.subr.bf16.mxu0 %v543
        %607 = vmatpush1.bf16.msra.mxu0 %v542
        %608 = vmatprep.subr.bf16.mxu0 %v547
        %609 = vmatpush1.bf16.msra.mxu0 %v546
        %610 = vmatprep.subr.bf16.mxu0 %v551
        %611 = vmatpush1.bf16.msra.mxu0 %v550
        %612 = vmatprep.subr.bf16.mxu0 %v555
        %613 = vmatpush1.bf16.msra.mxu0 %v554
        %614 = vmatprep.subr.bf16.mxu0 %v559
        %615 = vmatpush1.bf16.msra.mxu0 %v558
        %616 = vmatprep.subr.bf16.mxu0 %v563
        %617 = vmatpush1.bf16.msra.mxu0 %v562
        %618 = vmatprep.subr.bf16.mxu0 %v567
        %619 = vmatpush1.bf16.msra.mxu0 %v566
        %620 = vmatprep.subr.bf16.mxu0 %v571
        %621 = vmatpush1.bf16.msra.mxu0 %v570
        %622 = vmatprep.subr.bf16.mxu0 0
        %623 = vmatpush1.bf16.msra.mxu0 0
        %624 = vmatprep.subr.bf16.mxu0 0
        %625 = vmatpush1.bf16.msra.mxu0 0
        %626 = vmatprep.subr.bf16.mxu0 0
        %627 = vmatpush1.bf16.msra.mxu0 0
        %628 = vmatprep.subr.bf16.mxu0 0
        %629 = vmatpush1.bf16.msra.mxu0 0
        %630 = vmatprep.subr.bf16.mxu0 0
        %631 = vmatpush1.bf16.msra.mxu0 0
        %632 = vmatprep.subr.bf16.mxu0 0
        %633 = vmatpush1.bf16.msra.mxu0 0
        %634 = vmatprep.subr.bf16.mxu0 0
        %635 = vmatpush1.bf16.msra.mxu0 0
        %636 = vmatprep.subr.bf16.mxu0 0
        %637 = vmatpush1.bf16.msra.mxu0 0
        %638 = vmatprep.mubr.bf16.mxu0 0
        %639 = vmatmul.mubr.bf16.gmra.mrb[0].mxu0 %v444
        %v640 = vpop.f32.mrb[0].mxu0
        %v641 = vadd.f32 %v371, %v640
        %v642 = vpop.f32.mrb[0].mxu0
        %v643 = vadd.f32 %v375, %v642
        %v644 = vpop.f32.mrb[0].mxu0
        %v645 = vadd.f32 %v371, %v644
        %v646 = vpop.f32.mrb[0].mxu0
        %v647 = vadd.f32 %v375, %v646
        %648 = vdwg.mxu0
        %649 = vmatprep.subr.bf16.mxu0 %v545
        %650 = vmatpush1.bf16.msra.mxu0 %v544
        %651 = vmatprep.subr.bf16.mxu0 %v549
        %652 = vmatpush1.bf16.msra.mxu0 %v548
        %653 = vmatprep.subr.bf16.mxu0 %v553
        %654 = vmatpush1.bf16.msra.mxu0 %v552
        %655 = vmatprep.subr.bf16.mxu0 %v557
        %656 = vmatpush1.bf16.msra.mxu0 %v556
        %657 = vmatprep.subr.bf16.mxu0 %v561
        %658 = vmatpush1.bf16.msra.mxu0 %v560
        %659 = vmatprep.subr.bf16.mxu0 %v565
        %660 = vmatpush1.bf16.msra.mxu0 %v564
        %661 = vmatprep.subr.bf16.mxu0 %v569
        %662 = vmatpush1.bf16.msra.mxu0 %v568
        %663 = vmatprep.subr.bf16.mxu0 %v573
        %664 = vmatpush1.bf16.msra.mxu0 %v572
        %665 = vmatprep.subr.bf16.mxu0 0
        %666 = vmatpush1.bf16.msra.mxu0 0
        %667 = vmatprep.subr.bf16.mxu0 0
        %668 = vmatpush1.bf16.msra.mxu0 0
        %669 = vmatprep.subr.bf16.mxu0 0
        %670 = vmatpush1.bf16.msra.mxu0 0
        %671 = vmatprep.subr.bf16.mxu0 0
        %672 = vmatpush1.bf16.msra.mxu0 0
        %673 = vmatprep.subr.bf16.mxu0 0
        %674 = vmatpush1.bf16.msra.mxu0 0
        %675 = vmatprep.subr.bf16.mxu0 0
        %676 = vmatpush1.bf16.msra.mxu0 0
        %677 = vmatprep.subr.bf16.mxu0 0
        %678 = vmatpush1.bf16.msra.mxu0 0
        %679 = vmatprep.subr.bf16.mxu0 0
        %680 = vmatpush1.bf16.msra.mxu0 0
        %681 = vmatprep.mubr.bf16.mxu0 0
        %682 = vmatmul.mubr.bf16.gmra.mrb[0].mxu0 %v444
        %v683 = vpop.f32.mrb[0].mxu0
        %v684 = vadd.f32 %v379, %v683
        %v685 = vpop.f32.mrb[0].mxu0
        %v686 = vadd.f32 %v383, %v685
        %v687 = vpop.f32.mrb[0].mxu0
        %v688 = vadd.f32 %v379, %v687
        %v689 = vpop.f32.mrb[0].mxu0
        %v690 = vadd.f32 %v383, %v689
        %691 = vdwg.mxu0
        %v700 = vcombine.low %v641, %v643
        %v701 = vcombine.high %v641, %v643
        %v702 = vcombine.low %v684, %v686
        %v703 = vcombine.high %v684, %v686
        %v705 = vunpack.c.l.s4 1983009808
        %v706 = vunpack.c.0.s8 %v705
        %v707 = vlaneseq
        %v708 = vshrl.u32 %v707, 7
        %v709 = vsub.s32 %v706, %v708
        %v710 = vrot.slane %v700, %v709
        %v712 = vunpack.c.l.s4 1983009808
        %v713 = vunpack.c.0.s8 %v712
        %v714 = vlaneseq
        %v715 = vshrl.u32 %v714, 7
        %v716 = vsub.s32 %v713, %v715
        %v717 = vrot.slane %v701, %v716
        %v719 = vunpack.c.l.s4 1983009808
        %v720 = vunpack.c.0.s8 %v719
        %v721 = vlaneseq
        %v722 = vshrl.u32 %v721, 7
        %v723 = vsub.s32 %v720, %v722
        %v724 = vrot.slane %v702, %v723
        %v726 = vunpack.c.l.s4 1983009808
        %v727 = vunpack.c.0.s8 %v726
        %v728 = vlaneseq
        %v729 = vshrl.u32 %v728, 7
        %v730 = vsub.s32 %v727, %v729
        %v731 = vrot.slane %v703, %v730
        %v732 = vcombine.low %v710, %v724
        %v733 = vcombine.high %v710, %v724
        %v734 = vcombine.low %v717, %v731
        %v735 = vcombine.high %v717, %v731
        %v736 = vcombine.low %v645, %v647
        %v737 = vcombine.high %v645, %v647
        %v738 = vcombine.low %v688, %v690
        %v739 = vcombine.high %v688, %v690
        %v741 = vunpack.c.l.s4 1983009808
        %v742 = vunpack.c.0.s8 %v741
        %v743 = vlaneseq
        %v744 = vshrl.u32 %v743, 7
        %v745 = vsub.s32 %v742, %v744
        %v746 = vrot.slane %v736, %v745
        %v748 = vunpack.c.l.s4 1983009808
        %v749 = vunpack.c.0.s8 %v748
        %v750 = vlaneseq
        %v751 = vshrl.u32 %v750, 7
        %v752 = vsub.s32 %v749, %v751
        %v753 = vrot.slane %v737, %v752
        %v755 = vunpack.c.l.s4 1983009808
        %v756 = vunpack.c.0.s8 %v755
        %v757 = vlaneseq
        %v758 = vshrl.u32 %v757, 7
        %v759 = vsub.s32 %v756, %v758
        %v760 = vrot.slane %v738, %v759
        %v762 = vunpack.c.l.s4 1983009808
        %v763 = vunpack.c.0.s8 %v762
        %v764 = vlaneseq
        %v765 = vshrl.u32 %v764, 7
        %v766 = vsub.s32 %v763, %v765
        %v767 = vrot.slane %v739, %v766
        %v768 = vcombine.low %v746, %v760
        %v769 = vcombine.high %v746, %v760
        %v770 = vcombine.low %v753, %v767
        %v771 = vcombine.high %v753, %v767
        %780 = vst [vmem:[#allocation4] sm:$0xff] %v732
        %781 = vst [vmem:[#allocation4 + $0x8] sm:$0xff] %v733
        %782 = vst [vmem:[#allocation4 + $0x10] sm:$0xff] %v734
        %783 = vst [vmem:[#allocation4 + $0x18] sm:$0xff] %v735
        %784 = vst [vmem:[#allocation4 + $0x20] sm:$0xff] %v768
        %785 = vst [vmem:[#allocation4 + $0x28] sm:$0xff] %v769
        %786 = vst [vmem:[#allocation4 + $0x30] sm:$0xff] %v770
        %787 = vst [vmem:[#allocation4 + $0x38] sm:$0xff] %v771
        %v788 = vld [vmem:[%s260] sm:$0xff]
        %v789 = vld [vmem:[%s260 + $0x8] sm:$0xff]
        %v790 = vld [vmem:[%s260 + $0x10] sm:$0xff]
        %v791 = vld [vmem:[%s260 + $0x18] sm:$0xff]
        %v792 = vld [vmem:[%s260 + $0x20] sm:$0xff]
        %v793 = vld [vmem:[%s260 + $0x28] sm:$0xff]
        %v794 = vld [vmem:[%s260 + $0x30] sm:$0xff]
        %v795 = vld [vmem:[%s260 + $0x38] sm:$0xff]
        %v796 = vld [vmem:[%s260 + $0x40] sm:$0xff]
        %v797 = vld [vmem:[%s260 + $0x48] sm:$0xff]
        %v798 = vld [vmem:[%s260 + $0x50] sm:$0xff]
        %v799 = vld [vmem:[%s260 + $0x58] sm:$0xff]
        %v800 = vld [vmem:[%s260 + $0x60] sm:$0xff]
        %v801 = vld [vmem:[%s260 + $0x68] sm:$0xff]
        %v802 = vld [vmem:[%s260 + $0x70] sm:$0xff]
        %v803 = vld [vmem:[%s260 + $0x78] sm:$0xff]
        %v804 = vld [vmem:[%s260 + $0x80] sm:$0xff]
        %v805 = vld [vmem:[%s260 + $0x88] sm:$0xff]
        %v806 = vld [vmem:[%s260 + $0x90] sm:$0xff]
        %v807 = vld [vmem:[%s260 + $0x98] sm:$0xff]
        %v808 = vld [vmem:[%s260 + $0xa0] sm:$0xff]
        %v809 = vld [vmem:[%s260 + $0xa8] sm:$0xff]
        %v810 = vld [vmem:[%s260 + $0xb0] sm:$0xff]
        %v811 = vld [vmem:[%s260 + $0xb8] sm:$0xff]
        %v812 = vld [vmem:[%s260 + $0xc0] sm:$0xff]
        %v813 = vld [vmem:[%s260 + $0xc8] sm:$0xff]
        %v814 = vld [vmem:[%s260 + $0xd0] sm:$0xff]
        %v815 = vld [vmem:[%s260 + $0xd8] sm:$0xff]
        %v816 = vld [vmem:[%s260 + $0xe0] sm:$0xff]
        %v817 = vld [vmem:[%s260 + $0xe8] sm:$0xff]
        %v818 = vld [vmem:[%s260 + $0xf0] sm:$0xff]
        %v819 = vld [vmem:[%s260 + $0xf8] sm:$0xff]
        %p820 = scmp.eq.s32.totalorder %s25, 0
        %s821 = scalar_select %p820, 8, 6
        %s822 = smul.u32 %s26, 8
        %v823 = vld [vmem:[#allocation2] sm:$0x3]
        %v824 = vld [vmem:[#allocation3] sm:$0x3]
        %v825 = vld [vmem:[#allocation4] sm:$0xff]
        %v826 = vpack.c.bf16 %v823, %v823
        %v859 = vunpack.c.l.b16 %v788
        %v860 = vunpack.c.h.b16 %v788
        %v861 = vunpack.c.l.b16 %v789
        %v862 = vunpack.c.h.b16 %v789
        %v863 = vunpack.c.l.b16 %v790
        %v864 = vunpack.c.h.b16 %v790
        %v865 = vunpack.c.l.b16 %v791
        %v866 = vunpack.c.h.b16 %v791
        %v867 = vunpack.c.l.b16 %v792
        %v868 = vunpack.c.h.b16 %v792
        %v869 = vunpack.c.l.b16 %v793
        %v870 = vunpack.c.h.b16 %v793
        %v871 = vunpack.c.l.b16 %v794
        %v872 = vunpack.c.h.b16 %v794
        %v873 = vunpack.c.l.b16 %v795
        %v874 = vunpack.c.h.b16 %v795
        %v875 = vunpack.c.l.b16 %v796
        %v876 = vunpack.c.h.b16 %v796
        %v877 = vunpack.c.l.b16 %v797
        %v878 = vunpack.c.h.b16 %v797
        %v879 = vunpack.c.l.b16 %v798
        %v880 = vunpack.c.h.b16 %v798
        %v881 = vunpack.c.l.b16 %v799
        %v882 = vunpack.c.h.b16 %v799
        %v883 = vunpack.c.l.b16 %v800
        %v884 = vunpack.c.h.b16 %v800
        %v885 = vunpack.c.l.b16 %v801
        %v886 = vunpack.c.h.b16 %v801
        %v887 = vunpack.c.l.b16 %v802
        %v888 = vunpack.c.h.b16 %v802
        %v889 = vunpack.c.l.b16 %v803
        %v890 = vunpack.c.h.b16 %v803
        %v891 = vunpack.c.l.b16 %v804
        %v892 = vunpack.c.h.b16 %v804
        %v893 = vunpack.c.l.b16 %v805
        %v894 = vunpack.c.h.b16 %v805
        %v895 = vunpack.c.l.b16 %v806
        %v896 = vunpack.c.h.b16 %v806
        %v897 = vunpack.c.l.b16 %v807
        %v898 = vunpack.c.h.b16 %v807
        %v899 = vunpack.c.l.b16 %v808
        %v900 = vunpack.c.h.b16 %v808
        %v901 = vunpack.c.l.b16 %v809
        %v902 = vunpack.c.h.b16 %v809
        %v903 = vunpack.c.l.b16 %v810
        %v904 = vunpack.c.h.b16 %v810
        %v905 = vunpack.c.l.b16 %v811
        %v906 = vunpack.c.h.b16 %v811
        %v907 = vunpack.c.l.b16 %v812
        %v908 = vunpack.c.h.b16 %v812
        %v909 = vunpack.c.l.b16 %v813
        %v910 = vunpack.c.h.b16 %v813
        %v911 = vunpack.c.l.b16 %v814
        %v912 = vunpack.c.h.b16 %v814
        %v913 = vunpack.c.l.b16 %v815
        %v914 = vunpack.c.h.b16 %v815
        %v915 = vunpack.c.l.b16 %v816
        %v916 = vunpack.c.h.b16 %v816
        %v917 = vunpack.c.l.b16 %v817
        %v918 = vunpack.c.h.b16 %v817
        %v919 = vunpack.c.l.b16 %v818
        %v920 = vunpack.c.h.b16 %v818
        %v921 = vunpack.c.l.b16 %v819
        %v922 = vunpack.c.h.b16 %v819
        %v923 = vpack.c.b16 %v863, %v859
        %v924 = vpack.c.b16 %v864, %v860
        %v925 = vpack.c.b16 %v865, %v861
        %v926 = vpack.c.b16 %v866, %v862
        %v927 = vpack.c.b16 %v871, %v867
        %v928 = vpack.c.b16 %v872, %v868
        %v929 = vpack.c.b16 %v873, %v869
        %v930 = vpack.c.b16 %v874, %v870
        %v931 = vpack.c.b16 %v879, %v875
        %v932 = vpack.c.b16 %v880, %v876
        %v933 = vpack.c.b16 %v881, %v877
        %v934 = vpack.c.b16 %v882, %v878
        %v935 = vpack.c.b16 %v887, %v883
        %v936 = vpack.c.b16 %v888, %v884
        %v937 = vpack.c.b16 %v889, %v885
        %v938 = vpack.c.b16 %v890, %v886
        %v939 = vpack.c.b16 %v895, %v891
        %v940 = vpack.c.b16 %v896, %v892
        %v941 = vpack.c.b16 %v897, %v893
        %v942 = vpack.c.b16 %v898, %v894
        %v943 = vpack.c.b16 %v903, %v899
        %v944 = vpack.c.b16 %v904, %v900
        %v945 = vpack.c.b16 %v905, %v901
        %v946 = vpack.c.b16 %v906, %v902
        %v947 = vpack.c.b16 %v911, %v907
        %v948 = vpack.c.b16 %v912, %v908
        %v949 = vpack.c.b16 %v913, %v909
        %v950 = vpack.c.b16 %v914, %v910
        %v951 = vpack.c.b16 %v919, %v915
        %v952 = vpack.c.b16 %v920, %v916
        %v953 = vpack.c.b16 %v921, %v917
        %v954 = vpack.c.b16 %v922, %v918
        %987 = vmatprep.subr.bf16.mxu0 %v924
        %988 = vmatpush1.bf16.msra.mxu0 %v923
        %989 = vmatprep.subr.bf16.mxu0 %v928
        %990 = vmatpush1.bf16.msra.mxu0 %v927
        %991 = vmatprep.subr.bf16.mxu0 %v932
        %992 = vmatpush1.bf16.msra.mxu0 %v931
        %993 = vmatprep.subr.bf16.mxu0 %v936
        %994 = vmatpush1.bf16.msra.mxu0 %v935
        %995 = vmatprep.subr.bf16.mxu0 %v940
        %996 = vmatpush1.bf16.msra.mxu0 %v939
        %997 = vmatprep.subr.bf16.mxu0 %v944
        %998 = vmatpush1.bf16.msra.mxu0 %v943
        %999 = vmatprep.subr.bf16.mxu0 %v948
        %1000 = vmatpush1.bf16.msra.mxu0 %v947
        %1001 = vmatprep.subr.bf16.mxu0 %v952
        %1002 = vmatpush1.bf16.msra.mxu0 %v951
        %1003 = vmatprep.subr.bf16.mxu0 0
        %1004 = vmatpush1.bf16.msra.mxu0 0
        %1005 = vmatprep.subr.bf16.mxu0 0
        %1006 = vmatpush1.bf16.msra.mxu0 0
        %1007 = vmatprep.subr.bf16.mxu0 0
        %1008 = vmatpush1.bf16.msra.mxu0 0
        %1009 = vmatprep.subr.bf16.mxu0 0
        %1010 = vmatpush1.bf16.msra.mxu0 0
        %1011 = vmatprep.subr.bf16.mxu0 0
        %1012 = vmatpush1.bf16.msra.mxu0 0
        %1013 = vmatprep.subr.bf16.mxu0 0
        %1014 = vmatpush1.bf16.msra.mxu0 0
        %1015 = vmatprep.subr.bf16.mxu0 0
        %1016 = vmatpush1.bf16.msra.mxu0 0
        %1017 = vmatprep.subr.bf16.mxu0 0
        %1018 = vmatpush1.bf16.msra.mxu0 0
        %1019 = vmatprep.mubr.bf16.mxu0 0
        %1020 = vmatmul.mubr.bf16.gmra.mrb[0].mxu0 %v826
        %v1021 = vpop.f32.mrb[0].mxu0
        %v1022 = vadd.f32 0.0, %v1021
        %v1023 = vpop.f32.mrb[0].mxu0
        %v1024 = vadd.f32 0.0, %v1023
        %v1025 = vpop.f32.mrb[0].mxu0
        %v1026 = vpop.f32.mrb[0].mxu0
        %1027 = vdwg.mxu0
        %1028 = vmatprep.subr.bf16.mxu0 %v926
        %1029 = vmatpush1.bf16.msra.mxu0 %v925
        %1030 = vmatprep.subr.bf16.mxu0 %v930
        %1031 = vmatpush1.bf16.msra.mxu0 %v929
        %1032 = vmatprep.subr.bf16.mxu0 %v934
        %1033 = vmatpush1.bf16.msra.mxu0 %v933
        %1034 = vmatprep.subr.bf16.mxu0 %v938
        %1035 = vmatpush1.bf16.msra.mxu0 %v937
        %1036 = vmatprep.subr.bf16.mxu0 %v942
        %1037 = vmatpush1.bf16.msra.mxu0 %v941
        %1038 = vmatprep.subr.bf16.mxu0 %v946
        %1039 = vmatpush1.bf16.msra.mxu0 %v945
        %1040 = vmatprep.subr.bf16.mxu0 %v950
        %1041 = vmatpush1.bf16.msra.mxu0 %v949
        %1042 = vmatprep.subr.bf16.mxu0 %v954
        %1043 = vmatpush1.bf16.msra.mxu0 %v953
        %1044 = vmatprep.subr.bf16.mxu0 0
        %1045 = vmatpush1.bf16.msra.mxu0 0
        %1046 = vmatprep.subr.bf16.mxu0 0
        %1047 = vmatpush1.bf16.msra.mxu0 0
        %1048 = vmatprep.subr.bf16.mxu0 0
        %1049 = vmatpush1.bf16.msra.mxu0 0
        %1050 = vmatprep.subr.bf16.mxu0 0
        %1051 = vmatpush1.bf16.msra.mxu0 0
        %1052 = vmatprep.subr.bf16.mxu0 0
        %1053 = vmatpush1.bf16.msra.mxu0 0
        %1054 = vmatprep.subr.bf16.mxu0 0
        %1055 = vmatpush1.bf16.msra.mxu0 0
        %1056 = vmatprep.subr.bf16.mxu0 0
        %1057 = vmatpush1.bf16.msra.mxu0 0
        %1058 = vmatprep.subr.bf16.mxu0 0
        %1059 = vmatpush1.bf16.msra.mxu0 0
        %1060 = vmatprep.mubr.bf16.mxu0 0
        %1061 = vmatmul.mubr.bf16.gmra.mrb[0].mxu0 %v826
        %v1062 = vpop.f32.mrb[0].mxu0
        %v1063 = vadd.f32 0.0, %v1062
        %v1064 = vpop.f32.mrb[0].mxu0
        %v1065 = vadd.f32 0.0, %v1064
        %v1066 = vpop.f32.mrb[0].mxu0
        %v1067 = vpop.f32.mrb[0].mxu0
        %1068 = vdwg.mxu0
        %v1073 = vcombine.low %v1022, %v1024
        %v1074 = vcombine.low %v1063, %v1065
        %v1076 = vunpack.c.l.s4 1983009808
        %v1077 = vunpack.c.0.s8 %v1076
        %v1078 = vlaneseq
        %v1079 = vshrl.u32 %v1078, 7
        %v1080 = vsub.s32 %v1077, %v1079
        %v1081 = vrot.slane %v1073, %v1080
        %v1083 = vunpack.c.l.s4 1983009808
        %v1084 = vunpack.c.0.s8 %v1083
        %v1085 = vlaneseq
        %v1086 = vshrl.u32 %v1085, 7
        %v1087 = vsub.s32 %v1084, %v1086
        %v1088 = vrot.slane %v1074, %v1087
        %v1089 = vcombine.low %v1081, %v1088
        %v1091 = vadd.f32 %v825, %v1089
        %v1092 = vxor.u32 %v1091, 2147483648
        %v1093 = vmul.f32 %v1092, 1.442695
        %v1094 = vpow.pop %v1093
        %v1095 = vadd.f32 %v1094, 1.0
        %v1096 = vrcp.pop %v1095
        %v1097 = vmul.f32 1.0, %v1096
        %v1099 = vrot.slane %v1091, 2
        %v1101 = vxor.u32 %v1099, 2147483648
        %v1102 = vmul.f32 %v1101, 1.442695
        %v1103 = vpow.pop %v1102
        %v1104 = vadd.f32 %v1103, 1.0
        %v1105 = vrcp.pop %v1104
        %v1106 = vmul.f32 1.0, %v1105
        %v1107 = vrot.slane %v1091, 4
        %v1109 = vtanh.pop %v1107
        %v1110 = vrot.slane %v1091, 6
        %v1112 = vxor.u32 %v1110, 2147483648
        %v1113 = vmul.f32 %v1112, 1.442695
        %v1114 = vpow.pop %v1113
        %v1115 = vadd.f32 %v1114, 1.0
        %v1116 = vrcp.pop %v1115
        %v1117 = vmul.f32 1.0, %v1116
        %v1118 = vmul.f32 %v1106, %v824
        %v1119 = vmul.f32 %v1097, %v1109
        %v1120 = vadd.f32 %v1118, %v1119
        %v1121 = vtanh.pop %v1120
        %v1122 = vmul.f32 %v1117, %v1121
        %p1123 = scmp.lt.s32.totalorder %s822, %s821
        %s1124 = scalar_select %p1123, 1, 0
        %v1125 = vstv %s1124
        %vm1126 = vcmp.eq.s32.totalorder %v1125, 1
        %v1127 = vsel %vm1126, %v1122, 0.0
        %v1128 = vadd.f32 %v1127, 0.0
        %s1129 = scalar_lea.vmem [#allocation4], 8
        %v1130 = vld [vmem:[%s1129] sm:$0xff]
        %v1131 = vpack.c.bf16 %v1122, %v1122
        %1132 = vmatprep.subr.bf16.mxu0 %v924
        %1133 = vmatpush1.bf16.msra.mxu0 %v923
        %1134 = vmatprep.subr.bf16.mxu0 %v928
        %1135 = vmatpush1.bf16.msra.mxu0 %v927
        %1136 = vmatprep.subr.bf16.mxu0 %v932
        %1137 = vmatpush1.bf16.msra.mxu0 %v931
        %1138 = vmatprep.subr.bf16.mxu0 %v936
        %1139 = vmatpush1.bf16.msra.mxu0 %v935
        %1140 = vmatprep.subr.bf16.mxu0 %v940
        %1141 = vmatpush1.bf16.msra.mxu0 %v939
        %1142 = vmatprep.subr.bf16.mxu0 %v944
        %1143 = vmatpush1.bf16.msra.mxu0 %v943
        %1144 = vmatprep.subr.bf16.mxu0 %v948
        %1145 = vmatpush1.bf16.msra.mxu0 %v947
        %1146 = vmatprep.subr.bf16.mxu0 %v952
        %1147 = vmatpush1.bf16.msra.mxu0 %v951
        %1148 = vmatprep.subr.bf16.mxu0 0
        %1149 = vmatpush1.bf16.msra.mxu0 0
        %1150 = vmatprep.subr.bf16.mxu0 0
        %1151 = vmatpush1.bf16.msra.mxu0 0
        %1152 = vmatprep.subr.bf16.mxu0 0
        %1153 = vmatpush1.bf16.msra.mxu0 0
        %1154 = vmatprep.subr.bf16.mxu0 0
        %1155 = vmatpush1.bf16.msra.mxu0 0
        %1156 = vmatprep.subr.bf16.mxu0 0
        %1157 = vmatpush1.bf16.msra.mxu0 0
        %1158 = vmatprep.subr.bf16.mxu0 0
        %1159 = vmatpush1.bf16.msra.mxu0 0
        %1160 = vmatprep.subr.bf16.mxu0 0
        %1161 = vmatpush1.bf16.msra.mxu0 0
        %1162 = vmatprep.subr.bf16.mxu0 0
        %1163 = vmatpush1.bf16.msra.mxu0 0
        %1164 = vmatprep.mubr.bf16.mxu0 0
        %1165 = vmatmul.mubr.bf16.gmra.mrb[0].mxu0 %v1131
        %v1166 = vpop.f32.mrb[0].mxu0
        %v1167 = vadd.f32 0.0, %v1166
        %v1168 = vpop.f32.mrb[0].mxu0
        %v1169 = vadd.f32 0.0, %v1168
        %v1170 = vpop.f32.mrb[0].mxu0
        %v1171 = vpop.f32.mrb[0].mxu0
        %1172 = vdwg.mxu0
        %1173 = vmatprep.subr.bf16.mxu0 %v926
        %1174 = vmatpush1.bf16.msra.mxu0 %v925
        %1175 = vmatprep.subr.bf16.mxu0 %v930
        %1176 = vmatpush1.bf16.msra.mxu0 %v929
        %1177 = vmatprep.subr.bf16.mxu0 %v934
        %1178 = vmatpush1.bf16.msra.mxu0 %v933
        %1179 = vmatprep.subr.bf16.mxu0 %v938
        %1180 = vmatpush1.bf16.msra.mxu0 %v937
        %1181 = vmatprep.subr.bf16.mxu0 %v942
        %1182 = vmatpush1.bf16.msra.mxu0 %v941
        %1183 = vmatprep.subr.bf16.mxu0 %v946
        %1184 = vmatpush1.bf16.msra.mxu0 %v945
        %1185 = vmatprep.subr.bf16.mxu0 %v950
        %1186 = vmatpush1.bf16.msra.mxu0 %v949
        %1187 = vmatprep.subr.bf16.mxu0 %v954
        %1188 = vmatpush1.bf16.msra.mxu0 %v953
        %1189 = vmatprep.subr.bf16.mxu0 0
        %1190 = vmatpush1.bf16.msra.mxu0 0
        %1191 = vmatprep.subr.bf16.mxu0 0
        %1192 = vmatpush1.bf16.msra.mxu0 0
        %1193 = vmatprep.subr.bf16.mxu0 0
        %1194 = vmatpush1.bf16.msra.mxu0 0
        %1195 = vmatprep.subr.bf16.mxu0 0
        %1196 = vmatpush1.bf16.msra.mxu0 0
        %1197 = vmatprep.subr.bf16.mxu0 0
        %1198 = vmatpush1.bf16.msra.mxu0 0
        %1199 = vmatprep.subr.bf16.mxu0 0
        %1200 = vmatpush1.bf16.msra.mxu0 0
        %1201 = vmatprep.subr.bf16.mxu0 0
        %1202 = vmatpush1.bf16.msra.mxu0 0
        %1203 = vmatprep.subr.bf16.mxu0 0
        %1204 = vmatpush1.bf16.msra.mxu0 0
        %1205 = vmatprep.mubr.bf16.mxu0 0
        %1206 = vmatmul.mubr.bf16.gmra.mrb[0].mxu0 %v1131
        %v1207 = vpop.f32.mrb[0].mxu0
        %v1208 = vadd.f32 0.0, %v1207
        %v1209 = vpop.f32.mrb[0].mxu0
        %v1210 = vadd.f32 0.0, %v1209
        %v1211 = vpop.f32.mrb[0].mxu0
        %v1212 = vpop.f32.mrb[0].mxu0
        %1213 = vdwg.mxu0
        %v1218 = vcombine.low %v1167, %v1169
        %v1219 = vcombine.low %v1208, %v1210
        %v1221 = vunpack.c.l.s4 1983009808
        %v1222 = vunpack.c.0.s8 %v1221
        %v1223 = vlaneseq
        %v1224 = vshrl.u32 %v1223, 7
        %v1225 = vsub.s32 %v1222, %v1224
        %v1226 = vrot.slane %v1218, %v1225
        %v1228 = vunpack.c.l.s4 1983009808
        %v1229 = vunpack.c.0.s8 %v1228
        %v1230 = vlaneseq
        %v1231 = vshrl.u32 %v1230, 7
        %v1232 = vsub.s32 %v1229, %v1231
        %v1233 = vrot.slane %v1219, %v1232
        %v1234 = vcombine.low %v1226, %v1233
        %v1236 = vadd.f32 %v1130, %v1234
        %v1237 = vxor.u32 %v1236, 2147483648
        %v1238 = vmul.f32 %v1237, 1.442695
        %v1239 = vpow.pop %v1238
        %v1240 = vadd.f32 %v1239, 1.0
        %v1241 = vrcp.pop %v1240
        %v1242 = vmul.f32 1.0, %v1241
        %v1244 = vrot.slane %v1236, 2
        %v1246 = vxor.u32 %v1244, 2147483648
        %v1247 = vmul.f32 %v1246, 1.442695
        %v1248 = vpow.pop %v1247
        %v1249 = vadd.f32 %v1248, 1.0
        %v1250 = vrcp.pop %v1249
        %v1251 = vmul.f32 1.0, %v1250
        %v1252 = vrot.slane %v1236, 4
        %v1254 = vtanh.pop %v1252
        %v1255 = vrot.slane %v1236, 6
        %v1257 = vxor.u32 %v1255, 2147483648
        %v1258 = vmul.f32 %v1257, 1.442695
        %v1259 = vpow.pop %v1258
        %v1260 = vadd.f32 %v1259, 1.0
        %v1261 = vrcp.pop %v1260
        %v1262 = vmul.f32 1.0, %v1261
        %v1263 = vmul.f32 %v1251, %v1120
        %v1264 = vmul.f32 %v1242, %v1254
        %v1265 = vadd.f32 %v1263, %v1264
        %v1266 = vtanh.pop %v1265
        %v1267 = vmul.f32 %v1262, %v1266
        %s1268 = sadd.s32 %s822, 1
        %p1269 = scmp.lt.s32.totalorder %s1268, %s821
        %s1270 = scalar_select %p1269, 1, 0
        %v1271 = vstv %s1270
        %vm1272 = vcmp.eq.s32.totalorder %v1271, 1
        %v1273 = vsel %vm1272, %v1267, 0.0
        %v1274 = vadd.f32 %v1128, %v1273
        %s1275 = scalar_lea.vmem [#allocation4], 16
        %v1276 = vld [vmem:[%s1275] sm:$0xff]
        %v1277 = vpack.c.bf16 %v1267, %v1267
        %1278 = vmatprep.subr.bf16.mxu0 %v924
        %1279 = vmatpush1.bf16.msra.mxu0 %v923
        %1280 = vmatprep.subr.bf16.mxu0 %v928
        %1281 = vmatpush1.bf16.msra.mxu0 %v927
        %1282 = vmatprep.subr.bf16.mxu0 %v932
        %1283 = vmatpush1.bf16.msra.mxu0 %v931
        %1284 = vmatprep.subr.bf16.mxu0 %v936
        %1285 = vmatpush1.bf16.msra.mxu0 %v935
        %1286 = vmatprep.subr.bf16.mxu0 %v940
        %1287 = vmatpush1.bf16.msra.mxu0 %v939
        %1288 = vmatprep.subr.bf16.mxu0 %v944
        %1289 = vmatpush1.bf16.msra.mxu0 %v943
        %1290 = vmatprep.subr.bf16.mxu0 %v948
        %1291 = vmatpush1.bf16.msra.mxu0 %v947
        %1292 = vmatprep.subr.bf16.mxu0 %v952
        %1293 = vmatpush1.bf16.msra.mxu0 %v951
        %1294 = vmatprep.subr.bf16.mxu0 0
        %1295 = vmatpush1.bf16.msra.mxu0 0
        %1296 = vmatprep.subr.bf16.mxu0 0
        %1297 = vmatpush1.bf16.msra.mxu0 0
        %1298 = vmatprep.subr.bf16.mxu0 0
        %1299 = vmatpush1.bf16.msra.mxu0 0
        %1300 = vmatprep.subr.bf16.mxu0 0
        %1301 = vmatpush1.bf16.msra.mxu0 0
        %1302 = vmatprep.subr.bf16.mxu0 0
        %1303 = vmatpush1.bf16.msra.mxu0 0
        %1304 = vmatprep.subr.bf16.mxu0 0
        %1305 = vmatpush1.bf16.msra.mxu0 0
        %1306 = vmatprep.subr.bf16.mxu0 0
        %1307 = vmatpush1.bf16.msra.mxu0 0
        %1308 = vmatprep.subr.bf16.mxu0 0
        %1309 = vmatpush1.bf16.msra.mxu0 0
        %1310 = vmatprep.mubr.bf16.mxu0 0
        %1311 = vmatmul.mubr.bf16.gmra.mrb[0].mxu0 %v1277
        %v1312 = vpop.f32.mrb[0].mxu0
        %v1313 = vadd.f32 0.0, %v1312
        %v1314 = vpop.f32.mrb[0].mxu0
        %v1315 = vadd.f32 0.0, %v1314
        %v1316 = vpop.f32.mrb[0].mxu0
        %v1317 = vpop.f32.mrb[0].mxu0
        %1318 = vdwg.mxu0
        %1319 = vmatprep.subr.bf16.mxu0 %v926
        %1320 = vmatpush1.bf16.msra.mxu0 %v925
        %1321 = vmatprep.subr.bf16.mxu0 %v930
        %1322 = vmatpush1.bf16.msra.mxu0 %v929
        %1323 = vmatprep.subr.bf16.mxu0 %v934
        %1324 = vmatpush1.bf16.msra.mxu0 %v933
        %1325 = vmatprep.subr.bf16.mxu0 %v938
        %1326 = vmatpush1.bf16.msra.mxu0 %v937
        %1327 = vmatprep.subr.bf16.mxu0 %v942
        %1328 = vmatpush1.bf16.msra.mxu0 %v941
        %1329 = vmatprep.subr.bf16.mxu0 %v946
        %1330 = vmatpush1.bf16.msra.mxu0 %v945
        %1331 = vmatprep.subr.bf16.mxu0 %v950
        %1332 = vmatpush1.bf16.msra.mxu0 %v949
        %1333 = vmatprep.subr.bf16.mxu0 %v954
        %1334 = vmatpush1.bf16.msra.mxu0 %v953
        %1335 = vmatprep.subr.bf16.mxu0 0
        %1336 = vmatpush1.bf16.msra.mxu0 0
        %1337 = vmatprep.subr.bf16.mxu0 0
        %1338 = vmatpush1.bf16.msra.mxu0 0
        %1339 = vmatprep.subr.bf16.mxu0 0
        %1340 = vmatpush1.bf16.msra.mxu0 0
        %1341 = vmatprep.subr.bf16.mxu0 0
        %1342 = vmatpush1.bf16.msra.mxu0 0
        %1343 = vmatprep.subr.bf16.mxu0 0
        %1344 = vmatpush1.bf16.msra.mxu0 0
        %1345 = vmatprep.subr.bf16.mxu0 0
        %1346 = vmatpush1.bf16.msra.mxu0 0
        %1347 = vmatprep.subr.bf16.mxu0 0
        %1348 = vmatpush1.bf16.msra.mxu0 0
        %1349 = vmatprep.subr.bf16.mxu0 0
        %1350 = vmatpush1.bf16.msra.mxu0 0
        %1351 = vmatprep.mubr.bf16.mxu0 0
        %1352 = vmatmul.mubr.bf16.gmra.mrb[0].mxu0 %v1277
        %v1353 = vpop.f32.mrb[0].mxu0
        %v1354 = vadd.f32 0.0, %v1353
        %v1355 = vpop.f32.mrb[0].mxu0
        %v1356 = vadd.f32 0.0, %v1355
        %v1357 = vpop.f32.mrb[0].mxu0
        %v1358 = vpop.f32.mrb[0].mxu0
        %1359 = vdwg.mxu0
        %v1364 = vcombine.low %v1313, %v1315
        %v1365 = vcombine.low %v1354, %v1356
        %v1367 = vunpack.c.l.s4 1983009808
        %v1368 = vunpack.c.0.s8 %v1367
        %v1369 = vlaneseq
        %v1370 = vshrl.u32 %v1369, 7
        %v1371 = vsub.s32 %v1368, %v1370
        %v1372 = vrot.slane %v1364, %v1371
        %v1374 = vunpack.c.l.s4 1983009808
        %v1375 = vunpack.c.0.s8 %v1374
        %v1376 = vlaneseq
        %v1377 = vshrl.u32 %v1376, 7
        %v1378 = vsub.s32 %v1375, %v1377
        %v1379 = vrot.slane %v1365, %v1378
        %v1380 = vcombine.low %v1372, %v1379
        %v1382 = vadd.f32 %v1276, %v1380
        %v1383 = vxor.u32 %v1382, 2147483648
        %v1384 = vmul.f32 %v1383, 1.442695
        %v1385 = vpow.pop %v1384
        %v1386 = vadd.f32 %v1385, 1.0
        %v1387 = vrcp.pop %v1386
        %v1388 = vmul.f32 1.0, %v1387
        %v1390 = vrot.slane %v1382, 2
        %v1392 = vxor.u32 %v1390, 2147483648
        %v1393 = vmul.f32 %v1392, 1.442695
        %v1394 = vpow.pop %v1393
        %v1395 = vadd.f32 %v1394, 1.0
        %v1396 = vrcp.pop %v1395
        %v1397 = vmul.f32 1.0, %v1396
        %v1398 = vrot.slane %v1382, 4
        %v1400 = vtanh.pop %v1398
        %v1401 = vrot.slane %v1382, 6
        %v1403 = vxor.u32 %v1401, 2147483648
        %v1404 = vmul.f32 %v1403, 1.442695
        %v1405 = vpow.pop %v1404
        %v1406 = vadd.f32 %v1405, 1.0
        %v1407 = vrcp.pop %v1406
        %v1408 = vmul.f32 1.0, %v1407
        %v1409 = vmul.f32 %v1397, %v1265
        %v1410 = vmul.f32 %v1388, %v1400
        %v1411 = vadd.f32 %v1409, %v1410
        %v1412 = vtanh.pop %v1411
        %v1413 = vmul.f32 %v1408, %v1412
        %s1414 = sadd.s32 %s822, 2
        %p1415 = scmp.lt.s32.totalorder %s1414, %s821
        %s1416 = scalar_select %p1415, 1, 0
        %v1417 = vstv %s1416
        %vm1418 = vcmp.eq.s32.totalorder %v1417, 1
        %v1419 = vsel %vm1418, %v1413, 0.0
        %v1420 = vadd.f32 %v1274, %v1419
        %s1421 = scalar_lea.vmem [#allocation4], 24
        %v1422 = vld [vmem:[%s1421] sm:$0xff]
        %v1423 = vpack.c.bf16 %v1413, %v1413
        %1424 = vmatprep.subr.bf16.mxu0 %v924
        %1425 = vmatpush1.bf16.msra.mxu0 %v923
        %1426 = vmatprep.subr.bf16.mxu0 %v928
        %1427 = vmatpush1.bf16.msra.mxu0 %v927
        %1428 = vmatprep.subr.bf16.mxu0 %v932
        %1429 = vmatpush1.bf16.msra.mxu0 %v931
        %1430 = vmatprep.subr.bf16.mxu0 %v936
        %1431 = vmatpush1.bf16.msra.mxu0 %v935
        %1432 = vmatprep.subr.bf16.mxu0 %v940
        %1433 = vmatpush1.bf16.msra.mxu0 %v939
        %1434 = vmatprep.subr.bf16.mxu0 %v944
        %1435 = vmatpush1.bf16.msra.mxu0 %v943
        %1436 = vmatprep.subr.bf16.mxu0 %v948
        %1437 = vmatpush1.bf16.msra.mxu0 %v947
        %1438 = vmatprep.subr.bf16.mxu0 %v952
        %1439 = vmatpush1.bf16.msra.mxu0 %v951
        %1440 = vmatprep.subr.bf16.mxu0 0
        %1441 = vmatpush1.bf16.msra.mxu0 0
        %1442 = vmatprep.subr.bf16.mxu0 0
        %1443 = vmatpush1.bf16.msra.mxu0 0
        %1444 = vmatprep.subr.bf16.mxu0 0
        %1445 = vmatpush1.bf16.msra.mxu0 0
        %1446 = vmatprep.subr.bf16.mxu0 0
        %1447 = vmatpush1.bf16.msra.mxu0 0
        %1448 = vmatprep.subr.bf16.mxu0 0
        %1449 = vmatpush1.bf16.msra.mxu0 0
        %1450 = vmatprep.subr.bf16.mxu0 0
        %1451 = vmatpush1.bf16.msra.mxu0 0
        %1452 = vmatprep.subr.bf16.mxu0 0
        %1453 = vmatpush1.bf16.msra.mxu0 0
        %1454 = vmatprep.subr.bf16.mxu0 0
        %1455 = vmatpush1.bf16.msra.mxu0 0
        %1456 = vmatprep.mubr.bf16.mxu0 0
        %1457 = vmatmul.mubr.bf16.gmra.mrb[0].mxu0 %v1423
        %v1458 = vpop.f32.mrb[0].mxu0
        %v1459 = vadd.f32 0.0, %v1458
        %v1460 = vpop.f32.mrb[0].mxu0
        %v1461 = vadd.f32 0.0, %v1460
        %v1462 = vpop.f32.mrb[0].mxu0
        %v1463 = vpop.f32.mrb[0].mxu0
        %1464 = vdwg.mxu0
        %1465 = vmatprep.subr.bf16.mxu0 %v926
        %1466 = vmatpush1.bf16.msra.mxu0 %v925
        %1467 = vmatprep.subr.bf16.mxu0 %v930
        %1468 = vmatpush1.bf16.msra.mxu0 %v929
        %1469 = vmatprep.subr.bf16.mxu0 %v934
        %1470 = vmatpush1.bf16.msra.mxu0 %v933
        %1471 = vmatprep.subr.bf16.mxu0 %v938
        %1472 = vmatpush1.bf16.msra.mxu0 %v937
        %1473 = vmatprep.subr.bf16.mxu0 %v942
        %1474 = vmatpush1.bf16.msra.mxu0 %v941
        %1475 = vmatprep.subr.bf16.mxu0 %v946
        %1476 = vmatpush1.bf16.msra.mxu0 %v945
        %1477 = vmatprep.subr.bf16.mxu0 %v950
        %1478 = vmatpush1.bf16.msra.mxu0 %v949
        %1479 = vmatprep.subr.bf16.mxu0 %v954
        %1480 = vmatpush1.bf16.msra.mxu0 %v953
        %1481 = vmatprep.subr.bf16.mxu0 0
        %1482 = vmatpush1.bf16.msra.mxu0 0
        %1483 = vmatprep.subr.bf16.mxu0 0
        %1484 = vmatpush1.bf16.msra.mxu0 0
        %1485 = vmatprep.subr.bf16.mxu0 0
        %1486 = vmatpush1.bf16.msra.mxu0 0
        %1487 = vmatprep.subr.bf16.mxu0 0
        %1488 = vmatpush1.bf16.msra.mxu0 0
        %1489 = vmatprep.subr.bf16.mxu0 0
        %1490 = vmatpush1.bf16.msra.mxu0 0
        %1491 = vmatprep.subr.bf16.mxu0 0
        %1492 = vmatpush1.bf16.msra.mxu0 0
        %1493 = vmatprep.subr.bf16.mxu0 0
        %1494 = vmatpush1.bf16.msra.mxu0 0
        %1495 = vmatprep.subr.bf16.mxu0 0
        %1496 = vmatpush1.bf16.msra.mxu0 0
        %1497 = vmatprep.mubr.bf16.mxu0 0
        %1498 = vmatmul.mubr.bf16.gmra.mrb[0].mxu0 %v1423
        %v1499 = vpop.f32.mrb[0].mxu0
        %v1500 = vadd.f32 0.0, %v1499
        %v1501 = vpop.f32.mrb[0].mxu0
        %v1502 = vadd.f32 0.0, %v1501
        %v1503 = vpop.f32.mrb[0].mxu0
        %v1504 = vpop.f32.mrb[0].mxu0
        %1505 = vdwg.mxu0
        %v1510 = vcombine.low %v1459, %v1461
        %v1511 = vcombine.low %v1500, %v1502
        %v1513 = vunpack.c.l.s4 1983009808
        %v1514 = vunpack.c.0.s8 %v1513
        %v1515 = vlaneseq
        %v1516 = vshrl.u32 %v1515, 7
        %v1517 = vsub.s32 %v1514, %v1516
        %v1518 = vrot.slane %v1510, %v1517
        %v1520 = vunpack.c.l.s4 1983009808
        %v1521 = vunpack.c.0.s8 %v1520
        %v1522 = vlaneseq
        %v1523 = vshrl.u32 %v1522, 7
        %v1524 = vsub.s32 %v1521, %v1523
        %v1525 = vrot.slane %v1511, %v1524
        %v1526 = vcombine.low %v1518, %v1525
        %v1528 = vadd.f32 %v1422, %v1526
        %v1529 = vxor.u32 %v1528, 2147483648
        %v1530 = vmul.f32 %v1529, 1.442695
        %v1531 = vpow.pop %v1530
        %v1532 = vadd.f32 %v1531, 1.0
        %v1533 = vrcp.pop %v1532
        %v1534 = vmul.f32 1.0, %v1533
        %v1536 = vrot.slane %v1528, 2
        %v1538 = vxor.u32 %v1536, 2147483648
        %v1539 = vmul.f32 %v1538, 1.442695
        %v1540 = vpow.pop %v1539
        %v1541 = vadd.f32 %v1540, 1.0
        %v1542 = vrcp.pop %v1541
        %v1543 = vmul.f32 1.0, %v1542
        %v1544 = vrot.slane %v1528, 4
        %v1546 = vtanh.pop %v1544
        %v1547 = vrot.slane %v1528, 6
        %v1549 = vxor.u32 %v1547, 2147483648
        %v1550 = vmul.f32 %v1549, 1.442695
        %v1551 = vpow.pop %v1550
        %v1552 = vadd.f32 %v1551, 1.0
        %v1553 = vrcp.pop %v1552
        %v1554 = vmul.f32 1.0, %v1553
        %v1555 = vmul.f32 %v1543, %v1411
        %v1556 = vmul.f32 %v1534, %v1546
        %v1557 = vadd.f32 %v1555, %v1556
        %v1558 = vtanh.pop %v1557
        %v1559 = vmul.f32 %v1554, %v1558
        %s1560 = sadd.s32 %s822, 3
        %p1561 = scmp.lt.s32.totalorder %s1560, %s821
        %s1562 = scalar_select %p1561, 1, 0
        %v1563 = vstv %s1562
        %vm1564 = vcmp.eq.s32.totalorder %v1563, 1
        %v1565 = vsel %vm1564, %v1559, 0.0
        %v1566 = vadd.f32 %v1420, %v1565
        %s1567 = scalar_lea.vmem [#allocation4], 32
        %v1568 = vld [vmem:[%s1567] sm:$0xff]
        %v1569 = vpack.c.bf16 %v1559, %v1559
        %1570 = vmatprep.subr.bf16.mxu0 %v924
        %1571 = vmatpush1.bf16.msra.mxu0 %v923
        %1572 = vmatprep.subr.bf16.mxu0 %v928
        %1573 = vmatpush1.bf16.msra.mxu0 %v927
        %1574 = vmatprep.subr.bf16.mxu0 %v932
        %1575 = vmatpush1.bf16.msra.mxu0 %v931
        %1576 = vmatprep.subr.bf16.mxu0 %v936
        %1577 = vmatpush1.bf16.msra.mxu0 %v935
        %1578 = vmatprep.subr.bf16.mxu0 %v940
        %1579 = vmatpush1.bf16.msra.mxu0 %v939
        %1580 = vmatprep.subr.bf16.mxu0 %v944
        %1581 = vmatpush1.bf16.msra.mxu0 %v943
        %1582 = vmatprep.subr.bf16.mxu0 %v948
        %1583 = vmatpush1.bf16.msra.mxu0 %v947
        %1584 = vmatprep.subr.bf16.mxu0 %v952
        %1585 = vmatpush1.bf16.msra.mxu0 %v951
        %1586 = vmatprep.subr.bf16.mxu0 0
        %1587 = vmatpush1.bf16.msra.mxu0 0
        %1588 = vmatprep.subr.bf16.mxu0 0
        %1589 = vmatpush1.bf16.msra.mxu0 0
        %1590 = vmatprep.subr.bf16.mxu0 0
        %1591 = vmatpush1.bf16.msra.mxu0 0
        %1592 = vmatprep.subr.bf16.mxu0 0
        %1593 = vmatpush1.bf16.msra.mxu0 0
        %1594 = vmatprep.subr.bf16.mxu0 0
        %1595 = vmatpush1.bf16.msra.mxu0 0
        %1596 = vmatprep.subr.bf16.mxu0 0
        %1597 = vmatpush1.bf16.msra.mxu0 0
        %1598 = vmatprep.subr.bf16.mxu0 0
        %1599 = vmatpush1.bf16.msra.mxu0 0
        %1600 = vmatprep.subr.bf16.mxu0 0
        %1601 = vmatpush1.bf16.msra.mxu0 0
        %1602 = vmatprep.mubr.bf16.mxu0 0
        %1603 = vmatmul.mubr.bf16.gmra.mrb[0].mxu0 %v1569
        %v1604 = vpop.f32.mrb[0].mxu0
        %v1605 = vadd.f32 0.0, %v1604
        %v1606 = vpop.f32.mrb[0].mxu0
        %v1607 = vadd.f32 0.0, %v1606
        %v1608 = vpop.f32.mrb[0].mxu0
        %v1609 = vpop.f32.mrb[0].mxu0
        %1610 = vdwg.mxu0
        %1611 = vmatprep.subr.bf16.mxu0 %v926
        %1612 = vmatpush1.bf16.msra.mxu0 %v925
        %1613 = vmatprep.subr.bf16.mxu0 %v930
        %1614 = vmatpush1.bf16.msra.mxu0 %v929
        %1615 = vmatprep.subr.bf16.mxu0 %v934
        %1616 = vmatpush1.bf16.msra.mxu0 %v933
        %1617 = vmatprep.subr.bf16.mxu0 %v938
        %1618 = vmatpush1.bf16.msra.mxu0 %v937
        %1619 = vmatprep.subr.bf16.mxu0 %v942
        %1620 = vmatpush1.bf16.msra.mxu0 %v941
        %1621 = vmatprep.subr.bf16.mxu0 %v946
        %1622 = vmatpush1.bf16.msra.mxu0 %v945
        %1623 = vmatprep.subr.bf16.mxu0 %v950
        %1624 = vmatpush1.bf16.msra.mxu0 %v949
        %1625 = vmatprep.subr.bf16.mxu0 %v954
        %1626 = vmatpush1.bf16.msra.mxu0 %v953
        %1627 = vmatprep.subr.bf16.mxu0 0
        %1628 = vmatpush1.bf16.msra.mxu0 0
        %1629 = vmatprep.subr.bf16.mxu0 0
        %1630 = vmatpush1.bf16.msra.mxu0 0
        %1631 = vmatprep.subr.bf16.mxu0 0
        %1632 = vmatpush1.bf16.msra.mxu0 0
        %1633 = vmatprep.subr.bf16.mxu0 0
        %1634 = vmatpush1.bf16.msra.mxu0 0
        %1635 = vmatprep.subr.bf16.mxu0 0
        %1636 = vmatpush1.bf16.msra.mxu0 0
        %1637 = vmatprep.subr.bf16.mxu0 0
        %1638 = vmatpush1.bf16.msra.mxu0 0
        %1639 = vmatprep.subr.bf16.mxu0 0
        %1640 = vmatpush1.bf16.msra.mxu0 0
        %1641 = vmatprep.subr.bf16.mxu0 0
        %1642 = vmatpush1.bf16.msra.mxu0 0
        %1643 = vmatprep.mubr.bf16.mxu0 0
        %1644 = vmatmul.mubr.bf16.gmra.mrb[0].mxu0 %v1569
        %v1645 = vpop.f32.mrb[0].mxu0
        %v1646 = vadd.f32 0.0, %v1645
        %v1647 = vpop.f32.mrb[0].mxu0
        %v1648 = vadd.f32 0.0, %v1647
        %v1649 = vpop.f32.mrb[0].mxu0
        %v1650 = vpop.f32.mrb[0].mxu0
        %1651 = vdwg.mxu0
        %v1656 = vcombine.low %v1605, %v1607
        %v1657 = vcombine.low %v1646, %v1648
        %v1659 = vunpack.c.l.s4 1983009808
        %v1660 = vunpack.c.0.s8 %v1659
        %v1661 = vlaneseq
        %v1662 = vshrl.u32 %v1661, 7
        %v1663 = vsub.s32 %v1660, %v1662
        %v1664 = vrot.slane %v1656, %v1663
        %v1666 = vunpack.c.l.s4 1983009808
        %v1667 = vunpack.c.0.s8 %v1666
        %v1668 = vlaneseq
        %v1669 = vshrl.u32 %v1668, 7
        %v1670 = vsub.s32 %v1667, %v1669
        %v1671 = vrot.slane %v1657, %v1670
        %v1672 = vcombine.low %v1664, %v1671
        %v1674 = vadd.f32 %v1568, %v1672
        %v1675 = vxor.u32 %v1674, 2147483648
        %v1676 = vmul.f32 %v1675, 1.442695
        %v1677 = vpow.pop %v1676
        %v1678 = vadd.f32 %v1677, 1.0
        %v1679 = vrcp.pop %v1678
        %v1680 = vmul.f32 1.0, %v1679
        %v1682 = vrot.slane %v1674, 2
        %v1684 = vxor.u32 %v1682, 2147483648
        %v1685 = vmul.f32 %v1684, 1.442695
        %v1686 = vpow.pop %v1685
        %v1687 = vadd.f32 %v1686, 1.0
        %v1688 = vrcp.pop %v1687
        %v1689 = vmul.f32 1.0, %v1688
        %v1690 = vrot.slane %v1674, 4
        %v1692 = vtanh.pop %v1690
        %v1693 = vrot.slane %v1674, 6
        %v1695 = vxor.u32 %v1693, 2147483648
        %v1696 = vmul.f32 %v1695, 1.442695
        %v1697 = vpow.pop %v1696
        %v1698 = vadd.f32 %v1697, 1.0
        %v1699 = vrcp.pop %v1698
        %v1700 = vmul.f32 1.0, %v1699
        %v1701 = vmul.f32 %v1689, %v1557
        %v1702 = vmul.f32 %v1680, %v1692
        %v1703 = vadd.f32 %v1701, %v1702
        %v1704 = vtanh.pop %v1703
        %v1705 = vmul.f32 %v1700, %v1704
        %s1706 = sadd.s32 %s822, 4
        %p1707 = scmp.lt.s32.totalorder %s1706, %s821
        %s1708 = scalar_select %p1707, 1, 0
        %v1709 = vstv %s1708
        %vm1710 = vcmp.eq.s32.totalorder %v1709, 1
        %v1711 = vsel %vm1710, %v1705, 0.0
        %v1712 = vadd.f32 %v1566, %v1711
        %s1713 = scalar_lea.vmem [#allocation4], 40
        %v1714 = vld [vmem:[%s1713] sm:$0xff]
        %v1715 = vpack.c.bf16 %v1705, %v1705
        %1716 = vmatprep.subr.bf16.mxu0 %v924
        %1717 = vmatpush1.bf16.msra.mxu0 %v923
        %1718 = vmatprep.subr.bf16.mxu0 %v928
        %1719 = vmatpush1.bf16.msra.mxu0 %v927
        %1720 = vmatprep.subr.bf16.mxu0 %v932
        %1721 = vmatpush1.bf16.msra.mxu0 %v931
        %1722 = vmatprep.subr.bf16.mxu0 %v936
        %1723 = vmatpush1.bf16.msra.mxu0 %v935
        %1724 = vmatprep.subr.bf16.mxu0 %v940
        %1725 = vmatpush1.bf16.msra.mxu0 %v939
        %1726 = vmatprep.subr.bf16.mxu0 %v944
        %1727 = vmatpush1.bf16.msra.mxu0 %v943
        %1728 = vmatprep.subr.bf16.mxu0 %v948
        %1729 = vmatpush1.bf16.msra.mxu0 %v947
        %1730 = vmatprep.subr.bf16.mxu0 %v952
        %1731 = vmatpush1.bf16.msra.mxu0 %v951
        %1732 = vmatprep.subr.bf16.mxu0 0
        %1733 = vmatpush1.bf16.msra.mxu0 0
        %1734 = vmatprep.subr.bf16.mxu0 0
        %1735 = vmatpush1.bf16.msra.mxu0 0
        %1736 = vmatprep.subr.bf16.mxu0 0
        %1737 = vmatpush1.bf16.msra.mxu0 0
        %1738 = vmatprep.subr.bf16.mxu0 0
        %1739 = vmatpush1.bf16.msra.mxu0 0
        %1740 = vmatprep.subr.bf16.mxu0 0
        %1741 = vmatpush1.bf16.msra.mxu0 0
        %1742 = vmatprep.subr.bf16.mxu0 0
        %1743 = vmatpush1.bf16.msra.mxu0 0
        %1744 = vmatprep.subr.bf16.mxu0 0
        %1745 = vmatpush1.bf16.msra.mxu0 0
        %1746 = vmatprep.subr.bf16.mxu0 0
        %1747 = vmatpush1.bf16.msra.mxu0 0
        %1748 = vmatprep.mubr.bf16.mxu0 0
        %1749 = vmatmul.mubr.bf16.gmra.mrb[0].mxu0 %v1715
        %v1750 = vpop.f32.mrb[0].mxu0
        %v1751 = vadd.f32 0.0, %v1750
        %v1752 = vpop.f32.mrb[0].mxu0
        %v1753 = vadd.f32 0.0, %v1752
        %v1754 = vpop.f32.mrb[0].mxu0
        %v1755 = vpop.f32.mrb[0].mxu0
        %1756 = vdwg.mxu0
        %1757 = vmatprep.subr.bf16.mxu0 %v926
        %1758 = vmatpush1.bf16.msra.mxu0 %v925
        %1759 = vmatprep.subr.bf16.mxu0 %v930
        %1760 = vmatpush1.bf16.msra.mxu0 %v929
        %1761 = vmatprep.subr.bf16.mxu0 %v934
        %1762 = vmatpush1.bf16.msra.mxu0 %v933
        %1763 = vmatprep.subr.bf16.mxu0 %v938
        %1764 = vmatpush1.bf16.msra.mxu0 %v937
        %1765 = vmatprep.subr.bf16.mxu0 %v942
        %1766 = vmatpush1.bf16.msra.mxu0 %v941
        %1767 = vmatprep.subr.bf16.mxu0 %v946
        %1768 = vmatpush1.bf16.msra.mxu0 %v945
        %1769 = vmatprep.subr.bf16.mxu0 %v950
        %1770 = vmatpush1.bf16.msra.mxu0 %v949
        %1771 = vmatprep.subr.bf16.mxu0 %v954
        %1772 = vmatpush1.bf16.msra.mxu0 %v953
        %1773 = vmatprep.subr.bf16.mxu0 0
        %1774 = vmatpush1.bf16.msra.mxu0 0
        %1775 = vmatprep.subr.bf16.mxu0 0
        %1776 = vmatpush1.bf16.msra.mxu0 0
        %1777 = vmatprep.subr.bf16.mxu0 0
        %1778 = vmatpush1.bf16.msra.mxu0 0
        %1779 = vmatprep.subr.bf16.mxu0 0
        %1780 = vmatpush1.bf16.msra.mxu0 0
        %1781 = vmatprep.subr.bf16.mxu0 0
        %1782 = vmatpush1.bf16.msra.mxu0 0
        %1783 = vmatprep.subr.bf16.mxu0 0
        %1784 = vmatpush1.bf16.msra.mxu0 0
        %1785 = vmatprep.subr.bf16.mxu0 0
        %1786 = vmatpush1.bf16.msra.mxu0 0
        %1787 = vmatprep.subr.bf16.mxu0 0
        %1788 = vmatpush1.bf16.msra.mxu0 0
        %1789 = vmatprep.mubr.bf16.mxu0 0
        %1790 = vmatmul.mubr.bf16.gmra.mrb[0].mxu0 %v1715
        %v1791 = vpop.f32.mrb[0].mxu0
        %v1792 = vadd.f32 0.0, %v1791
        %v1793 = vpop.f32.mrb[0].mxu0
        %v1794 = vadd.f32 0.0, %v1793
        %v1795 = vpop.f32.mrb[0].mxu0
        %v1796 = vpop.f32.mrb[0].mxu0
        %1797 = vdwg.mxu0
        %v1802 = vcombine.low %v1751, %v1753
        %v1803 = vcombine.low %v1792, %v1794
        %v1805 = vunpack.c.l.s4 1983009808
        %v1806 = vunpack.c.0.s8 %v1805
        %v1807 = vlaneseq
        %v1808 = vshrl.u32 %v1807, 7
        %v1809 = vsub.s32 %v1806, %v1808
        %v1810 = vrot.slane %v1802, %v1809
        %v1812 = vunpack.c.l.s4 1983009808
        %v1813 = vunpack.c.0.s8 %v1812
        %v1814 = vlaneseq
        %v1815 = vshrl.u32 %v1814, 7
        %v1816 = vsub.s32 %v1813, %v1815
        %v1817 = vrot.slane %v1803, %v1816
        %v1818 = vcombine.low %v1810, %v1817
        %v1820 = vadd.f32 %v1714, %v1818
        %v1821 = vxor.u32 %v1820, 2147483648
        %v1822 = vmul.f32 %v1821, 1.442695
        %v1823 = vpow.pop %v1822
        %v1824 = vadd.f32 %v1823, 1.0
        %v1825 = vrcp.pop %v1824
        %v1826 = vmul.f32 1.0, %v1825
        %v1828 = vrot.slane %v1820, 2
        %v1830 = vxor.u32 %v1828, 2147483648
        %v1831 = vmul.f32 %v1830, 1.442695
        %v1832 = vpow.pop %v1831
        %v1833 = vadd.f32 %v1832, 1.0
        %v1834 = vrcp.pop %v1833
        %v1835 = vmul.f32 1.0, %v1834
        %v1836 = vrot.slane %v1820, 4
        %v1838 = vtanh.pop %v1836
        %v1839 = vrot.slane %v1820, 6
        %v1841 = vxor.u32 %v1839, 2147483648
        %v1842 = vmul.f32 %v1841, 1.442695
        %v1843 = vpow.pop %v1842
        %v1844 = vadd.f32 %v1843, 1.0
        %v1845 = vrcp.pop %v1844
        %v1846 = vmul.f32 1.0, %v1845
        %v1847 = vmul.f32 %v1835, %v1703
        %v1848 = vmul.f32 %v1826, %v1838
        %v1849 = vadd.f32 %v1847, %v1848
        %v1850 = vtanh.pop %v1849
        %v1851 = vmul.f32 %v1846, %v1850
        %s1852 = sadd.s32 %s822, 5
        %p1853 = scmp.lt.s32.totalorder %s1852, %s821
        %s1854 = scalar_select %p1853, 1, 0
        %v1855 = vstv %s1854
        %vm1856 = vcmp.eq.s32.totalorder %v1855, 1
        %v1857 = vsel %vm1856, %v1851, 0.0
        %v1858 = vadd.f32 %v1712, %v1857
        %s1859 = scalar_lea.vmem [#allocation4], 48
        %v1860 = vld [vmem:[%s1859] sm:$0xff]
        %v1861 = vpack.c.bf16 %v1851, %v1851
        %1862 = vmatprep.subr.bf16.mxu0 %v924
        %1863 = vmatpush1.bf16.msra.mxu0 %v923
        %1864 = vmatprep.subr.bf16.mxu0 %v928
        %1865 = vmatpush1.bf16.msra.mxu0 %v927
        %1866 = vmatprep.subr.bf16.mxu0 %v932
        %1867 = vmatpush1.bf16.msra.mxu0 %v931
        %1868 = vmatprep.subr.bf16.mxu0 %v936
        %1869 = vmatpush1.bf16.msra.mxu0 %v935
        %1870 = vmatprep.subr.bf16.mxu0 %v940
        %1871 = vmatpush1.bf16.msra.mxu0 %v939
        %1872 = vmatprep.subr.bf16.mxu0 %v944
        %1873 = vmatpush1.bf16.msra.mxu0 %v943
        %1874 = vmatprep.subr.bf16.mxu0 %v948
        %1875 = vmatpush1.bf16.msra.mxu0 %v947
        %1876 = vmatprep.subr.bf16.mxu0 %v952
        %1877 = vmatpush1.bf16.msra.mxu0 %v951
        %1878 = vmatprep.subr.bf16.mxu0 0
        %1879 = vmatpush1.bf16.msra.mxu0 0
        %1880 = vmatprep.subr.bf16.mxu0 0
        %1881 = vmatpush1.bf16.msra.mxu0 0
        %1882 = vmatprep.subr.bf16.mxu0 0
        %1883 = vmatpush1.bf16.msra.mxu0 0
        %1884 = vmatprep.subr.bf16.mxu0 0
        %1885 = vmatpush1.bf16.msra.mxu0 0
        %1886 = vmatprep.subr.bf16.mxu0 0
        %1887 = vmatpush1.bf16.msra.mxu0 0
        %1888 = vmatprep.subr.bf16.mxu0 0
        %1889 = vmatpush1.bf16.msra.mxu0 0
        %1890 = vmatprep.subr.bf16.mxu0 0
        %1891 = vmatpush1.bf16.msra.mxu0 0
        %1892 = vmatprep.subr.bf16.mxu0 0
        %1893 = vmatpush1.bf16.msra.mxu0 0
        %1894 = vmatprep.mubr.bf16.mxu0 0
        %1895 = vmatmul.mubr.bf16.gmra.mrb[0].mxu0 %v1861
        %v1896 = vpop.f32.mrb[0].mxu0
        %v1897 = vadd.f32 0.0, %v1896
        %v1898 = vpop.f32.mrb[0].mxu0
        %v1899 = vadd.f32 0.0, %v1898
        %v1900 = vpop.f32.mrb[0].mxu0
        %v1901 = vpop.f32.mrb[0].mxu0
        %1902 = vdwg.mxu0
        %1903 = vmatprep.subr.bf16.mxu0 %v926
        %1904 = vmatpush1.bf16.msra.mxu0 %v925
        %1905 = vmatprep.subr.bf16.mxu0 %v930
        %1906 = vmatpush1.bf16.msra.mxu0 %v929
        %1907 = vmatprep.subr.bf16.mxu0 %v934
        %1908 = vmatpush1.bf16.msra.mxu0 %v933
        %1909 = vmatprep.subr.bf16.mxu0 %v938
        %1910 = vmatpush1.bf16.msra.mxu0 %v937
        %1911 = vmatprep.subr.bf16.mxu0 %v942
        %1912 = vmatpush1.bf16.msra.mxu0 %v941
        %1913 = vmatprep.subr.bf16.mxu0 %v946
        %1914 = vmatpush1.bf16.msra.mxu0 %v945
        %1915 = vmatprep.subr.bf16.mxu0 %v950
        %1916 = vmatpush1.bf16.msra.mxu0 %v949
        %1917 = vmatprep.subr.bf16.mxu0 %v954
        %1918 = vmatpush1.bf16.msra.mxu0 %v953
        %1919 = vmatprep.subr.bf16.mxu0 0
        %1920 = vmatpush1.bf16.msra.mxu0 0
        %1921 = vmatprep.subr.bf16.mxu0 0
        %1922 = vmatpush1.bf16.msra.mxu0 0
        %1923 = vmatprep.subr.bf16.mxu0 0
        %1924 = vmatpush1.bf16.msra.mxu0 0
        %1925 = vmatprep.subr.bf16.mxu0 0
        %1926 = vmatpush1.bf16.msra.mxu0 0
        %1927 = vmatprep.subr.bf16.mxu0 0
        %1928 = vmatpush1.bf16.msra.mxu0 0
        %1929 = vmatprep.subr.bf16.mxu0 0
        %1930 = vmatpush1.bf16.msra.mxu0 0
        %1931 = vmatprep.subr.bf16.mxu0 0
        %1932 = vmatpush1.bf16.msra.mxu0 0
        %1933 = vmatprep.subr.bf16.mxu0 0
        %1934 = vmatpush1.bf16.msra.mxu0 0
        %1935 = vmatprep.mubr.bf16.mxu0 0
        %1936 = vmatmul.mubr.bf16.gmra.mrb[0].mxu0 %v1861
        %v1937 = vpop.f32.mrb[0].mxu0
        %v1938 = vadd.f32 0.0, %v1937
        %v1939 = vpop.f32.mrb[0].mxu0
        %v1940 = vadd.f32 0.0, %v1939
        %v1941 = vpop.f32.mrb[0].mxu0
        %v1942 = vpop.f32.mrb[0].mxu0
        %1943 = vdwg.mxu0
        %v1948 = vcombine.low %v1897, %v1899
        %v1949 = vcombine.low %v1938, %v1940
        %v1951 = vunpack.c.l.s4 1983009808
        %v1952 = vunpack.c.0.s8 %v1951
        %v1953 = vlaneseq
        %v1954 = vshrl.u32 %v1953, 7
        %v1955 = vsub.s32 %v1952, %v1954
        %v1956 = vrot.slane %v1948, %v1955
        %v1958 = vunpack.c.l.s4 1983009808
        %v1959 = vunpack.c.0.s8 %v1958
        %v1960 = vlaneseq
        %v1961 = vshrl.u32 %v1960, 7
        %v1962 = vsub.s32 %v1959, %v1961
        %v1963 = vrot.slane %v1949, %v1962
        %v1964 = vcombine.low %v1956, %v1963
        %v1966 = vadd.f32 %v1860, %v1964
        %v1967 = vxor.u32 %v1966, 2147483648
        %v1968 = vmul.f32 %v1967, 1.442695
        %v1969 = vpow.pop %v1968
        %v1970 = vadd.f32 %v1969, 1.0
        %v1971 = vrcp.pop %v1970
        %v1972 = vmul.f32 1.0, %v1971
        %v1974 = vrot.slane %v1966, 2
        %v1976 = vxor.u32 %v1974, 2147483648
        %v1977 = vmul.f32 %v1976, 1.442695
        %v1978 = vpow.pop %v1977
        %v1979 = vadd.f32 %v1978, 1.0
        %v1980 = vrcp.pop %v1979
        %v1981 = vmul.f32 1.0, %v1980
        %v1982 = vrot.slane %v1966, 4
        %v1984 = vtanh.pop %v1982
        %v1985 = vrot.slane %v1966, 6
        %v1987 = vxor.u32 %v1985, 2147483648
        %v1988 = vmul.f32 %v1987, 1.442695
        %v1989 = vpow.pop %v1988
        %v1990 = vadd.f32 %v1989, 1.0
        %v1991 = vrcp.pop %v1990
        %v1992 = vmul.f32 1.0, %v1991
        %v1993 = vmul.f32 %v1981, %v1849
        %v1994 = vmul.f32 %v1972, %v1984
        %v1995 = vadd.f32 %v1993, %v1994
        %v1996 = vtanh.pop %v1995
        %v1997 = vmul.f32 %v1992, %v1996
        %s1998 = sadd.s32 %s822, 6
        %p1999 = scmp.lt.s32.totalorder %s1998, %s821
        %s2000 = scalar_select %p1999, 1, 0
        %v2001 = vstv %s2000
        %vm2002 = vcmp.eq.s32.totalorder %v2001, 1
        %v2003 = vsel %vm2002, %v1997, 0.0
        %v2004 = vadd.f32 %v1858, %v2003
        %s2005 = scalar_lea.vmem [#allocation4], 56
        %v2006 = vld [vmem:[%s2005] sm:$0xff]
        %v2007 = vpack.c.bf16 %v1997, %v1997
        %2008 = vmatprep.subr.bf16.mxu0 %v924
        %2009 = vmatpush1.bf16.msra.mxu0 %v923
        %2010 = vmatprep.subr.bf16.mxu0 %v928
        %2011 = vmatpush1.bf16.msra.mxu0 %v927
        %2012 = vmatprep.subr.bf16.mxu0 %v932
        %2013 = vmatpush1.bf16.msra.mxu0 %v931
        %2014 = vmatprep.subr.bf16.mxu0 %v936
        %2015 = vmatpush1.bf16.msra.mxu0 %v935
        %2016 = vmatprep.subr.bf16.mxu0 %v940
        %2017 = vmatpush1.bf16.msra.mxu0 %v939
        %2018 = vmatprep.subr.bf16.mxu0 %v944
        %2019 = vmatpush1.bf16.msra.mxu0 %v943
        %2020 = vmatprep.subr.bf16.mxu0 %v948
        %2021 = vmatpush1.bf16.msra.mxu0 %v947
        %2022 = vmatprep.subr.bf16.mxu0 %v952
        %2023 = vmatpush1.bf16.msra.mxu0 %v951
        %2024 = vmatprep.subr.bf16.mxu0 0
        %2025 = vmatpush1.bf16.msra.mxu0 0
        %2026 = vmatprep.subr.bf16.mxu0 0
        %2027 = vmatpush1.bf16.msra.mxu0 0
        %2028 = vmatprep.subr.bf16.mxu0 0
        %2029 = vmatpush1.bf16.msra.mxu0 0
        %2030 = vmatprep.subr.bf16.mxu0 0
        %2031 = vmatpush1.bf16.msra.mxu0 0
        %2032 = vmatprep.subr.bf16.mxu0 0
        %2033 = vmatpush1.bf16.msra.mxu0 0
        %2034 = vmatprep.subr.bf16.mxu0 0
        %2035 = vmatpush1.bf16.msra.mxu0 0
        %2036 = vmatprep.subr.bf16.mxu0 0
        %2037 = vmatpush1.bf16.msra.mxu0 0
        %2038 = vmatprep.subr.bf16.mxu0 0
        %2039 = vmatpush1.bf16.msra.mxu0 0
        %2040 = vmatprep.mubr.bf16.mxu0 0
        %2041 = vmatmul.mubr.bf16.gmra.mrb[0].mxu0 %v2007
        %v2042 = vpop.f32.mrb[0].mxu0
        %v2043 = vadd.f32 0.0, %v2042
        %v2044 = vpop.f32.mrb[0].mxu0
        %v2045 = vadd.f32 0.0, %v2044
        %v2046 = vpop.f32.mrb[0].mxu0
        %v2047 = vpop.f32.mrb[0].mxu0
        %2048 = vdwg.mxu0
        %2049 = vmatprep.subr.bf16.mxu0 %v926
        %2050 = vmatpush1.bf16.msra.mxu0 %v925
        %2051 = vmatprep.subr.bf16.mxu0 %v930
        %2052 = vmatpush1.bf16.msra.mxu0 %v929
        %2053 = vmatprep.subr.bf16.mxu0 %v934
        %2054 = vmatpush1.bf16.msra.mxu0 %v933
        %2055 = vmatprep.subr.bf16.mxu0 %v938
        %2056 = vmatpush1.bf16.msra.mxu0 %v937
        %2057 = vmatprep.subr.bf16.mxu0 %v942
        %2058 = vmatpush1.bf16.msra.mxu0 %v941
        %2059 = vmatprep.subr.bf16.mxu0 %v946
        %2060 = vmatpush1.bf16.msra.mxu0 %v945
        %2061 = vmatprep.subr.bf16.mxu0 %v950
        %2062 = vmatpush1.bf16.msra.mxu0 %v949
        %2063 = vmatprep.subr.bf16.mxu0 %v954
        %2064 = vmatpush1.bf16.msra.mxu0 %v953
        %2065 = vmatprep.subr.bf16.mxu0 0
        %2066 = vmatpush1.bf16.msra.mxu0 0
        %2067 = vmatprep.subr.bf16.mxu0 0
        %2068 = vmatpush1.bf16.msra.mxu0 0
        %2069 = vmatprep.subr.bf16.mxu0 0
        %2070 = vmatpush1.bf16.msra.mxu0 0
        %2071 = vmatprep.subr.bf16.mxu0 0
        %2072 = vmatpush1.bf16.msra.mxu0 0
        %2073 = vmatprep.subr.bf16.mxu0 0
        %2074 = vmatpush1.bf16.msra.mxu0 0
        %2075 = vmatprep.subr.bf16.mxu0 0
        %2076 = vmatpush1.bf16.msra.mxu0 0
        %2077 = vmatprep.subr.bf16.mxu0 0
        %2078 = vmatpush1.bf16.msra.mxu0 0
        %2079 = vmatprep.subr.bf16.mxu0 0
        %2080 = vmatpush1.bf16.msra.mxu0 0
        %2081 = vmatprep.mubr.bf16.mxu0 0
        %2082 = vmatmul.mubr.bf16.gmra.mrb[0].mxu0 %v2007
        %v2083 = vpop.f32.mrb[0].mxu0
        %v2084 = vadd.f32 0.0, %v2083
        %v2085 = vpop.f32.mrb[0].mxu0
        %v2086 = vadd.f32 0.0, %v2085
        %v2087 = vpop.f32.mrb[0].mxu0
        %v2088 = vpop.f32.mrb[0].mxu0
        %2089 = vdwg.mxu0
        %v2094 = vcombine.low %v2043, %v2045
        %v2095 = vcombine.low %v2084, %v2086
        %v2097 = vunpack.c.l.s4 1983009808
        %v2098 = vunpack.c.0.s8 %v2097
        %v2099 = vlaneseq
        %v2100 = vshrl.u32 %v2099, 7
        %v2101 = vsub.s32 %v2098, %v2100
        %v2102 = vrot.slane %v2094, %v2101
        %v2104 = vunpack.c.l.s4 1983009808
        %v2105 = vunpack.c.0.s8 %v2104
        %v2106 = vlaneseq
        %v2107 = vshrl.u32 %v2106, 7
        %v2108 = vsub.s32 %v2105, %v2107
        %v2109 = vrot.slane %v2095, %v2108
        %v2110 = vcombine.low %v2102, %v2109
        %v2112 = vadd.f32 %v2006, %v2110
        %v2113 = vxor.u32 %v2112, 2147483648
        %v2114 = vmul.f32 %v2113, 1.442695
        %v2115 = vpow.pop %v2114
        %v2116 = vadd.f32 %v2115, 1.0
        %v2117 = vrcp.pop %v2116
        %v2118 = vmul.f32 1.0, %v2117
        %v2120 = vrot.slane %v2112, 2
        %v2122 = vxor.u32 %v2120, 2147483648
        %v2123 = vmul.f32 %v2122, 1.442695
        %v2124 = vpow.pop %v2123
        %v2125 = vadd.f32 %v2124, 1.0
        %v2126 = vrcp.pop %v2125
        %v2127 = vmul.f32 1.0, %v2126
        %v2128 = vrot.slane %v2112, 4
        %v2130 = vtanh.pop %v2128
        %v2131 = vrot.slane %v2112, 6
        %v2133 = vxor.u32 %v2131, 2147483648
        %v2134 = vmul.f32 %v2133, 1.442695
        %v2135 = vpow.pop %v2134
        %v2136 = vadd.f32 %v2135, 1.0
        %v2137 = vrcp.pop %v2136
        %v2138 = vmul.f32 1.0, %v2137
        %v2139 = vmul.f32 %v2127, %v1995
        %v2140 = vmul.f32 %v2118, %v2130
        %v2141 = vadd.f32 %v2139, %v2140
        %v2142 = vtanh.pop %v2141
        %v2143 = vmul.f32 %v2138, %v2142
        %s2144 = sadd.s32 %s822, 7
        %p2145 = scmp.lt.s32.totalorder %s2144, %s821
        %s2146 = scalar_select %p2145, 1, 0
        %v2147 = vstv %s2146
        %vm2148 = vcmp.eq.s32.totalorder %v2147, 1
        %v2149 = vsel %vm2148, %v2143, 0.0
        %v2150 = vadd.f32 %v2004, %v2149
        %2151 = vst [vmem:[#allocation2] sm:$0x3] %v2143
        %2152 = vst [vmem:[#allocation3] sm:$0x3] %v2141
        %v2153 = vld [vmem:[%s317] sm:$0x3]
        %v2154 = vadd.f32 %v2153, %v2150
        %2155 = vst [vmem:[%s317] sm:$0x3] %v2154
        // Predicated region
        $region49: #{hsam_forward.2} parent=35 // pred_check
          %p2156 = pneg %p319
        $region50: #{hsam_forward.2} parent=35 // pred_check_branch
          %2158 = sbr.rel (%p2156) target = $region52
        $region51: #{hsam_forward.2} parent=35 // pred_region
          %s2159 = scalar_select %p820, 0.125, 0.16666667
          %v2160 = vld [vmem:[%s317] sm:$0x3]
          %v2161 = vstv %s2159
          %v2162 = vmul.f32 %v2160, %v2161
          %2163 = vst [vmem:[%s317] sm:$0x3] %v2162
        $region52: #{hsam_forward.2} parent=35 // pred_fallthru
          _
        %p2164 = scmp.lt.s32.totalorder %s25, 1
        %s2165 = scalar_select %p2164, %s25, 1
        %s2166 = smul.addr %s2165, 2
        %s2167 = scalar_lea.vmem %s4, %s2166
        // Predicated region
        $region53: #{hsam_forward.2} parent=35 // pred_check
          %p2168 = pneg %p157
        $region54: #{hsam_forward.2} parent=35 // pred_check_branch
          %2170 = sbr.rel (%p2168) target = $region56
        $region55: #{hsam_forward.2} parent=35 // pred_region
          _
        $region56: #{hsam_forward.2} parent=35 // pred_fallthru
          _
      $region36: #{hsam_forward.2} parent=5 // pred_fallthru
        _
      %p2171 = scmp.le.s32.totalorder 2, %s16
      // Predicated region
      $region57: #{hsam_forward.2} parent=5 // pred_check
        %p2172 = pneg %p2171
      $region58: #{hsam_forward.2} parent=5 // pred_check_branch
        %2174 = sbr.rel (%p2172) target = $region60
      $region59: #{hsam_forward.2} parent=5 // pred_region
        %s2175 = ssub.s32 %s16, 2
        // Predicated region
        $region61: #{hsam_forward.2} parent=59 // pred_check
          %p2176 = pneg %p163
        $region62: #{hsam_forward.2} parent=59 // pred_check_branch
          %2178 = sbr.rel (%p2176) target = $region64
        $region63: #{hsam_forward.2} parent=59 // pred_region
          %p2179 = scmp.lt.s32.totalorder %s27, 1
          %s2180 = scalar_select %p2179, %s27, 1
          %s2181 = smul.addr %s2180, 2
          %s2182 = scalar_lea.vmem %s4, %s2181
        $region64: #{hsam_forward.2} parent=59 // pred_fallthru
          _
      $region60: #{hsam_forward.2} parent=5 // pred_fallthru
        _
    $region6: #{hsam_forward.2} parent=1 // loop_footer
      %s20 = sadd.s32 1, %s16
    $region7: #{hsam_forward.2} parent=1 // loop_footer_branch
      %15 = sbr.rel target = $region3
    $region8: #{hsam_forward.2} parent=1 // loop_exit
      _
    %2183 = vsyncpa [#allocation6], 1
    %s2184 = scalar_lea.sflag [#allocation6], 1
    %2185 = vsyncpa %s2184, 1
    %2186 = vsyncpa [#allocation8], 1
    %s2187 = scalar_lea.sflag [#allocation8], 1
    %2188 = vsyncpa %s2187, 1

// kernel: hsam_forward.3
$region0: #{hsam_forward.3}
  #allocation0 [shape = 'u32[]', space=smem, size = 0x4, offset = 0x4, fixed_abs, tag = 'smem constant byte address 0x4 - core index']
  #allocation1 [shape = 'u32[144,128]{1,0:T(1,128)}', space=vmem, size = 0x12000, scoped, tag = 'internal scratch']
  #allocation2 [shape = 'f32[2,128]{1,0:T(2,128)}', space=vmem, size = 0x400, scoped, tag = 'scratch operand']
  #allocation3 [shape = 'f32[2,128]{1,0:T(2,128)}', space=vmem, size = 0x400, scoped, tag = 'scratch operand']
  #allocation4 [shape = 'bf16[8,2,128]{2,1,0:T(2,128)(2,1)}', space=vmem, size = 0x1000, scoped, tag = 'scratch operand']
  %s0 = inlined_call_operand.vmem [shape: bf16[2,256], index: 0, kind: input, shape index: {}]
  %s1 = inlined_call_operand.vmem [shape: bf16[256,512], index: 1, kind: input, shape index: {}]
  %s2 = inlined_call_operand.vmem [shape: bf16[128,512], index: 2, kind: input, shape index: {}]
  %s3 = inlined_call_operand.vmem [shape: f32[1,512], index: 3, kind: input, shape index: {}]
  %s4 = inlined_call_operand.vmem [shape: bf16[128,128], index: 4, kind: input, shape index: {}]
  %s5 = inlined_call_operand.vmem [shape: f32[1,128], index: 5, kind: input, shape index: {}]
  %s6 = inlined_call_operand.vmem [shape: f32[8,2,128], index: 6, kind: output, shape index: {}]
  %s7 = sld [smem:[#allocation0]]
  $region38: #{hsam_forward.3} parent=0
    _
  %s9 = ssub.s32 1, %s7
  %s10 = scalar_select 0, %s9, %s7
  // Predicated region
  $region2: #{hsam_forward.3} parent=0 // pred_check
    _
  $region3: #{hsam_forward.3} parent=0 // pred_check_branch
    %12 = sbr.rel (0) target = $region5
  $region4: #{hsam_forward.3} parent=0 // pred_region
    _
  $region5: #{hsam_forward.3} parent=0 // pred_fallthru
    _
  // Predicated region
  $region6: #{hsam_forward.3} parent=0 // pred_check
    _
  $region7: #{hsam_forward.3} parent=0 // pred_check_branch
    %14 = sbr.rel (0) target = $region9
  $region8: #{hsam_forward.3} parent=0 // pred_region
    _
  $region9: #{hsam_forward.3} parent=0 // pred_fallthru
    _
  // Predicated region
  $region10: #{hsam_forward.3} parent=0 // pred_check
    _
  $region11: #{hsam_forward.3} parent=0 // pred_check_branch
    %16 = sbr.rel (0) target = $region13
  $region12: #{hsam_forward.3} parent=0 // pred_region
    _
  $region13: #{hsam_forward.3} parent=0 // pred_fallthru
    _
  // Predicated region
  $region14: #{hsam_forward.3} parent=0 // pred_check
    _
  $region15: #{hsam_forward.3} parent=0 // pred_check_branch
    %18 = sbr.rel (0) target = $region17
  $region16: #{hsam_forward.3} parent=0 // pred_region
    _
  $region17: #{hsam_forward.3} parent=0 // pred_fallthru
    _
  // Predicated region
  $region18: #{hsam_forward.3} parent=0 // pred_check
    _
  $region19: #{hsam_forward.3} parent=0 // pred_check_branch
    %20 = sbr.rel (0) target = $region21
  $region20: #{hsam_forward.3} parent=0 // pred_region
    _
  $region21: #{hsam_forward.3} parent=0 // pred_fallthru
    _
  // Predicated region
  $region22: #{hsam_forward.3} parent=0 // pred_check
    _
  $region23: #{hsam_forward.3} parent=0 // pred_check_branch
    %22 = sbr.rel (0) target = $region25
  $region24: #{hsam_forward.3} parent=0 // pred_region
    _
  $region25: #{hsam_forward.3} parent=0 // pred_fallthru
    _
  %p24 = scmp.eq.s32.totalorder 0, 0
  // Predicated region
  $region26: #{hsam_forward.3} parent=0 // pred_check
    %p25 = pneg %p24
  $region27: #{hsam_forward.3} parent=0 // pred_check_branch
    %27 = sbr.rel (%p25) target = $region29
  $region28: #{hsam_forward.3} parent=0 // pred_region
    %28 = vst [vmem:[#allocation2] sm:$0x3] 0.0
    %29 = vst [vmem:[#allocation3] sm:$0x3] 0.0
  $region29: #{hsam_forward.3} parent=0 // pred_fallthru
    _
  %v30 = vld [vmem:[%s0] sm:$0x3]
  %v31 = vld [vmem:[%s1] sm:$0xff]
  %v32 = vld [vmem:[%s1 + $0x8] sm:$0xff]
  %v33 = vld [vmem:[%s1 + $0x10] sm:$0xff]
  %v34 = vld [vmem:[%s1 + $0x18] sm:$0xff]
  %v35 = vld [vmem:[%s1 + $0x20] sm:$0xff]
  %v36 = vld [vmem:[%s1 + $0x28] sm:$0xff]
  %v37 = vld [vmem:[%s1 + $0x30] sm:$0xff]
  %v38 = vld [vmem:[%s1 + $0x38] sm:$0xff]
  %v39 = vld [vmem:[%s1 + $0x40] sm:$0xff]
  %v40 = vld [vmem:[%s1 + $0x48] sm:$0xff]
  %v41 = vld [vmem:[%s1 + $0x50] sm:$0xff]
  %v42 = vld [vmem:[%s1 + $0x58] sm:$0xff]
  %v43 = vld [vmem:[%s1 + $0x60] sm:$0xff]
  %v44 = vld [vmem:[%s1 + $0x68] sm:$0xff]
  %v45 = vld [vmem:[%s1 + $0x70] sm:$0xff]
  %v46 = vld [vmem:[%s1 + $0x78] sm:$0xff]
  %v47 = vld [vmem:[%s1 + $0x80] sm:$0xff]
  %v48 = vld [vmem:[%s1 + $0x88] sm:$0xff]
  %v49 = vld [vmem:[%s1 + $0x90] sm:$0xff]
  %v50 = vld [vmem:[%s1 + $0x98] sm:$0xff]
  %v51 = vld [vmem:[%s1 + $0xa0] sm:$0xff]
  %v52 = vld [vmem:[%s1 + $0xa8] sm:$0xff]
  %v53 = vld [vmem:[%s1 + $0xb0] sm:$0xff]
  %v54 = vld [vmem:[%s1 + $0xb8] sm:$0xff]
  %v55 = vld [vmem:[%s1 + $0xc0] sm:$0xff]
  %v56 = vld [vmem:[%s1 + $0xc8] sm:$0xff]
  %v57 = vld [vmem:[%s1 + $0xd0] sm:$0xff]
  %v58 = vld [vmem:[%s1 + $0xd8] sm:$0xff]
  %v59 = vld [vmem:[%s1 + $0xe0] sm:$0xff]
  %v60 = vld [vmem:[%s1 + $0xe8] sm:$0xff]
  %v61 = vld [vmem:[%s1 + $0xf0] sm:$0xff]
  %v62 = vld [vmem:[%s1 + $0xf8] sm:$0xff]
  %v63 = vld [vmem:[%s1 + $0x100] sm:$0xff]
  %v64 = vld [vmem:[%s1 + $0x108] sm:$0xff]
  %v65 = vld [vmem:[%s1 + $0x110] sm:$0xff]
  %v66 = vld [vmem:[%s1 + $0x118] sm:$0xff]
  %v67 = vld [vmem:[%s1 + $0x120] sm:$0xff]
  %v68 = vld [vmem:[%s1 + $0x128] sm:$0xff]
  %v69 = vld [vmem:[%s1 + $0x130] sm:$0xff]
  %v70 = vld [vmem:[%s1 + $0x138] sm:$0xff]
  %v71 = vld [vmem:[%s1 + $0x140] sm:$0xff]
  %v72 = vld [vmem:[%s1 + $0x148] sm:$0xff]
  %v73 = vld [vmem:[%s1 + $0x150] sm:$0xff]
  %v74 = vld [vmem:[%s1 + $0x158] sm:$0xff]
  %v75 = vld [vmem:[%s1 + $0x160] sm:$0xff]
  %v76 = vld [vmem:[%s1 + $0x168] sm:$0xff]
  %v77 = vld [vmem:[%s1 + $0x170] sm:$0xff]
  %v78 = vld [vmem:[%s1 + $0x178] sm:$0xff]
  %v79 = vld [vmem:[%s1 + $0x180] sm:$0xff]
  %v80 = vld [vmem:[%s1 + $0x188] sm:$0xff]
  %v81 = vld [vmem:[%s1 + $0x190] sm:$0xff]
  %v82 = vld [vmem:[%s1 + $0x198] sm:$0xff]
  %v83 = vld [vmem:[%s1 + $0x1a0] sm:$0xff]
  %v84 = vld [vmem:[%s1 + $0x1a8] sm:$0xff]
  %v85 = vld [vmem:[%s1 + $0x1b0] sm:$0xff]
  %v86 = vld [vmem:[%s1 + $0x1b8] sm:$0xff]
  %v87 = vld [vmem:[%s1 + $0x1c0] sm:$0xff]
  %v88 = vld [vmem:[%s1 + $0x1c8] sm:$0xff]
  %v89 = vld [vmem:[%s1 + $0x1d0] sm:$0xff]
  %v90 = vld [vmem:[%s1 + $0x1d8] sm:$0xff]
  %v91 = vld [vmem:[%s1 + $0x1e0] sm:$0xff]
  %v92 = vld [vmem:[%s1 + $0x1e8] sm:$0xff]
  %v93 = vld [vmem:[%s1 + $0x1f0] sm:$0xff]
  %v94 = vld [vmem:[%s1 + $0x1f8] sm:$0xff]
  %v95 = vld [vmem:[%s3] sm:$0xf]
  %v97 = vlaneseq
  %v98 = vshrl.u32 %v97, 7
  %v99 = vsub.s32 0, %v98
  %v100 = vrot.slane %v95, %v99
  %v101 = vlaneseq
  %v102 = vshrl.u32 %v101, 7
  %v103 = vsub.s32 1, %v102
  %v104 = vrot.slane %v95, %v103
  %v105 = vlaneseq
  %v106 = vshrl.u32 %v105, 7
  %v107 = vsub.s32 2, %v106
  %v108 = vrot.slane %v95, %v107
  %v109 = vlaneseq
  %v110 = vshrl.u32 %v109, 7
  %v111 = vsub.s32 3, %v110
  %v112 = vrot.slane %v95, %v111
  %v119 = vunpack.c.l.s4 1966171168
  %v120 = vunpack.c.0.s8 %v119
  %v121 = vlaneseq
  %v122 = vshrl.u32 %v121, 7
  %v123 = vsub.s32 %v120, %v122
  %v124 = vrot.slane %v30, %v123
  %v125 = vcombine.high %v124, %v124
  %v127 = vunpack.c.l.s4 1966171168
  %v128 = vunpack.c.0.s8 %v127
  %v129 = vlaneseq
  %v130 = vshrl.u32 %v129, 7
  %v131 = vsub.s32 %v128, %v130
  %v132 = vrot.slane %v124, %v131
  %v134 = vunpack.c.l.s4 1966171168
  %v135 = vunpack.c.0.s8 %v134
  %v136 = vlaneseq
  %v137 = vshrl.u32 %v136, 7
  %v138 = vsub.s32 %v135, %v137
  %v139 = vrot.slane %v125, %v138
  %v206 = vunpack.c.l.b16 %v31
  %v207 = vunpack.c.h.b16 %v31
  %v208 = vunpack.c.l.b16 %v32
  %v209 = vunpack.c.h.b16 %v32
  %v210 = vunpack.c.l.b16 %v33
  %v211 = vunpack.c.h.b16 %v33
  %v212 = vunpack.c.l.b16 %v34
  %v213 = vunpack.c.h.b16 %v34
  %v214 = vunpack.c.l.b16 %v35
  %v215 = vunpack.c.h.b16 %v35
  %v216 = vunpack.c.l.b16 %v36
  %v217 = vunpack.c.h.b16 %v36
  %v218 = vunpack.c.l.b16 %v37
  %v219 = vunpack.c.h.b16 %v37
  %v220 = vunpack.c.l.b16 %v38
  %v221 = vunpack.c.h.b16 %v38
  %v222 = vunpack.c.l.b16 %v39
  %v223 = vunpack.c.h.b16 %v39
  %v224 = vunpack.c.l.b16 %v40
  %v225 = vunpack.c.h.b16 %v40
  %v226 = vunpack.c.l.b16 %v41
  %v227 = vunpack.c.h.b16 %v41
  %v228 = vunpack.c.l.b16 %v42
  %v229 = vunpack.c.h.b16 %v42
  %v230 = vunpack.c.l.b16 %v43
  %v231 = vunpack.c.h.b16 %v43
  %v232 = vunpack.c.l.b16 %v44
  %v233 = vunpack.c.h.b16 %v44
  %v234 = vunpack.c.l.b16 %v45
  %v235 = vunpack.c.h.b16 %v45
  %v236 = vunpack.c.l.b16 %v46
  %v237 = vunpack.c.h.b16 %v46
  %v238 = vunpack.c.l.b16 %v47
  %v239 = vunpack.c.h.b16 %v47
  %v240 = vunpack.c.l.b16 %v48
  %v241 = vunpack.c.h.b16 %v48
  %v242 = vunpack.c.l.b16 %v49
  %v243 = vunpack.c.h.b16 %v49
  %v244 = vunpack.c.l.b16 %v50
  %v245 = vunpack.c.h.b16 %v50
  %v246 = vunpack.c.l.b16 %v51
  %v247 = vunpack.c.h.b16 %v51
  %v248 = vunpack.c.l.b16 %v52
  %v249 = vunpack.c.h.b16 %v52
  %v250 = vunpack.c.l.b16 %v53
  %v251 = vunpack.c.h.b16 %v53
  %v252 = vunpack.c.l.b16 %v54
  %v253 = vunpack.c.h.b16 %v54
  %v254 = vunpack.c.l.b16 %v55
  %v255 = vunpack.c.h.b16 %v55
  %v256 = vunpack.c.l.b16 %v56
  %v257 = vunpack.c.h.b16 %v56
  %v258 = vunpack.c.l.b16 %v57
  %v259 = vunpack.c.h.b16 %v57
  %v260 = vunpack.c.l.b16 %v58
  %v261 = vunpack.c.h.b16 %v58
  %v262 = vunpack.c.l.b16 %v59
  %v263 = vunpack.c.h.b16 %v59
  %v264 = vunpack.c.l.b16 %v60
  %v265 = vunpack.c.h.b16 %v60
  %v266 = vunpack.c.l.b16 %v61
  %v267 = vunpack.c.h.b16 %v61
  %v268 = vunpack.c.l.b16 %v62
  %v269 = vunpack.c.h.b16 %v62
  %v270 = vunpack.c.l.b16 %v63
  %v271 = vunpack.c.h.b16 %v63
  %v272 = vunpack.c.l.b16 %v64
  %v273 = vunpack.c.h.b16 %v64
  %v274 = vunpack.c.l.b16 %v65
  %v275 = vunpack.c.h.b16 %v65
  %v276 = vunpack.c.l.b16 %v66
  %v277 = vunpack.c.h.b16 %v66
  %v278 = vunpack.c.l.b16 %v67
  %v279 = vunpack.c.h.b16 %v67
  %v280 = vunpack.c.l.b16 %v68
  %v281 = vunpack.c.h.b16 %v68
  %v282 = vunpack.c.l.b16 %v69
  %v283 = vunpack.c.h.b16 %v69
  %v284 = vunpack.c.l.b16 %v70
  %v285 = vunpack.c.h.b16 %v70
  %v286 = vunpack.c.l.b16 %v71
  %v287 = vunpack.c.h.b16 %v71
  %v288 = vunpack.c.l.b16 %v72
  %v289 = vunpack.c.h.b16 %v72
  %v290 = vunpack.c.l.b16 %v73
  %v291 = vunpack.c.h.b16 %v73
  %v292 = vunpack.c.l.b16 %v74
  %v293 = vunpack.c.h.b16 %v74
  %v294 = vunpack.c.l.b16 %v75
  %v295 = vunpack.c.h.b16 %v75
  %v296 = vunpack.c.l.b16 %v76
  %v297 = vunpack.c.h.b16 %v76
  %v298 = vunpack.c.l.b16 %v77
  %v299 = vunpack.c.h.b16 %v77
  %v300 = vunpack.c.l.b16 %v78
  %v301 = vunpack.c.h.b16 %v78
  %v302 = vunpack.c.l.b16 %v79
  %v303 = vunpack.c.h.b16 %v79
  %v304 = vunpack.c.l.b16 %v80
  %v305 = vunpack.c.h.b16 %v80
  %v306 = vunpack.c.l.b16 %v81
  %v307 = vunpack.c.h.b16 %v81
  %v308 = vunpack.c.l.b16 %v82
  %v309 = vunpack.c.h.b16 %v82
  %v310 = vunpack.c.l.b16 %v83
  %v311 = vunpack.c.h.b16 %v83
  %v312 = vunpack.c.l.b16 %v84
  %v313 = vunpack.c.h.b16 %v84
  %v314 = vunpack.c.l.b16 %v85
  %v315 = vunpack.c.h.b16 %v85
  %v316 = vunpack.c.l.b16 %v86
  %v317 = vunpack.c.h.b16 %v86
  %v318 = vunpack.c.l.b16 %v87
  %v319 = vunpack.c.h.b16 %v87
  %v320 = vunpack.c.l.b16 %v88
  %v321 = vunpack.c.h.b16 %v88
  %v322 = vunpack.c.l.b16 %v89
  %v323 = vunpack.c.h.b16 %v89
  %v324 = vunpack.c.l.b16 %v90
  %v325 = vunpack.c.h.b16 %v90
  %v326 = vunpack.c.l.b16 %v91
  %v327 = vunpack.c.h.b16 %v91
  %v328 = vunpack.c.l.b16 %v92
  %v329 = vunpack.c.h.b16 %v92
  %v330 = vunpack.c.l.b16 %v93
  %v331 = vunpack.c.h.b16 %v93
  %v332 = vunpack.c.l.b16 %v94
  %v333 = vunpack.c.h.b16 %v94
  %v334 = vpack.c.b16 %v210, %v206
  %v335 = vpack.c.b16 %v211, %v207
  %v336 = vpack.c.b16 %v212, %v208
  %v337 = vpack.c.b16 %v213, %v209
  %v338 = vpack.c.b16 %v218, %v214
  %v339 = vpack.c.b16 %v219, %v215
  %v340 = vpack.c.b16 %v220, %v216
  %v341 = vpack.c.b16 %v221, %v217
  %v342 = vpack.c.b16 %v226, %v222
  %v343 = vpack.c.b16 %v227, %v223
  %v344 = vpack.c.b16 %v228, %v224
  %v345 = vpack.c.b16 %v229, %v225
  %v346 = vpack.c.b16 %v234, %v230
  %v347 = vpack.c.b16 %v235, %v231
  %v348 = vpack.c.b16 %v236, %v232
  %v349 = vpack.c.b16 %v237, %v233
  %v350 = vpack.c.b16 %v242, %v238
  %v351 = vpack.c.b16 %v243, %v239
  %v352 = vpack.c.b16 %v244, %v240
  %v353 = vpack.c.b16 %v245, %v241
  %v354 = vpack.c.b16 %v250, %v246
  %v355 = vpack.c.b16 %v251, %v247
  %v356 = vpack.c.b16 %v252, %v248
  %v357 = vpack.c.b16 %v253, %v249
  %v358 = vpack.c.b16 %v258, %v254
  %v359 = vpack.c.b16 %v259, %v255
  %v360 = vpack.c.b16 %v260, %v256
  %v361 = vpack.c.b16 %v261, %v257
  %v362 = vpack.c.b16 %v266, %v262
  %v363 = vpack.c.b16 %v267, %v263
  %v364 = vpack.c.b16 %v268, %v264
  %v365 = vpack.c.b16 %v269, %v265
  %v366 = vpack.c.b16 %v274, %v270
  %v367 = vpack.c.b16 %v275, %v271
  %v368 = vpack.c.b16 %v276, %v272
  %v369 = vpack.c.b16 %v277, %v273
  %v370 = vpack.c.b16 %v282, %v278
  %v371 = vpack.c.b16 %v283, %v279
  %v372 = vpack.c.b16 %v284, %v280
  %v373 = vpack.c.b16 %v285, %v281
  %v374 = vpack.c.b16 %v290, %v286
  %v375 = vpack.c.b16 %v291, %v287
  %v376 = vpack.c.b16 %v292, %v288
  %v377 = vpack.c.b16 %v293, %v289
  %v378 = vpack.c.b16 %v298, %v294
  %v379 = vpack.c.b16 %v299, %v295
  %v380 = vpack.c.b16 %v300, %v296
  %v381 = vpack.c.b16 %v301, %v297
  %v382 = vpack.c.b16 %v306, %v302
  %v383 = vpack.c.b16 %v307, %v303
  %v384 = vpack.c.b16 %v308, %v304
  %v385 = vpack.c.b16 %v309, %v305
  %v386 = vpack.c.b16 %v314, %v310
  %v387 = vpack.c.b16 %v315, %v311
  %v388 = vpack.c.b16 %v316, %v312
  %v389 = vpack.c.b16 %v317, %v313
  %v390 = vpack.c.b16 %v322, %v318
  %v391 = vpack.c.b16 %v323, %v319
  %v392 = vpack.c.b16 %v324, %v320
  %v393 = vpack.c.b16 %v325, %v321
  %v394 = vpack.c.b16 %v330, %v326
  %v395 = vpack.c.b16 %v331, %v327
  %v396 = vpack.c.b16 %v332, %v328
  %v397 = vpack.c.b16 %v333, %v329
  %462 = vmatprep.subr.bf16.mxu0 %v335
  %463 = vmatpush1.bf16.msra.mxu0 %v334
  %464 = vmatprep.subr.bf16.mxu0 %v339
  %465 = vmatpush1.bf16.msra.mxu0 %v338
  %466 = vmatprep.subr.bf16.mxu0 %v343
  %467 = vmatpush1.bf16.msra.mxu0 %v342
  %468 = vmatprep.subr.bf16.mxu0 %v347
  %469 = vmatpush1.bf16.msra.mxu0 %v346
  %470 = vmatprep.subr.bf16.mxu0 %v351
  %471 = vmatpush1.bf16.msra.mxu0 %v350
  %472 = vmatprep.subr.bf16.mxu0 %v355
  %473 = vmatpush1.bf16.msra.mxu0 %v354
  %474 = vmatprep.subr.bf16.mxu0 %v359
  %475 = vmatpush1.bf16.msra.mxu0 %v358
  %476 = vmatprep.subr.bf16.mxu0 %v363
  %477 = vmatpush1.bf16.msra.mxu0 %v362
  %478 = vmatprep.subr.bf16.mxu0 %v367
  %479 = vmatpush1.bf16.msra.mxu0 %v366
  %480 = vmatprep.subr.bf16.mxu0 %v371
  %481 = vmatpush1.bf16.msra.mxu0 %v370
  %482 = vmatprep.subr.bf16.mxu0 %v375
  %483 = vmatpush1.bf16.msra.mxu0 %v374
  %484 = vmatprep.subr.bf16.mxu0 %v379
  %485 = vmatpush1.bf16.msra.mxu0 %v378
  %486 = vmatprep.subr.bf16.mxu0 %v383
  %487 = vmatpush1.bf16.msra.mxu0 %v382
  %488 = vmatprep.subr.bf16.mxu0 %v387
  %489 = vmatpush1.bf16.msra.mxu0 %v386
  %490 = vmatprep.subr.bf16.mxu0 %v391
  %491 = vmatpush1.bf16.msra.mxu0 %v390
  %492 = vmatprep.subr.bf16.mxu0 %v395
  %493 = vmatpush1.bf16.msra.mxu0 %v394
  %494 = vmatprep.mubr.bf16.mxu0 %v139
  %495 = vmatmul.mubr.bf16.gmra.mrb[0].mxu0 %v132
  %v496 = vpop.f32.mrb[0].mxu0
  %v497 = vadd.f32 %v100, %v496
  %v498 = vpop.f32.mrb[0].mxu0
  %v499 = vadd.f32 %v104, %v498
  %v500 = vpop.f32.mrb[0].mxu0
  %v501 = vpop.f32.mrb[0].mxu0
  %502 = vdwg.mxu0
  %503 = vmatprep.subr.bf16.mxu0 %v337
  %504 = vmatpush1.bf16.msra.mxu0 %v336
  %505 = vmatprep.subr.bf16.mxu0 %v341
  %506 = vmatpush1.bf16.msra.mxu0 %v340
  %507 = vmatprep.subr.bf16.mxu0 %v345
  %508 = vmatpush1.bf16.msra.mxu0 %v344
  %509 = vmatprep.subr.bf16.mxu0 %v349
  %510 = vmatpush1.bf16.msra.mxu0 %v348
  %511 = vmatprep.subr.bf16.mxu0 %v353
  %512 = vmatpush1.bf16.msra.mxu0 %v352
  %513 = vmatprep.subr.bf16.mxu0 %v357
  %514 = vmatpush1.bf16.msra.mxu0 %v356
  %515 = vmatprep.subr.bf16.mxu0 %v361
  %516 = vmatpush1.bf16.msra.mxu0 %v360
  %517 = vmatprep.subr.bf16.mxu0 %v365
  %518 = vmatpush1.bf16.msra.mxu0 %v364
  %519 = vmatprep.subr.bf16.mxu0 %v369
  %520 = vmatpush1.bf16.msra.mxu0 %v368
  %521 = vmatprep.subr.bf16.mxu0 %v373
  %522 = vmatpush1.bf16.msra.mxu0 %v372
  %523 = vmatprep.subr.bf16.mxu0 %v377
  %524 = vmatpush1.bf16.msra.mxu0 %v376
  %525 = vmatprep.subr.bf16.mxu0 %v381
  %526 = vmatpush1.bf16.msra.mxu0 %v380
  %527 = vmatprep.subr.bf16.mxu0 %v385
  %528 = vmatpush1.bf16.msra.mxu0 %v384
  %529 = vmatprep.subr.bf16.mxu0 %v389
  %530 = vmatpush1.bf16.msra.mxu0 %v388
  %531 = vmatprep.subr.bf16.mxu0 %v393
  %532 = vmatpush1.bf16.msra.mxu0 %v392
  %533 = vmatprep.subr.bf16.mxu0 %v397
  %534 = vmatpush1.bf16.msra.mxu0 %v396
  %535 = vmatprep.mubr.bf16.mxu0 %v139
  %536 = vmatmul.mubr.bf16.gmra.mrb[0].mxu0 %v132
  %v537 = vpop.f32.mrb[0].mxu0
  %v538 = vadd.f32 %v108, %v537
  %v539 = vpop.f32.mrb[0].mxu0
  %v540 = vadd.f32 %v112, %v539
  %v541 = vpop.f32.mrb[0].mxu0
  %v542 = vpop.f32.mrb[0].mxu0
  %543 = vdwg.mxu0
  %v544 = vld [vmem:[%s2] sm:$0xff]
  %v545 = vld [vmem:[%s2 + $0x8] sm:$0xff]
  %v546 = vld [vmem:[%s2 + $0x10] sm:$0xff]
  %v547 = vld [vmem:[%s2 + $0x18] sm:$0xff]
  %v548 = vld [vmem:[%s2 + $0x20] sm:$0xff]
  %v549 = vld [vmem:[%s2 + $0x28] sm:$0xff]
  %v550 = vld [vmem:[%s2 + $0x30] sm:$0xff]
  %v551 = vld [vmem:[%s2 + $0x38] sm:$0xff]
  %v552 = vld [vmem:[%s2 + $0x40] sm:$0xff]
  %v553 = vld [vmem:[%s2 + $0x48] sm:$0xff]
  %v554 = vld [vmem:[%s2 + $0x50] sm:$0xff]
  %v555 = vld [vmem:[%s2 + $0x58] sm:$0xff]
  %v556 = vld [vmem:[%s2 + $0x60] sm:$0xff]
  %v557 = vld [vmem:[%s2 + $0x68] sm:$0xff]
  %v558 = vld [vmem:[%s2 + $0x70] sm:$0xff]
  %v559 = vld [vmem:[%s2 + $0x78] sm:$0xff]
  %v560 = vld [vmem:[%s2 + $0x80] sm:$0xff]
  %v561 = vld [vmem:[%s2 + $0x88] sm:$0xff]
  %v562 = vld [vmem:[%s2 + $0x90] sm:$0xff]
  %v563 = vld [vmem:[%s2 + $0x98] sm:$0xff]
  %v564 = vld [vmem:[%s2 + $0xa0] sm:$0xff]
  %v565 = vld [vmem:[%s2 + $0xa8] sm:$0xff]
  %v566 = vld [vmem:[%s2 + $0xb0] sm:$0xff]
  %v567 = vld [vmem:[%s2 + $0xb8] sm:$0xff]
  %v568 = vld [vmem:[%s2 + $0xc0] sm:$0xff]
  %v569 = vld [vmem:[%s2 + $0xc8] sm:$0xff]
  %v570 = vld [vmem:[%s2 + $0xd0] sm:$0xff]
  %v571 = vld [vmem:[%s2 + $0xd8] sm:$0xff]
  %v572 = vld [vmem:[%s2 + $0xe0] sm:$0xff]
  %v573 = vld [vmem:[%s2 + $0xe8] sm:$0xff]
  %v574 = vld [vmem:[%s2 + $0xf0] sm:$0xff]
  %v575 = vld [vmem:[%s2 + $0xf8] sm:$0xff]
  %v576 = vld [vmem:[#allocation2] sm:$0x3]
  %v577 = vld [vmem:[#allocation3] sm:$0x3]
  %v578 = vpack.c.bf16 %v576, %v576
  %v611 = vunpack.c.l.b16 %v544
  %v612 = vunpack.c.h.b16 %v544
  %v613 = vunpack.c.l.b16 %v545
  %v614 = vunpack.c.h.b16 %v545
  %v615 = vunpack.c.l.b16 %v546
  %v616 = vunpack.c.h.b16 %v546
  %v617 = vunpack.c.l.b16 %v547
  %v618 = vunpack.c.h.b16 %v547
  %v619 = vunpack.c.l.b16 %v548
  %v620 = vunpack.c.h.b16 %v548
  %v621 = vunpack.c.l.b16 %v549
  %v622 = vunpack.c.h.b16 %v549
  %v623 = vunpack.c.l.b16 %v550
  %v624 = vunpack.c.h.b16 %v550
  %v625 = vunpack.c.l.b16 %v551
  %v626 = vunpack.c.h.b16 %v551
  %v627 = vunpack.c.l.b16 %v552
  %v628 = vunpack.c.h.b16 %v552
  %v629 = vunpack.c.l.b16 %v553
  %v630 = vunpack.c.h.b16 %v553
  %v631 = vunpack.c.l.b16 %v554
  %v632 = vunpack.c.h.b16 %v554
  %v633 = vunpack.c.l.b16 %v555
  %v634 = vunpack.c.h.b16 %v555
  %v635 = vunpack.c.l.b16 %v556
  %v636 = vunpack.c.h.b16 %v556
  %v637 = vunpack.c.l.b16 %v557
  %v638 = vunpack.c.h.b16 %v557
  %v639 = vunpack.c.l.b16 %v558
  %v640 = vunpack.c.h.b16 %v558
  %v641 = vunpack.c.l.b16 %v559
  %v642 = vunpack.c.h.b16 %v559
  %v643 = vunpack.c.l.b16 %v560
  %v644 = vunpack.c.h.b16 %v560
  %v645 = vunpack.c.l.b16 %v561
  %v646 = vunpack.c.h.b16 %v561
  %v647 = vunpack.c.l.b16 %v562
  %v648 = vunpack.c.h.b16 %v562
  %v649 = vunpack.c.l.b16 %v563
  %v650 = vunpack.c.h.b16 %v563
  %v651 = vunpack.c.l.b16 %v564
  %v652 = vunpack.c.h.b16 %v564
  %v653 = vunpack.c.l.b16 %v565
  %v654 = vunpack.c.h.b16 %v565
  %v655 = vunpack.c.l.b16 %v566
  %v656 = vunpack.c.h.b16 %v566
  %v657 = vunpack.c.l.b16 %v567
  %v658 = vunpack.c.h.b16 %v567
  %v659 = vunpack.c.l.b16 %v568
  %v660 = vunpack.c.h.b16 %v568
  %v661 = vunpack.c.l.b16 %v569
  %v662 = vunpack.c.h.b16 %v569
  %v663 = vunpack.c.l.b16 %v570
  %v664 = vunpack.c.h.b16 %v570
  %v665 = vunpack.c.l.b16 %v571
  %v666 = vunpack.c.h.b16 %v571
  %v667 = vunpack.c.l.b16 %v572
  %v668 = vunpack.c.h.b16 %v572
  %v669 = vunpack.c.l.b16 %v573
  %v670 = vunpack.c.h.b16 %v573
  %v671 = vunpack.c.l.b16 %v574
  %v672 = vunpack.c.h.b16 %v574
  %v673 = vunpack.c.l.b16 %v575
  %v674 = vunpack.c.h.b16 %v575
  %v675 = vpack.c.b16 %v615, %v611
  %v676 = vpack.c.b16 %v616, %v612
  %v677 = vpack.c.b16 %v617, %v613
  %v678 = vpack.c.b16 %v618, %v614
  %v679 = vpack.c.b16 %v623, %v619
  %v680 = vpack.c.b16 %v624, %v620
  %v681 = vpack.c.b16 %v625, %v621
  %v682 = vpack.c.b16 %v626, %v622
  %v683 = vpack.c.b16 %v631, %v627
  %v684 = vpack.c.b16 %v632, %v628
  %v685 = vpack.c.b16 %v633, %v629
  %v686 = vpack.c.b16 %v634, %v630
  %v687 = vpack.c.b16 %v639, %v635
  %v688 = vpack.c.b16 %v640, %v636
  %v689 = vpack.c.b16 %v641, %v637
  %v690 = vpack.c.b16 %v642, %v638
  %v691 = vpack.c.b16 %v647, %v643
  %v692 = vpack.c.b16 %v648, %v644
  %v693 = vpack.c.b16 %v649, %v645
  %v694 = vpack.c.b16 %v650, %v646
  %v695 = vpack.c.b16 %v655, %v651
  %v696 = vpack.c.b16 %v656, %v652
  %v697 = vpack.c.b16 %v657, %v653
  %v698 = vpack.c.b16 %v658, %v654
  %v699 = vpack.c.b16 %v663, %v659
  %v700 = vpack.c.b16 %v664, %v660
  %v701 = vpack.c.b16 %v665, %v661
  %v702 = vpack.c.b16 %v666, %v662
  %v703 = vpack.c.b16 %v671, %v667
  %v704 = vpack.c.b16 %v672, %v668
  %v705 = vpack.c.b16 %v673, %v669
  %v706 = vpack.c.b16 %v674, %v670
  %739 = vmatprep.subr.bf16.mxu0 %v676
  %740 = vmatpush1.bf16.msra.mxu0 %v675
  %741 = vmatprep.subr.bf16.mxu0 %v680
  %742 = vmatpush1.bf16.msra.mxu0 %v679
  %743 = vmatprep.subr.bf16.mxu0 %v684
  %744 = vmatpush1.bf16.msra.mxu0 %v683
  %745 = vmatprep.subr.bf16.mxu0 %v688
  %746 = vmatpush1.bf16.msra.mxu0 %v687
  %747 = vmatprep.subr.bf16.mxu0 %v692
  %748 = vmatpush1.bf16.msra.mxu0 %v691
  %749 = vmatprep.subr.bf16.mxu0 %v696
  %750 = vmatpush1.bf16.msra.mxu0 %v695
  %751 = vmatprep.subr.bf16.mxu0 %v700
  %752 = vmatpush1.bf16.msra.mxu0 %v699
  %753 = vmatprep.subr.bf16.mxu0 %v704
  %754 = vmatpush1.bf16.msra.mxu0 %v703
  %755 = vmatprep.subr.bf16.mxu0 0
  %756 = vmatpush1.bf16.msra.mxu0 0
  %757 = vmatprep.subr.bf16.mxu0 0
  %758 = vmatpush1.bf16.msra.mxu0 0
  %759 = vmatprep.subr.bf16.mxu0 0
  %760 = vmatpush1.bf16.msra.mxu0 0
  %761 = vmatprep.subr.bf16.mxu0 0
  %762 = vmatpush1.bf16.msra.mxu0 0
  %763 = vmatprep.subr.bf16.mxu0 0
  %764 = vmatpush1.bf16.msra.mxu0 0
  %765 = vmatprep.subr.bf16.mxu0 0
  %766 = vmatpush1.bf16.msra.mxu0 0
  %767 = vmatprep.subr.bf16.mxu0 0
  %768 = vmatpush1.bf16.msra.mxu0 0
  %769 = vmatprep.subr.bf16.mxu0 0
  %770 = vmatpush1.bf16.msra.mxu0 0
  %771 = vmatprep.mubr.bf16.mxu0 0
  %772 = vmatmul.mubr.bf16.gmra.mrb[0].mxu0 %v578
  %v773 = vpop.f32.mrb[0].mxu0
  %v774 = vadd.f32 0.0, %v773
  %v775 = vpop.f32.mrb[0].mxu0
  %v776 = vadd.f32 0.0, %v775
  %v777 = vpop.f32.mrb[0].mxu0
  %v778 = vpop.f32.mrb[0].mxu0
  %779 = vdwg.mxu0
  %780 = vmatprep.subr.bf16.mxu0 %v678
  %781 = vmatpush1.bf16.msra.mxu0 %v677
  %782 = vmatprep.subr.bf16.mxu0 %v682
  %783 = vmatpush1.bf16.msra.mxu0 %v681
  %784 = vmatprep.subr.bf16.mxu0 %v686
  %785 = vmatpush1.bf16.msra.mxu0 %v685
  %786 = vmatprep.subr.bf16.mxu0 %v690
  %787 = vmatpush1.bf16.msra.mxu0 %v689
  %788 = vmatprep.subr.bf16.mxu0 %v694
  %789 = vmatpush1.bf16.msra.mxu0 %v693
  %790 = vmatprep.subr.bf16.mxu0 %v698
  %791 = vmatpush1.bf16.msra.mxu0 %v697
  %792 = vmatprep.subr.bf16.mxu0 %v702
  %793 = vmatpush1.bf16.msra.mxu0 %v701
  %794 = vmatprep.subr.bf16.mxu0 %v706
  %795 = vmatpush1.bf16.msra.mxu0 %v705
  %796 = vmatprep.subr.bf16.mxu0 0
  %797 = vmatpush1.bf16.msra.mxu0 0
  %798 = vmatprep.subr.bf16.mxu0 0
  %799 = vmatpush1.bf16.msra.mxu0 0
  %800 = vmatprep.subr.bf16.mxu0 0
  %801 = vmatpush1.bf16.msra.mxu0 0
  %802 = vmatprep.subr.bf16.mxu0 0
  %803 = vmatpush1.bf16.msra.mxu0 0
  %804 = vmatprep.subr.bf16.mxu0 0
  %805 = vmatpush1.bf16.msra.mxu0 0
  %806 = vmatprep.subr.bf16.mxu0 0
  %807 = vmatpush1.bf16.msra.mxu0 0
  %808 = vmatprep.subr.bf16.mxu0 0
  %809 = vmatpush1.bf16.msra.mxu0 0
  %810 = vmatprep.subr.bf16.mxu0 0
  %811 = vmatpush1.bf16.msra.mxu0 0
  %812 = vmatprep.mubr.bf16.mxu0 0
  %813 = vmatmul.mubr.bf16.gmra.mrb[0].mxu0 %v578
  %v814 = vpop.f32.mrb[0].mxu0
  %v815 = vadd.f32 0.0, %v814
  %v816 = vpop.f32.mrb[0].mxu0
  %v817 = vadd.f32 0.0, %v816
  %v818 = vpop.f32.mrb[0].mxu0
  %v819 = vpop.f32.mrb[0].mxu0
  %820 = vdwg.mxu0
  %v821 = vadd.f32 %v497, %v774
  %v822 = vadd.f32 %v499, %v776
  %v823 = vadd.f32 %v538, %v815
  %v824 = vadd.f32 %v540, %v817
  %v825 = vxor.u32 %v821, 2147483648
  %v826 = vmul.f32 %v825, 1.442695
  %v827 = vpow.pop %v826
  %v828 = vadd.f32 %v827, 1.0
  %v829 = vrcp.pop %v828
  %v830 = vmul.f32 1.0, %v829
  %v831 = vxor.u32 %v822, 2147483648
  %v832 = vmul.f32 %v831, 1.442695
  %v833 = vpow.pop %v832
  %v834 = vadd.f32 %v833, 1.0
  %v835 = vrcp.pop %v834
  %v836 = vmul.f32 1.0, %v835
  %v837 = vtanh.pop %v823
  %v838 = vxor.u32 %v824, 2147483648
  %v839 = vmul.f32 %v838, 1.442695
  %v840 = vpow.pop %v839
  %v841 = vadd.f32 %v840, 1.0
  %v842 = vrcp.pop %v841
  %v843 = vmul.f32 1.0, %v842
  %v844 = vmul.f32 %v836, %v577
  %v845 = vmul.f32 %v830, %v837
  %v846 = vadd.f32 %v844, %v845
  %v847 = vtanh.pop %v846
  %v848 = vmul.f32 %v843, %v847
  %v849 = vpack.c.bf16 %v848, %v848
  %850 = vst [vmem:[#allocation4] sm:$0x1] %v849
  %851 = vmatprep.subr.bf16.mxu0 %v676
  %852 = vmatpush1.bf16.msra.mxu0 %v675
  %853 = vmatprep.subr.bf16.mxu0 %v680
  %854 = vmatpush1.bf16.msra.mxu0 %v679
  %855 = vmatprep.subr.bf16.mxu0 %v684
  %856 = vmatpush1.bf16.msra.mxu0 %v683
  %857 = vmatprep.subr.bf16.mxu0 %v688
  %858 = vmatpush1.bf16.msra.mxu0 %v687
  %859 = vmatprep.subr.bf16.mxu0 %v692
  %860 = vmatpush1.bf16.msra.mxu0 %v691
  %861 = vmatprep.subr.bf16.mxu0 %v696
  %862 = vmatpush1.bf16.msra.mxu0 %v695
  %863 = vmatprep.subr.bf16.mxu0 %v700
  %864 = vmatpush1.bf16.msra.mxu0 %v699
  %865 = vmatprep.subr.bf16.mxu0 %v704
  %866 = vmatpush1.bf16.msra.mxu0 %v703
  %867 = vmatprep.subr.bf16.mxu0 0
  %868 = vmatpush1.bf16.msra.mxu0 0
  %869 = vmatprep.subr.bf16.mxu0 0
  %870 = vmatpush1.bf16.msra.mxu0 0
  %871 = vmatprep.subr.bf16.mxu0 0
  %872 = vmatpush1.bf16.msra.mxu0 0
  %873 = vmatprep.subr.bf16.mxu0 0
  %874 = vmatpush1.bf16.msra.mxu0 0
  %875 = vmatprep.subr.bf16.mxu0 0
  %876 = vmatpush1.bf16.msra.mxu0 0
  %877 = vmatprep.subr.bf16.mxu0 0
  %878 = vmatpush1.bf16.msra.mxu0 0
  %879 = vmatprep.subr.bf16.mxu0 0
  %880 = vmatpush1.bf16.msra.mxu0 0
  %881 = vmatprep.subr.bf16.mxu0 0
  %882 = vmatpush1.bf16.msra.mxu0 0
  %883 = vmatprep.mubr.bf16.mxu0 0
  %884 = vmatmul.mubr.bf16.gmra.mrb[0].mxu0 %v849
  %v885 = vpop.f32.mrb[0].mxu0
  %v886 = vadd.f32 0.0, %v885
  %v887 = vpop.f32.mrb[0].mxu0
  %v888 = vadd.f32 0.0, %v887
  %v889 = vpop.f32.mrb[0].mxu0
  %v890 = vpop.f32.mrb[0].mxu0
  %891 = vdwg.mxu0
  %892 = vmatprep.subr.bf16.mxu0 %v678
  %893 = vmatpush1.bf16.msra.mxu0 %v677
  %894 = vmatprep.subr.bf16.mxu0 %v682
  %895 = vmatpush1.bf16.msra.mxu0 %v681
  %896 = vmatprep.subr.bf16.mxu0 %v686
  %897 = vmatpush1.bf16.msra.mxu0 %v685
  %898 = vmatprep.subr.bf16.mxu0 %v690
  %899 = vmatpush1.bf16.msra.mxu0 %v689
  %900 = vmatprep.subr.bf16.mxu0 %v694
  %901 = vmatpush1.bf16.msra.mxu0 %v693
  %902 = vmatprep.subr.bf16.mxu0 %v698
  %903 = vmatpush1.bf16.msra.mxu0 %v697
  %904 = vmatprep.subr.bf16.mxu0 %v702
  %905 = vmatpush1.bf16.msra.mxu0 %v701
  %906 = vmatprep.subr.bf16.mxu0 %v706
  %907 = vmatpush1.bf16.msra.mxu0 %v705
  %908 = vmatprep.subr.bf16.mxu0 0
  %909 = vmatpush1.bf16.msra.mxu0 0
  %910 = vmatprep.subr.bf16.mxu0 0
  %911 = vmatpush1.bf16.msra.mxu0 0
  %912 = vmatprep.subr.bf16.mxu0 0
  %913 = vmatpush1.bf16.msra.mxu0 0
  %914 = vmatprep.subr.bf16.mxu0 0
  %915 = vmatpush1.bf16.msra.mxu0 0
  %916 = vmatprep.subr.bf16.mxu0 0
  %917 = vmatpush1.bf16.msra.mxu0 0
  %918 = vmatprep.subr.bf16.mxu0 0
  %919 = vmatpush1.bf16.msra.mxu0 0
  %920 = vmatprep.subr.bf16.mxu0 0
  %921 = vmatpush1.bf16.msra.mxu0 0
  %922 = vmatprep.subr.bf16.mxu0 0
  %923 = vmatpush1.bf16.msra.mxu0 0
  %924 = vmatprep.mubr.bf16.mxu0 0
  %925 = vmatmul.mubr.bf16.gmra.mrb[0].mxu0 %v849
  %v926 = vpop.f32.mrb[0].mxu0
  %v927 = vadd.f32 0.0, %v926
  %v928 = vpop.f32.mrb[0].mxu0
  %v929 = vadd.f32 0.0, %v928
  %v930 = vpop.f32.mrb[0].mxu0
  %v931 = vpop.f32.mrb[0].mxu0
  %932 = vdwg.mxu0
  %v933 = vadd.f32 %v497, %v886
  %v934 = vadd.f32 %v499, %v888
  %v935 = vadd.f32 %v538, %v927
  %v936 = vadd.f32 %v540, %v929
  %v937 = vxor.u32 %v933, 2147483648
  %v938 = vmul.f32 %v937, 1.442695
  %v939 = vpow.pop %v938
  %v940 = vadd.f32 %v939, 1.0
  %v941 = vrcp.pop %v940
  %v942 = vmul.f32 1.0, %v941
  %v943 = vxor.u32 %v934, 2147483648
  %v944 = vmul.f32 %v943, 1.442695
  %v945 = vpow.pop %v944
  %v946 = vadd.f32 %v945, 1.0
  %v947 = vrcp.pop %v946
  %v948 = vmul.f32 1.0, %v947
  %v949 = vtanh.pop %v935
  %v950 = vxor.u32 %v936, 2147483648
  %v951 = vmul.f32 %v950, 1.442695
  %v952 = vpow.pop %v951
  %v953 = vadd.f32 %v952, 1.0
  %v954 = vrcp.pop %v953
  %v955 = vmul.f32 1.0, %v954
  %v956 = vmul.f32 %v948, %v846
  %v957 = vmul.f32 %v942, %v949
  %v958 = vadd.f32 %v956, %v957
  %v959 = vtanh.pop %v958
  %v960 = vmul.f32 %v955, %v959
  %v961 = vpack.c.bf16 %v960, %v960
  %s962 = scalar_lea.vmem [#allocation4], 1
  %963 = vst [vmem:[%s962] sm:$0x1] %v961
  %964 = vmatprep.subr.bf16.mxu0 %v676
  %965 = vmatpush1.bf16.msra.mxu0 %v675
  %966 = vmatprep.subr.bf16.mxu0 %v680
  %967 = vmatpush1.bf16.msra.mxu0 %v679
  %968 = vmatprep.subr.bf16.mxu0 %v684
  %969 = vmatpush1.bf16.msra.mxu0 %v683
  %970 = vmatprep.subr.bf16.mxu0 %v688
  %971 = vmatpush1.bf16.msra.mxu0 %v687
  %972 = vmatprep.subr.bf16.mxu0 %v692
  %973 = vmatpush1.bf16.msra.mxu0 %v691
  %974 = vmatprep.subr.bf16.mxu0 %v696
  %975 = vmatpush1.bf16.msra.mxu0 %v695
  %976 = vmatprep.subr.bf16.mxu0 %v700
  %977 = vmatpush1.bf16.msra.mxu0 %v699
  %978 = vmatprep.subr.bf16.mxu0 %v704
  %979 = vmatpush1.bf16.msra.mxu0 %v703
  %980 = vmatprep.subr.bf16.mxu0 0
  %981 = vmatpush1.bf16.msra.mxu0 0
  %982 = vmatprep.subr.bf16.mxu0 0
  %983 = vmatpush1.bf16.msra.mxu0 0
  %984 = vmatprep.subr.bf16.mxu0 0
  %985 = vmatpush1.bf16.msra.mxu0 0
  %986 = vmatprep.subr.bf16.mxu0 0
  %987 = vmatpush1.bf16.msra.mxu0 0
  %988 = vmatprep.subr.bf16.mxu0 0
  %989 = vmatpush1.bf16.msra.mxu0 0
  %990 = vmatprep.subr.bf16.mxu0 0
  %991 = vmatpush1.bf16.msra.mxu0 0
  %992 = vmatprep.subr.bf16.mxu0 0
  %993 = vmatpush1.bf16.msra.mxu0 0
  %994 = vmatprep.subr.bf16.mxu0 0
  %995 = vmatpush1.bf16.msra.mxu0 0
  %996 = vmatprep.mubr.bf16.mxu0 0
  %997 = vmatmul.mubr.bf16.gmra.mrb[0].mxu0 %v961
  %v998 = vpop.f32.mrb[0].mxu0
  %v999 = vadd.f32 0.0, %v998
  %v1000 = vpop.f32.mrb[0].mxu0
  %v1001 = vadd.f32 0.0, %v1000
  %v1002 = vpop.f32.mrb[0].mxu0
  %v1003 = vpop.f32.mrb[0].mxu0
  %1004 = vdwg.mxu0
  %1005 = vmatprep.subr.bf16.mxu0 %v678
  %1006 = vmatpush1.bf16.msra.mxu0 %v677
  %1007 = vmatprep.subr.bf16.mxu0 %v682
  %1008 = vmatpush1.bf16.msra.mxu0 %v681
  %1009 = vmatprep.subr.bf16.mxu0 %v686
  %1010 = vmatpush1.bf16.msra.mxu0 %v685
  %1011 = vmatprep.subr.bf16.mxu0 %v690
  %1012 = vmatpush1.bf16.msra.mxu0 %v689
  %1013 = vmatprep.subr.bf16.mxu0 %v694
  %1014 = vmatpush1.bf16.msra.mxu0 %v693
  %1015 = vmatprep.subr.bf16.mxu0 %v698
  %1016 = vmatpush1.bf16.msra.mxu0 %v697
  %1017 = vmatprep.subr.bf16.mxu0 %v702
  %1018 = vmatpush1.bf16.msra.mxu0 %v701
  %1019 = vmatprep.subr.bf16.mxu0 %v706
  %1020 = vmatpush1.bf16.msra.mxu0 %v705
  %1021 = vmatprep.subr.bf16.mxu0 0
  %1022 = vmatpush1.bf16.msra.mxu0 0
  %1023 = vmatprep.subr.bf16.mxu0 0
  %1024 = vmatpush1.bf16.msra.mxu0 0
  %1025 = vmatprep.subr.bf16.mxu0 0
  %1026 = vmatpush1.bf16.msra.mxu0 0
  %1027 = vmatprep.subr.bf16.mxu0 0
  %1028 = vmatpush1.bf16.msra.mxu0 0
  %1029 = vmatprep.subr.bf16.mxu0 0
  %1030 = vmatpush1.bf16.msra.mxu0 0
  %1031 = vmatprep.subr.bf16.mxu0 0
  %1032 = vmatpush1.bf16.msra.mxu0 0
  %1033 = vmatprep.subr.bf16.mxu0 0
  %1034 = vmatpush1.bf16.msra.mxu0 0
  %1035 = vmatprep.subr.bf16.mxu0 0
  %1036 = vmatpush1.bf16.msra.mxu0 0
  %1037 = vmatprep.mubr.bf16.mxu0 0
  %1038 = vmatmul.mubr.bf16.gmra.mrb[0].mxu0 %v961
  %v1039 = vpop.f32.mrb[0].mxu0
  %v1040 = vadd.f32 0.0, %v1039
  %v1041 = vpop.f32.mrb[0].mxu0
  %v1042 = vadd.f32 0.0, %v1041
  %v1043 = vpop.f32.mrb[0].mxu0
  %v1044 = vpop.f32.mrb[0].mxu0
  %1045 = vdwg.mxu0
  %v1046 = vadd.f32 %v497, %v999
  %v1047 = vadd.f32 %v499, %v1001
  %v1048 = vadd.f32 %v538, %v1040
  %v1049 = vadd.f32 %v540, %v1042
  %v1050 = vxor.u32 %v1046, 2147483648
  %v1051 = vmul.f32 %v1050, 1.442695
  %v1052 = vpow.pop %v1051
  %v1053 = vadd.f32 %v1052, 1.0
  %v1054 = vrcp.pop %v1053
  %v1055 = vmul.f32 1.0, %v1054
  %v1056 = vxor.u32 %v1047, 2147483648
  %v1057 = vmul.f32 %v1056, 1.442695
  %v1058 = vpow.pop %v1057
  %v1059 = vadd.f32 %v1058, 1.0
  %v1060 = vrcp.pop %v1059
  %v1061 = vmul.f32 1.0, %v1060
  %v1062 = vtanh.pop %v1048
  %v1063 = vxor.u32 %v1049, 2147483648
  %v1064 = vmul.f32 %v1063, 1.442695
  %v1065 = vpow.pop %v1064
  %v1066 = vadd.f32 %v1065, 1.0
  %v1067 = vrcp.pop %v1066
  %v1068 = vmul.f32 1.0, %v1067
  %v1069 = vmul.f32 %v1061, %v958
  %v1070 = vmul.f32 %v1055, %v1062
  %v1071 = vadd.f32 %v1069, %v1070
  %v1072 = vtanh.pop %v1071
  %v1073 = vmul.f32 %v1068, %v1072
  %v1074 = vpack.c.bf16 %v1073, %v1073
  %s1075 = scalar_lea.vmem [#allocation4], 2
  %1076 = vst [vmem:[%s1075] sm:$0x1] %v1074
  %1077 = vmatprep.subr.bf16.mxu0 %v676
  %1078 = vmatpush1.bf16.msra.mxu0 %v675
  %1079 = vmatprep.subr.bf16.mxu0 %v680
  %1080 = vmatpush1.bf16.msra.mxu0 %v679
  %1081 = vmatprep.subr.bf16.mxu0 %v684
  %1082 = vmatpush1.bf16.msra.mxu0 %v683
  %1083 = vmatprep.subr.bf16.mxu0 %v688
  %1084 = vmatpush1.bf16.msra.mxu0 %v687
  %1085 = vmatprep.subr.bf16.mxu0 %v692
  %1086 = vmatpush1.bf16.msra.mxu0 %v691
  %1087 = vmatprep.subr.bf16.mxu0 %v696
  %1088 = vmatpush1.bf16.msra.mxu0 %v695
  %1089 = vmatprep.subr.bf16.mxu0 %v700
  %1090 = vmatpush1.bf16.msra.mxu0 %v699
  %1091 = vmatprep.subr.bf16.mxu0 %v704
  %1092 = vmatpush1.bf16.msra.mxu0 %v703
  %1093 = vmatprep.subr.bf16.mxu0 0
  %1094 = vmatpush1.bf16.msra.mxu0 0
  %1095 = vmatprep.subr.bf16.mxu0 0
  %1096 = vmatpush1.bf16.msra.mxu0 0
  %1097 = vmatprep.subr.bf16.mxu0 0
  %1098 = vmatpush1.bf16.msra.mxu0 0
  %1099 = vmatprep.subr.bf16.mxu0 0
  %1100 = vmatpush1.bf16.msra.mxu0 0
  %1101 = vmatprep.subr.bf16.mxu0 0
  %1102 = vmatpush1.bf16.msra.mxu0 0
  %1103 = vmatprep.subr.bf16.mxu0 0
  %1104 = vmatpush1.bf16.msra.mxu0 0
  %1105 = vmatprep.subr.bf16.mxu0 0
  %1106 = vmatpush1.bf16.msra.mxu0 0
  %1107 = vmatprep.subr.bf16.mxu0 0
  %1108 = vmatpush1.bf16.msra.mxu0 0
  %1109 = vmatprep.mubr.bf16.mxu0 0
  %1110 = vmatmul.mubr.bf16.gmra.mrb[0].mxu0 %v1074
  %v1111 = vpop.f32.mrb[0].mxu0
  %v1112 = vadd.f32 0.0, %v1111
  %v1113 = vpop.f32.mrb[0].mxu0
  %v1114 = vadd.f32 0.0, %v1113
  %v1115 = vpop.f32.mrb[0].mxu0
  %v1116 = vpop.f32.mrb[0].mxu0
  %1117 = vdwg.mxu0
  %1118 = vmatprep.subr.bf16.mxu0 %v678
  %1119 = vmatpush1.bf16.msra.mxu0 %v677
  %1120 = vmatprep.subr.bf16.mxu0 %v682
  %1121 = vmatpush1.bf16.msra.mxu0 %v681
  %1122 = vmatprep.subr.bf16.mxu0 %v686
  %1123 = vmatpush1.bf16.msra.mxu0 %v685
  %1124 = vmatprep.subr.bf16.mxu0 %v690
  %1125 = vmatpush1.bf16.msra.mxu0 %v689
  %1126 = vmatprep.subr.bf16.mxu0 %v694
  %1127 = vmatpush1.bf16.msra.mxu0 %v693
  %1128 = vmatprep.subr.bf16.mxu0 %v698
  %1129 = vmatpush1.bf16.msra.mxu0 %v697
  %1130 = vmatprep.subr.bf16.mxu0 %v702
  %1131 = vmatpush1.bf16.msra.mxu0 %v701
  %1132 = vmatprep.subr.bf16.mxu0 %v706
  %1133 = vmatpush1.bf16.msra.mxu0 %v705
  %1134 = vmatprep.subr.bf16.mxu0 0
  %1135 = vmatpush1.bf16.msra.mxu0 0
  %1136 = vmatprep.subr.bf16.mxu0 0
  %1137 = vmatpush1.bf16.msra.mxu0 0
  %1138 = vmatprep.subr.bf16.mxu0 0
  %1139 = vmatpush1.bf16.msra.mxu0 0
  %1140 = vmatprep.subr.bf16.mxu0 0
  %1141 = vmatpush1.bf16.msra.mxu0 0
  %1142 = vmatprep.subr.bf16.mxu0 0
  %1143 = vmatpush1.bf16.msra.mxu0 0
  %1144 = vmatprep.subr.bf16.mxu0 0
  %1145 = vmatpush1.bf16.msra.mxu0 0
  %1146 = vmatprep.subr.bf16.mxu0 0
  %1147 = vmatpush1.bf16.msra.mxu0 0
  %1148 = vmatprep.subr.bf16.mxu0 0
  %1149 = vmatpush1.bf16.msra.mxu0 0
  %1150 = vmatprep.mubr.bf16.mxu0 0
  %1151 = vmatmul.mubr.bf16.gmra.mrb[0].mxu0 %v1074
  %v1152 = vpop.f32.mrb[0].mxu0
  %v1153 = vadd.f32 0.0, %v1152
  %v1154 = vpop.f32.mrb[0].mxu0
  %v1155 = vadd.f32 0.0, %v1154
  %v1156 = vpop.f32.mrb[0].mxu0
  %v1157 = vpop.f32.mrb[0].mxu0
  %1158 = vdwg.mxu0
  %v1159 = vadd.f32 %v497, %v1112
  %v1160 = vadd.f32 %v499, %v1114
  %v1161 = vadd.f32 %v538, %v1153
  %v1162 = vadd.f32 %v540, %v1155
  %v1163 = vxor.u32 %v1159, 2147483648
  %v1164 = vmul.f32 %v1163, 1.442695
  %v1165 = vpow.pop %v1164
  %v1166 = vadd.f32 %v1165, 1.0
  %v1167 = vrcp.pop %v1166
  %v1168 = vmul.f32 1.0, %v1167
  %v1169 = vxor.u32 %v1160, 2147483648
  %v1170 = vmul.f32 %v1169, 1.442695
  %v1171 = vpow.pop %v1170
  %v1172 = vadd.f32 %v1171, 1.0
  %v1173 = vrcp.pop %v1172
  %v1174 = vmul.f32 1.0, %v1173
  %v1175 = vtanh.pop %v1161
  %v1176 = vxor.u32 %v1162, 2147483648
  %v1177 = vmul.f32 %v1176, 1.442695
  %v1178 = vpow.pop %v1177
  %v1179 = vadd.f32 %v1178, 1.0
  %v1180 = vrcp.pop %v1179
  %v1181 = vmul.f32 1.0, %v1180
  %v1182 = vmul.f32 %v1174, %v1071
  %v1183 = vmul.f32 %v1168, %v1175
  %v1184 = vadd.f32 %v1182, %v1183
  %v1185 = vtanh.pop %v1184
  %v1186 = vmul.f32 %v1181, %v1185
  %v1187 = vpack.c.bf16 %v1186, %v1186
  %s1188 = scalar_lea.vmem [#allocation4], 3
  %1189 = vst [vmem:[%s1188] sm:$0x1] %v1187
  %1190 = vmatprep.subr.bf16.mxu0 %v676
  %1191 = vmatpush1.bf16.msra.mxu0 %v675
  %1192 = vmatprep.subr.bf16.mxu0 %v680
  %1193 = vmatpush1.bf16.msra.mxu0 %v679
  %1194 = vmatprep.subr.bf16.mxu0 %v684
  %1195 = vmatpush1.bf16.msra.mxu0 %v683
  %1196 = vmatprep.subr.bf16.mxu0 %v688
  %1197 = vmatpush1.bf16.msra.mxu0 %v687
  %1198 = vmatprep.subr.bf16.mxu0 %v692
  %1199 = vmatpush1.bf16.msra.mxu0 %v691
  %1200 = vmatprep.subr.bf16.mxu0 %v696
  %1201 = vmatpush1.bf16.msra.mxu0 %v695
  %1202 = vmatprep.subr.bf16.mxu0 %v700
  %1203 = vmatpush1.bf16.msra.mxu0 %v699
  %1204 = vmatprep.subr.bf16.mxu0 %v704
  %1205 = vmatpush1.bf16.msra.mxu0 %v703
  %1206 = vmatprep.subr.bf16.mxu0 0
  %1207 = vmatpush1.bf16.msra.mxu0 0
  %1208 = vmatprep.subr.bf16.mxu0 0
  %1209 = vmatpush1.bf16.msra.mxu0 0
  %1210 = vmatprep.subr.bf16.mxu0 0
  %1211 = vmatpush1.bf16.msra.mxu0 0
  %1212 = vmatprep.subr.bf16.mxu0 0
  %1213 = vmatpush1.bf16.msra.mxu0 0
  %1214 = vmatprep.subr.bf16.mxu0 0
  %1215 = vmatpush1.bf16.msra.mxu0 0
  %1216 = vmatprep.subr.bf16.mxu0 0
  %1217 = vmatpush1.bf16.msra.mxu0 0
  %1218 = vmatprep.subr.bf16.mxu0 0
  %1219 = vmatpush1.bf16.msra.mxu0 0
  %1220 = vmatprep.subr.bf16.mxu0 0
  %1221 = vmatpush1.bf16.msra.mxu0 0
  %1222 = vmatprep.mubr.bf16.mxu0 0
  %1223 = vmatmul.mubr.bf16.gmra.mrb[0].mxu0 %v1187
  %v1224 = vpop.f32.mrb[0].mxu0
  %v1225 = vadd.f32 0.0, %v1224
  %v1226 = vpop.f32.mrb[0].mxu0
  %v1227 = vadd.f32 0.0, %v1226
  %v1228 = vpop.f32.mrb[0].mxu0
  %v1229 = vpop.f32.mrb[0].mxu0
  %1230 = vdwg.mxu0
  %1231 = vmatprep.subr.bf16.mxu0 %v678
  %1232 = vmatpush1.bf16.msra.mxu0 %v677
  %1233 = vmatprep.subr.bf16.mxu0 %v682
  %1234 = vmatpush1.bf16.msra.mxu0 %v681
  %1235 = vmatprep.subr.bf16.mxu0 %v686
  %1236 = vmatpush1.bf16.msra.mxu0 %v685
  %1237 = vmatprep.subr.bf16.mxu0 %v690
  %1238 = vmatpush1.bf16.msra.mxu0 %v689
  %1239 = vmatprep.subr.bf16.mxu0 %v694
  %1240 = vmatpush1.bf16.msra.mxu0 %v693
  %1241 = vmatprep.subr.bf16.mxu0 %v698
  %1242 = vmatpush1.bf16.msra.mxu0 %v697
  %1243 = vmatprep.subr.bf16.mxu0 %v702
  %1244 = vmatpush1.bf16.msra.mxu0 %v701
  %1245 = vmatprep.subr.bf16.mxu0 %v706
  %1246 = vmatpush1.bf16.msra.mxu0 %v705
  %1247 = vmatprep.subr.bf16.mxu0 0
  %1248 = vmatpush1.bf16.msra.mxu0 0
  %1249 = vmatprep.subr.bf16.mxu0 0
  %1250 = vmatpush1.bf16.msra.mxu0 0
  %1251 = vmatprep.subr.bf16.mxu0 0
  %1252 = vmatpush1.bf16.msra.mxu0 0
  %1253 = vmatprep.subr.bf16.mxu0 0
  %1254 = vmatpush1.bf16.msra.mxu0 0
  %1255 = vmatprep.subr.bf16.mxu0 0
  %1256 = vmatpush1.bf16.msra.mxu0 0
  %1257 = vmatprep.subr.bf16.mxu0 0
  %1258 = vmatpush1.bf16.msra.mxu0 0
  %1259 = vmatprep.subr.bf16.mxu0 0
  %1260 = vmatpush1.bf16.msra.mxu0 0
  %1261 = vmatprep.subr.bf16.mxu0 0
  %1262 = vmatpush1.bf16.msra.mxu0 0
  %1263 = vmatprep.mubr.bf16.mxu0 0
  %1264 = vmatmul.mubr.bf16.gmra.mrb[0].mxu0 %v1187
  %v1265 = vpop.f32.mrb[0].mxu0
  %v1266 = vadd.f32 0.0, %v1265
  %v1267 = vpop.f32.mrb[0].mxu0
  %v1268 = vadd.f32 0.0, %v1267
  %v1269 = vpop.f32.mrb[0].mxu0
  %v1270 = vpop.f32.mrb[0].mxu0
  %1271 = vdwg.mxu0
  %v1272 = vadd.f32 %v497, %v1225
  %v1273 = vadd.f32 %v499, %v1227
  %v1274 = vadd.f32 %v538, %v1266
  %v1275 = vadd.f32 %v540, %v1268
  %v1276 = vxor.u32 %v1272, 2147483648
  %v1277 = vmul.f32 %v1276, 1.442695
  %v1278 = vpow.pop %v1277
  %v1279 = vadd.f32 %v1278, 1.0
  %v1280 = vrcp.pop %v1279
  %v1281 = vmul.f32 1.0, %v1280
  %v1282 = vxor.u32 %v1273, 2147483648
  %v1283 = vmul.f32 %v1282, 1.442695
  %v1284 = vpow.pop %v1283
  %v1285 = vadd.f32 %v1284, 1.0
  %v1286 = vrcp.pop %v1285
  %v1287 = vmul.f32 1.0, %v1286
  %v1288 = vtanh.pop %v1274
  %v1289 = vxor.u32 %v1275, 2147483648
  %v1290 = vmul.f32 %v1289, 1.442695
  %v1291 = vpow.pop %v1290
  %v1292 = vadd.f32 %v1291, 1.0
  %v1293 = vrcp.pop %v1292
  %v1294 = vmul.f32 1.0, %v1293
  %v1295 = vmul.f32 %v1287, %v1184
  %v1296 = vmul.f32 %v1281, %v1288
  %v1297 = vadd.f32 %v1295, %v1296
  %v1298 = vtanh.pop %v1297
  %v1299 = vmul.f32 %v1294, %v1298
  %v1300 = vpack.c.bf16 %v1299, %v1299
  %s1301 = scalar_lea.vmem [#allocation4], 4
  %1302 = vst [vmem:[%s1301] sm:$0x1] %v1300
  %1303 = vmatprep.subr.bf16.mxu0 %v676
  %1304 = vmatpush1.bf16.msra.mxu0 %v675
  %1305 = vmatprep.subr.bf16.mxu0 %v680
  %1306 = vmatpush1.bf16.msra.mxu0 %v679
  %1307 = vmatprep.subr.bf16.mxu0 %v684
  %1308 = vmatpush1.bf16.msra.mxu0 %v683
  %1309 = vmatprep.subr.bf16.mxu0 %v688
  %1310 = vmatpush1.bf16.msra.mxu0 %v687
  %1311 = vmatprep.subr.bf16.mxu0 %v692
  %1312 = vmatpush1.bf16.msra.mxu0 %v691
  %1313 = vmatprep.subr.bf16.mxu0 %v696
  %1314 = vmatpush1.bf16.msra.mxu0 %v695
  %1315 = vmatprep.subr.bf16.mxu0 %v700
  %1316 = vmatpush1.bf16.msra.mxu0 %v699
  %1317 = vmatprep.subr.bf16.mxu0 %v704
  %1318 = vmatpush1.bf16.msra.mxu0 %v703
  %1319 = vmatprep.subr.bf16.mxu0 0
  %1320 = vmatpush1.bf16.msra.mxu0 0
  %1321 = vmatprep.subr.bf16.mxu0 0
  %1322 = vmatpush1.bf16.msra.mxu0 0
  %1323 = vmatprep.subr.bf16.mxu0 0
  %1324 = vmatpush1.bf16.msra.mxu0 0
  %1325 = vmatprep.subr.bf16.mxu0 0
  %1326 = vmatpush1.bf16.msra.mxu0 0
  %1327 = vmatprep.subr.bf16.mxu0 0
  %1328 = vmatpush1.bf16.msra.mxu0 0
  %1329 = vmatprep.subr.bf16.mxu0 0
  %1330 = vmatpush1.bf16.msra.mxu0 0
  %1331 = vmatprep.subr.bf16.mxu0 0
  %1332 = vmatpush1.bf16.msra.mxu0 0
  %1333 = vmatprep.subr.bf16.mxu0 0
  %1334 = vmatpush1.bf16.msra.mxu0 0
  %1335 = vmatprep.mubr.bf16.mxu0 0
  %1336 = vmatmul.mubr.bf16.gmra.mrb[0].mxu0 %v1300
  %v1337 = vpop.f32.mrb[0].mxu0
  %v1338 = vadd.f32 0.0, %v1337
  %v1339 = vpop.f32.mrb[0].mxu0
  %v1340 = vadd.f32 0.0, %v1339
  %v1341 = vpop.f32.mrb[0].mxu0
  %v1342 = vpop.f32.mrb[0].mxu0
  %1343 = vdwg.mxu0
  %1344 = vmatprep.subr.bf16.mxu0 %v678
  %1345 = vmatpush1.bf16.msra.mxu0 %v677
  %1346 = vmatprep.subr.bf16.mxu0 %v682
  %1347 = vmatpush1.bf16.msra.mxu0 %v681
  %1348 = vmatprep.subr.bf16.mxu0 %v686
  %1349 = vmatpush1.bf16.msra.mxu0 %v685
  %1350 = vmatprep.subr.bf16.mxu0 %v690
  %1351 = vmatpush1.bf16.msra.mxu0 %v689
  %1352 = vmatprep.subr.bf16.mxu0 %v694
  %1353 = vmatpush1.bf16.msra.mxu0 %v693
  %1354 = vmatprep.subr.bf16.mxu0 %v698
  %1355 = vmatpush1.bf16.msra.mxu0 %v697
  %1356 = vmatprep.subr.bf16.mxu0 %v702
  %1357 = vmatpush1.bf16.msra.mxu0 %v701
  %1358 = vmatprep.subr.bf16.mxu0 %v706
  %1359 = vmatpush1.bf16.msra.mxu0 %v705
  %1360 = vmatprep.subr.bf16.mxu0 0
  %1361 = vmatpush1.bf16.msra.mxu0 0
  %1362 = vmatprep.subr.bf16.mxu0 0
  %1363 = vmatpush1.bf16.msra.mxu0 0
  %1364 = vmatprep.subr.bf16.mxu0 0
  %1365 = vmatpush1.bf16.msra.mxu0 0
  %1366 = vmatprep.subr.bf16.mxu0 0
  %1367 = vmatpush1.bf16.msra.mxu0 0
  %1368 = vmatprep.subr.bf16.mxu0 0
  %1369 = vmatpush1.bf16.msra.mxu0 0
  %1370 = vmatprep.subr.bf16.mxu0 0
  %1371 = vmatpush1.bf16.msra.mxu0 0
  %1372 = vmatprep.subr.bf16.mxu0 0
  %1373 = vmatpush1.bf16.msra.mxu0 0
  %1374 = vmatprep.subr.bf16.mxu0 0
  %1375 = vmatpush1.bf16.msra.mxu0 0
  %1376 = vmatprep.mubr.bf16.mxu0 0
  %1377 = vmatmul.mubr.bf16.gmra.mrb[0].mxu0 %v1300
  %v1378 = vpop.f32.mrb[0].mxu0
  %v1379 = vadd.f32 0.0, %v1378
  %v1380 = vpop.f32.mrb[0].mxu0
  %v1381 = vadd.f32 0.0, %v1380
  %v1382 = vpop.f32.mrb[0].mxu0
  %v1383 = vpop.f32.mrb[0].mxu0
  %1384 = vdwg.mxu0
  %v1385 = vadd.f32 %v497, %v1338
  %v1386 = vadd.f32 %v499, %v1340
  %v1387 = vadd.f32 %v538, %v1379
  %v1388 = vadd.f32 %v540, %v1381
  %v1389 = vxor.u32 %v1385, 2147483648
  %v1390 = vmul.f32 %v1389, 1.442695
  %v1391 = vpow.pop %v1390
  %v1392 = vadd.f32 %v1391, 1.0
  %v1393 = vrcp.pop %v1392
  %v1394 = vmul.f32 1.0, %v1393
  %v1395 = vxor.u32 %v1386, 2147483648
  %v1396 = vmul.f32 %v1395, 1.442695
  %v1397 = vpow.pop %v1396
  %v1398 = vadd.f32 %v1397, 1.0
  %v1399 = vrcp.pop %v1398
  %v1400 = vmul.f32 1.0, %v1399
  %v1401 = vtanh.pop %v1387
  %v1402 = vxor.u32 %v1388, 2147483648
  %v1403 = vmul.f32 %v1402, 1.442695
  %v1404 = vpow.pop %v1403
  %v1405 = vadd.f32 %v1404, 1.0
  %v1406 = vrcp.pop %v1405
  %v1407 = vmul.f32 1.0, %v1406
  %v1408 = vmul.f32 %v1400, %v1297
  %v1409 = vmul.f32 %v1394, %v1401
  %v1410 = vadd.f32 %v1408, %v1409
  %v1411 = vtanh.pop %v1410
  %v1412 = vmul.f32 %v1407, %v1411
  %v1413 = vpack.c.bf16 %v1412, %v1412
  %s1414 = scalar_lea.vmem [#allocation4], 5
  %1415 = vst [vmem:[%s1414] sm:$0x1] %v1413
  %1416 = vmatprep.subr.bf16.mxu0 %v676
  %1417 = vmatpush1.bf16.msra.mxu0 %v675
  %1418 = vmatprep.subr.bf16.mxu0 %v680
  %1419 = vmatpush1.bf16.msra.mxu0 %v679
  %1420 = vmatprep.subr.bf16.mxu0 %v684
  %1421 = vmatpush1.bf16.msra.mxu0 %v683
  %1422 = vmatprep.subr.bf16.mxu0 %v688
  %1423 = vmatpush1.bf16.msra.mxu0 %v687
  %1424 = vmatprep.subr.bf16.mxu0 %v692
  %1425 = vmatpush1.bf16.msra.mxu0 %v691
  %1426 = vmatprep.subr.bf16.mxu0 %v696
  %1427 = vmatpush1.bf16.msra.mxu0 %v695
  %1428 = vmatprep.subr.bf16.mxu0 %v700
  %1429 = vmatpush1.bf16.msra.mxu0 %v699
  %1430 = vmatprep.subr.bf16.mxu0 %v704
  %1431 = vmatpush1.bf16.msra.mxu0 %v703
  %1432 = vmatprep.subr.bf16.mxu0 0
  %1433 = vmatpush1.bf16.msra.mxu0 0
  %1434 = vmatprep.subr.bf16.mxu0 0
  %1435 = vmatpush1.bf16.msra.mxu0 0
  %1436 = vmatprep.subr.bf16.mxu0 0
  %1437 = vmatpush1.bf16.msra.mxu0 0
  %1438 = vmatprep.subr.bf16.mxu0 0
  %1439 = vmatpush1.bf16.msra.mxu0 0
  %1440 = vmatprep.subr.bf16.mxu0 0
  %1441 = vmatpush1.bf16.msra.mxu0 0
  %1442 = vmatprep.subr.bf16.mxu0 0
  %1443 = vmatpush1.bf16.msra.mxu0 0
  %1444 = vmatprep.subr.bf16.mxu0 0
  %1445 = vmatpush1.bf16.msra.mxu0 0
  %1446 = vmatprep.subr.bf16.mxu0 0
  %1447 = vmatpush1.bf16.msra.mxu0 0
  %1448 = vmatprep.mubr.bf16.mxu0 0
  %1449 = vmatmul.mubr.bf16.gmra.mrb[0].mxu0 %v1413
  %v1450 = vpop.f32.mrb[0].mxu0
  %v1451 = vadd.f32 0.0, %v1450
  %v1452 = vpop.f32.mrb[0].mxu0
  %v1453 = vadd.f32 0.0, %v1452
  %v1454 = vpop.f32.mrb[0].mxu0
  %v1455 = vpop.f32.mrb[0].mxu0
  %1456 = vdwg.mxu0
  %1457 = vmatprep.subr.bf16.mxu0 %v678
  %1458 = vmatpush1.bf16.msra.mxu0 %v677
  %1459 = vmatprep.subr.bf16.mxu0 %v682
  %1460 = vmatpush1.bf16.msra.mxu0 %v681
  %1461 = vmatprep.subr.bf16.mxu0 %v686
  %1462 = vmatpush1.bf16.msra.mxu0 %v685
  %1463 = vmatprep.subr.bf16.mxu0 %v690
  %1464 = vmatpush1.bf16.msra.mxu0 %v689
  %1465 = vmatprep.subr.bf16.mxu0 %v694
  %1466 = vmatpush1.bf16.msra.mxu0 %v693
  %1467 = vmatprep.subr.bf16.mxu0 %v698
  %1468 = vmatpush1.bf16.msra.mxu0 %v697
  %1469 = vmatprep.subr.bf16.mxu0 %v702
  %1470 = vmatpush1.bf16.msra.mxu0 %v701
  %1471 = vmatprep.subr.bf16.mxu0 %v706
  %1472 = vmatpush1.bf16.msra.mxu0 %v705
  %1473 = vmatprep.subr.bf16.mxu0 0
  %1474 = vmatpush1.bf16.msra.mxu0 0
  %1475 = vmatprep.subr.bf16.mxu0 0
  %1476 = vmatpush1.bf16.msra.mxu0 0
  %1477 = vmatprep.subr.bf16.mxu0 0
  %1478 = vmatpush1.bf16.msra.mxu0 0
  %1479 = vmatprep.subr.bf16.mxu0 0
  %1480 = vmatpush1.bf16.msra.mxu0 0
  %1481 = vmatprep.subr.bf16.mxu0 0
  %1482 = vmatpush1.bf16.msra.mxu0 0
  %1483 = vmatprep.subr.bf16.mxu0 0
  %1484 = vmatpush1.bf16.msra.mxu0 0
  %1485 = vmatprep.subr.bf16.mxu0 0
  %1486 = vmatpush1.bf16.msra.mxu0 0
  %1487 = vmatprep.subr.bf16.mxu0 0
  %1488 = vmatpush1.bf16.msra.mxu0 0
  %1489 = vmatprep.mubr.bf16.mxu0 0
  %1490 = vmatmul.mubr.bf16.gmra.mrb[0].mxu0 %v1413
  %v1491 = vpop.f32.mrb[0].mxu0
  %v1492 = vadd.f32 0.0, %v1491
  %v1493 = vpop.f32.mrb[0].mxu0
  %v1494 = vadd.f32 0.0, %v1493
  %v1495 = vpop.f32.mrb[0].mxu0
  %v1496 = vpop.f32.mrb[0].mxu0
  %1497 = vdwg.mxu0
  %v1498 = vadd.f32 %v497, %v1451
  %v1499 = vadd.f32 %v499, %v1453
  %v1500 = vadd.f32 %v538, %v1492
  %v1501 = vadd.f32 %v540, %v1494
  %v1502 = vxor.u32 %v1498, 2147483648
  %v1503 = vmul.f32 %v1502, 1.442695
  %v1504 = vpow.pop %v1503
  %v1505 = vadd.f32 %v1504, 1.0
  %v1506 = vrcp.pop %v1505
  %v1507 = vmul.f32 1.0, %v1506
  %v1508 = vxor.u32 %v1499, 2147483648
  %v1509 = vmul.f32 %v1508, 1.442695
  %v1510 = vpow.pop %v1509
  %v1511 = vadd.f32 %v1510, 1.0
  %v1512 = vrcp.pop %v1511
  %v1513 = vmul.f32 1.0, %v1512
  %v1514 = vtanh.pop %v1500
  %v1515 = vxor.u32 %v1501, 2147483648
  %v1516 = vmul.f32 %v1515, 1.442695
  %v1517 = vpow.pop %v1516
  %v1518 = vadd.f32 %v1517, 1.0
  %v1519 = vrcp.pop %v1518
  %v1520 = vmul.f32 1.0, %v1519
  %v1521 = vmul.f32 %v1513, %v1410
  %v1522 = vmul.f32 %v1507, %v1514
  %v1523 = vadd.f32 %v1521, %v1522
  %v1524 = vtanh.pop %v1523
  %v1525 = vmul.f32 %v1520, %v1524
  %v1526 = vpack.c.bf16 %v1525, %v1525
  %s1527 = scalar_lea.vmem [#allocation4], 6
  %1528 = vst [vmem:[%s1527] sm:$0x1] %v1526
  %1529 = vmatprep.subr.bf16.mxu0 %v676
  %1530 = vmatpush1.bf16.msra.mxu0 %v675
  %1531 = vmatprep.subr.bf16.mxu0 %v680
  %1532 = vmatpush1.bf16.msra.mxu0 %v679
  %1533 = vmatprep.subr.bf16.mxu0 %v684
  %1534 = vmatpush1.bf16.msra.mxu0 %v683
  %1535 = vmatprep.subr.bf16.mxu0 %v688
  %1536 = vmatpush1.bf16.msra.mxu0 %v687
  %1537 = vmatprep.subr.bf16.mxu0 %v692
  %1538 = vmatpush1.bf16.msra.mxu0 %v691
  %1539 = vmatprep.subr.bf16.mxu0 %v696
  %1540 = vmatpush1.bf16.msra.mxu0 %v695
  %1541 = vmatprep.subr.bf16.mxu0 %v700
  %1542 = vmatpush1.bf16.msra.mxu0 %v699
  %1543 = vmatprep.subr.bf16.mxu0 %v704
  %1544 = vmatpush1.bf16.msra.mxu0 %v703
  %1545 = vmatprep.subr.bf16.mxu0 0
  %1546 = vmatpush1.bf16.msra.mxu0 0
  %1547 = vmatprep.subr.bf16.mxu0 0
  %1548 = vmatpush1.bf16.msra.mxu0 0
  %1549 = vmatprep.subr.bf16.mxu0 0
  %1550 = vmatpush1.bf16.msra.mxu0 0
  %1551 = vmatprep.subr.bf16.mxu0 0
  %1552 = vmatpush1.bf16.msra.mxu0 0
  %1553 = vmatprep.subr.bf16.mxu0 0
  %1554 = vmatpush1.bf16.msra.mxu0 0
  %1555 = vmatprep.subr.bf16.mxu0 0
  %1556 = vmatpush1.bf16.msra.mxu0 0
  %1557 = vmatprep.subr.bf16.mxu0 0
  %1558 = vmatpush1.bf16.msra.mxu0 0
  %1559 = vmatprep.subr.bf16.mxu0 0
  %1560 = vmatpush1.bf16.msra.mxu0 0
  %1561 = vmatprep.mubr.bf16.mxu0 0
  %1562 = vmatmul.mubr.bf16.gmra.mrb[0].mxu0 %v1526
  %v1563 = vpop.f32.mrb[0].mxu0
  %v1564 = vadd.f32 0.0, %v1563
  %v1565 = vpop.f32.mrb[0].mxu0
  %v1566 = vadd.f32 0.0, %v1565
  %v1567 = vpop.f32.mrb[0].mxu0
  %v1568 = vpop.f32.mrb[0].mxu0
  %1569 = vdwg.mxu0
  %1570 = vmatprep.subr.bf16.mxu0 %v678
  %1571 = vmatpush1.bf16.msra.mxu0 %v677
  %1572 = vmatprep.subr.bf16.mxu0 %v682
  %1573 = vmatpush1.bf16.msra.mxu0 %v681
  %1574 = vmatprep.subr.bf16.mxu0 %v686
  %1575 = vmatpush1.bf16.msra.mxu0 %v685
  %1576 = vmatprep.subr.bf16.mxu0 %v690
  %1577 = vmatpush1.bf16.msra.mxu0 %v689
  %1578 = vmatprep.subr.bf16.mxu0 %v694
  %1579 = vmatpush1.bf16.msra.mxu0 %v693
  %1580 = vmatprep.subr.bf16.mxu0 %v698
  %1581 = vmatpush1.bf16.msra.mxu0 %v697
  %1582 = vmatprep.subr.bf16.mxu0 %v702
  %1583 = vmatpush1.bf16.msra.mxu0 %v701
  %1584 = vmatprep.subr.bf16.mxu0 %v706
  %1585 = vmatpush1.bf16.msra.mxu0 %v705
  %1586 = vmatprep.subr.bf16.mxu0 0
  %1587 = vmatpush1.bf16.msra.mxu0 0
  %1588 = vmatprep.subr.bf16.mxu0 0
  %1589 = vmatpush1.bf16.msra.mxu0 0
  %1590 = vmatprep.subr.bf16.mxu0 0
  %1591 = vmatpush1.bf16.msra.mxu0 0
  %1592 = vmatprep.subr.bf16.mxu0 0
  %1593 = vmatpush1.bf16.msra.mxu0 0
  %1594 = vmatprep.subr.bf16.mxu0 0
  %1595 = vmatpush1.bf16.msra.mxu0 0
  %1596 = vmatprep.subr.bf16.mxu0 0
  %1597 = vmatpush1.bf16.msra.mxu0 0
  %1598 = vmatprep.subr.bf16.mxu0 0
  %1599 = vmatpush1.bf16.msra.mxu0 0
  %1600 = vmatprep.subr.bf16.mxu0 0
  %1601 = vmatpush1.bf16.msra.mxu0 0
  %1602 = vmatprep.mubr.bf16.mxu0 0
  %1603 = vmatmul.mubr.bf16.gmra.mrb[0].mxu0 %v1526
  %v1604 = vpop.f32.mrb[0].mxu0
  %v1605 = vadd.f32 0.0, %v1604
  %v1606 = vpop.f32.mrb[0].mxu0
  %v1607 = vadd.f32 0.0, %v1606
  %v1608 = vpop.f32.mrb[0].mxu0
  %v1609 = vpop.f32.mrb[0].mxu0
  %1610 = vdwg.mxu0
  %v1611 = vadd.f32 %v497, %v1564
  %v1612 = vadd.f32 %v499, %v1566
  %v1613 = vadd.f32 %v538, %v1605
  %v1614 = vadd.f32 %v540, %v1607
  %v1615 = vxor.u32 %v1611, 2147483648
  %v1616 = vmul.f32 %v1615, 1.442695
  %v1617 = vpow.pop %v1616
  %v1618 = vadd.f32 %v1617, 1.0
  %v1619 = vrcp.pop %v1618
  %v1620 = vmul.f32 1.0, %v1619
  %v1621 = vxor.u32 %v1612, 2147483648
  %v1622 = vmul.f32 %v1621, 1.442695
  %v1623 = vpow.pop %v1622
  %v1624 = vadd.f32 %v1623, 1.0
  %v1625 = vrcp.pop %v1624
  %v1626 = vmul.f32 1.0, %v1625
  %v1627 = vtanh.pop %v1613
  %v1628 = vxor.u32 %v1614, 2147483648
  %v1629 = vmul.f32 %v1628, 1.442695
  %v1630 = vpow.pop %v1629
  %v1631 = vadd.f32 %v1630, 1.0
  %v1632 = vrcp.pop %v1631
  %v1633 = vmul.f32 1.0, %v1632
  %v1634 = vmul.f32 %v1626, %v1523
  %v1635 = vmul.f32 %v1620, %v1627
  %v1636 = vadd.f32 %v1634, %v1635
  %v1637 = vtanh.pop %v1636
  %v1638 = vmul.f32 %v1633, %v1637
  %v1639 = vpack.c.bf16 %v1638, %v1638
  %s1640 = scalar_lea.vmem [#allocation4], 7
  %1641 = vst [vmem:[%s1640] sm:$0x1] %v1639
  %1642 = vst [vmem:[#allocation2] sm:$0x3] %v1638
  %1643 = vst [vmem:[#allocation3] sm:$0x3] %v1636
  %v1644 = vld [vmem:[#allocation4] sm:$0x1]
  %v1645 = vld [vmem:[#allocation4 + $0x1] sm:$0x1]
  %v1646 = vld [vmem:[#allocation4 + $0x2] sm:$0x1]
  %v1647 = vld [vmem:[#allocation4 + $0x3] sm:$0x1]
  %v1648 = vld [vmem:[#allocation4 + $0x4] sm:$0x1]
  %v1649 = vld [vmem:[#allocation4 + $0x5] sm:$0x1]
  %v1650 = vld [vmem:[#allocation4 + $0x6] sm:$0x1]
  %v1651 = vld [vmem:[#allocation4 + $0x7] sm:$0x1]
  %v1652 = vld [vmem:[%s4] sm:$0xf]
  %v1653 = vld [vmem:[%s4 + $0x4] sm:$0xf]
  %v1654 = vld [vmem:[%s4 + $0x8] sm:$0xf]
  %v1655 = vld [vmem:[%s4 + $0xc] sm:$0xf]
  %v1656 = vld [vmem:[%s4 + $0x10] sm:$0xf]
  %v1657 = vld [vmem:[%s4 + $0x14] sm:$0xf]
  %v1658 = vld [vmem:[%s4 + $0x18] sm:$0xf]
  %v1659 = vld [vmem:[%s4 + $0x1c] sm:$0xf]
  %v1660 = vld [vmem:[%s4 + $0x20] sm:$0xf]
  %v1661 = vld [vmem:[%s4 + $0x24] sm:$0xf]
  %v1662 = vld [vmem:[%s4 + $0x28] sm:$0xf]
  %v1663 = vld [vmem:[%s4 + $0x2c] sm:$0xf]
  %v1664 = vld [vmem:[%s4 + $0x30] sm:$0xf]
  %v1665 = vld [vmem:[%s4 + $0x34] sm:$0xf]
  %v1666 = vld [vmem:[%s4 + $0x38] sm:$0xf]
  %v1667 = vld [vmem:[%s4 + $0x3c] sm:$0xf]
  %v1668 = vld [vmem:[%s5] sm:$0x1]
  %v1670 = vlaneseq
  %v1671 = vshrl.u32 %v1670, 7
  %v1672 = vsub.s32 0, %v1671
  %v1673 = vrot.slane %v1668, %v1672
  %v1683 = vcombine.low %v1644, %v1645
  %v1684 = vcombine.low %v1646, %v1647
  %v1685 = vcombine.low %v1648, %v1649
  %v1686 = vcombine.low %v1650, %v1651
  %v1688 = vunpack.c.l.s4 1966171168
  %v1689 = vunpack.c.0.s8 %v1688
  %v1690 = vlaneseq
  %v1691 = vshrl.u32 %v1690, 7
  %v1692 = vsub.s32 %v1689, %v1691
  %v1693 = vrot.slane %v1683, %v1692
  %v1695 = vunpack.c.l.s4 1966171168
  %v1696 = vunpack.c.0.s8 %v1695
  %v1697 = vlaneseq
  %v1698 = vshrl.u32 %v1697, 7
  %v1699 = vsub.s32 %v1696, %v1698
  %v1700 = vrot.slane %v1684, %v1699
  %v1702 = vunpack.c.l.s4 1966171168
  %v1703 = vunpack.c.0.s8 %v1702
  %v1704 = vlaneseq
  %v1705 = vshrl.u32 %v1704, 7
  %v1706 = vsub.s32 %v1703, %v1705
  %v1707 = vrot.slane %v1685, %v1706
  %v1709 = vunpack.c.l.s4 1966171168
  %v1710 = vunpack.c.0.s8 %v1709
  %v1711 = vlaneseq
  %v1712 = vshrl.u32 %v1711, 7
  %v1713 = vsub.s32 %v1710, %v1712
  %v1714 = vrot.slane %v1686, %v1713
  %v1715 = vcombine.low %v1693, %v1700
  %v1716 = vcombine.low %v1707, %v1714
  %v1718 = vunpack.c.l.s4 1966171168
  %v1719 = vunpack.c.0.s8 %v1718
  %v1720 = vlaneseq
  %v1721 = vshrl.u32 %v1720, 7
  %v1722 = vsub.s32 %v1719, %v1721
  %v1723 = vrot.slane %v1715, %v1722
  %v1725 = vunpack.c.l.s4 1966171168
  %v1726 = vunpack.c.0.s8 %v1725
  %v1727 = vlaneseq
  %v1728 = vshrl.u32 %v1727, 7
  %v1729 = vsub.s32 %v1726, %v1728
  %v1730 = vrot.slane %v1716, %v1729
  %v1731 = vcombine.low %v1723, %v1730
  %v1749 = vunpack.c.l.b16 %v1652
  %v1750 = vunpack.c.l.b16 %v1653
  %v1751 = vunpack.c.l.b16 %v1654
  %v1752 = vunpack.c.l.b16 %v1655
  %v1753 = vunpack.c.l.b16 %v1656
  %v1754 = vunpack.c.l.b16 %v1657
  %v1755 = vunpack.c.l.b16 %v1658
  %v1756 = vunpack.c.l.b16 %v1659
  %v1757 = vunpack.c.l.b16 %v1660
  %v1758 = vunpack.c.l.b16 %v1661
  %v1759 = vunpack.c.l.b16 %v1662
  %v1760 = vunpack.c.l.b16 %v1663
  %v1761 = vunpack.c.l.b16 %v1664
  %v1762 = vunpack.c.l.b16 %v1665
  %v1763 = vunpack.c.l.b16 %v1666
  %v1764 = vunpack.c.l.b16 %v1667
  %v1765 = vpack.c.b16 %v1750, %v1749
  %v1766 = vpack.c.b16 %v1752, %v1751
  %v1767 = vpack.c.b16 %v1754, %v1753
  %v1768 = vpack.c.b16 %v1756, %v1755
  %v1769 = vpack.c.b16 %v1758, %v1757
  %v1770 = vpack.c.b16 %v1760, %v1759
  %v1771 = vpack.c.b16 %v1762, %v1761
  %v1772 = vpack.c.b16 %v1764, %v1763
  %1781 = vmatprep.subr.bf16.mxu0 0
  %1782 = vmatpush1.bf16.msra.mxu0 %v1765
  %1783 = vmatprep.subr.bf16.mxu0 0
  %1784 = vmatpush1.bf16.msra.mxu0 %v1766
  %1785 = vmatprep.subr.bf16.mxu0 0
  %1786 = vmatpush1.bf16.msra.mxu0 %v1767
  %1787 = vmatprep.subr.bf16.mxu0 0
  %1788 = vmatpush1.bf16.msra.mxu0 %v1768
  %1789 = vmatprep.subr.bf16.mxu0 0
  %1790 = vmatpush1.bf16.msra.mxu0 %v1769
  %1791 = vmatprep.subr.bf16.mxu0 0
  %1792 = vmatpush1.bf16.msra.mxu0 %v1770
  %1793 = vmatprep.subr.bf16.mxu0 0
  %1794 = vmatpush1.bf16.msra.mxu0 %v1771
  %1795 = vmatprep.subr.bf16.mxu0 0
  %1796 = vmatpush1.bf16.msra.mxu0 %v1772
  %1797 = vmatprep.subr.bf16.mxu0 0
  %1798 = vmatpush1.bf16.msra.mxu0 0
  %1799 = vmatprep.subr.bf16.mxu0 0
  %1800 = vmatpush1.bf16.msra.mxu0 0
  %1801 = vmatprep.subr.bf16.mxu0 0
  %1802 = vmatpush1.bf16.msra.mxu0 0
  %1803 = vmatprep.subr.bf16.mxu0 0
  %1804 = vmatpush1.bf16.msra.mxu0 0
  %1805 = vmatprep.subr.bf16.mxu0 0
  %1806 = vmatpush1.bf16.msra.mxu0 0
  %1807 = vmatprep.subr.bf16.mxu0 0
  %1808 = vmatpush1.bf16.msra.mxu0 0
  %1809 = vmatprep.subr.bf16.mxu0 0
  %1810 = vmatpush1.bf16.msra.mxu0 0
  %1811 = vmatprep.subr.bf16.mxu0 0
  %1812 = vmatpush1.bf16.msra.mxu0 0
  %1813 = vmatprep.mubr.bf16.mxu0 0
  %1814 = vmatmul.mubr.bf16.gmra.mrb[0].mxu0 %v1731
  %v1815 = vpop.f32.mrb[0].mxu0
  %v1816 = vadd.f32 %v1673, %v1815
  %v1817 = vpop.f32.mrb[0].mxu0
  %v1818 = vpop.f32.mrb[0].mxu0
  %v1819 = vadd.f32 %v1673, %v1818
  %v1820 = vpop.f32.mrb[0].mxu0
  %1821 = vdwg.mxu0
  %v1824 = vcombine.high %v1816, %v1816
  %v1826 = vunpack.c.l.s4 1983009808
  %v1827 = vunpack.c.0.s8 %v1826
  %v1828 = vlaneseq
  %v1829 = vshrl.u32 %v1828, 7
  %v1830 = vsub.s32 %v1827, %v1829
  %v1831 = vrot.slane %v1816, %v1830
  %v1833 = vunpack.c.l.s4 1983009808
  %v1834 = vunpack.c.0.s8 %v1833
  %v1835 = vlaneseq
  %v1836 = vshrl.u32 %v1835, 7
  %v1837 = vsub.s32 %v1834, %v1836
  %v1838 = vrot.slane %v1824, %v1837
  %v1839 = vcombine.high %v1831, %v1831
  %v1840 = vcombine.high %v1838, %v1838
  %v1841 = vcombine.high %v1819, %v1819
  %v1843 = vunpack.c.l.s4 1983009808
  %v1844 = vunpack.c.0.s8 %v1843
  %v1845 = vlaneseq
  %v1846 = vshrl.u32 %v1845, 7
  %v1847 = vsub.s32 %v1844, %v1846
  %v1848 = vrot.slane %v1819, %v1847
  %v1850 = vunpack.c.l.s4 1983009808
  %v1851 = vunpack.c.0.s8 %v1850
  %v1852 = vlaneseq
  %v1853 = vshrl.u32 %v1852, 7
  %v1854 = vsub.s32 %v1851, %v1853
  %v1855 = vrot.slane %v1841, %v1854
  %v1856 = vcombine.high %v1848, %v1848
  %v1857 = vcombine.high %v1855, %v1855
  %1866 = vst [vmem:[%s6] sm:$0x3] %v1831
  %1867 = vst [vmem:[%s6 + $0x2] sm:$0x3] %v1839
  %1868 = vst [vmem:[%s6 + $0x4] sm:$0x3] %v1838
  %1869 = vst [vmem:[%s6 + $0x6] sm:$0x3] %v1840
  %1870 = vst [vmem:[%s6 + $0x8] sm:$0x3] %v1848
  %1871 = vst [vmem:[%s6 + $0xa] sm:$0x3] %v1856
  %1872 = vst [vmem:[%s6 + $0xc] sm:$0x3] %v1855
  %1873 = vst [vmem:[%s6 + $0xe] sm:$0x3] %v1857
  // Predicated region
  $region30: #{hsam_forward.3} parent=0 // pred_check
    _
  $region31: #{hsam_forward.3} parent=0 // pred_check_branch
    %1875 = sbr.rel (0) target = $region33
  $region32: #{hsam_forward.3} parent=0 // pred_region
    _
  $region33: #{hsam_forward.3} parent=0 // pred_fallthru
    _
  // Predicated region
  $region34: #{hsam_forward.3} parent=0 // pred_check
    _
  $region35: #{hsam_forward.3} parent=0 // pred_check_branch
    %1877 = sbr.rel (0) target = $region37
  $region36: #{hsam_forward.3} parent=0 // pred_region
    _
  $region37: #{hsam_forward.3} parent=0 // pred_fallthru
    _

</llo_original>
